<compile_context>
chip_gen: v7x
topology: tpu7x:2x2x1
jax: 0.10.0
libtpu: 0.0.40
codegen_flags: <defaults>
</compile_context>

<pallas_src>
import jax
import jax.numpy as jnp
from jax.experimental import pallas as pl
from jax.experimental.pallas import tpu as pltpu


def _pad_hw(a, ph, pw):
    """Zero-pad the last two dims of a (Bt, H, W) array by (ph, pw) each side."""
    bt, h, w = a.shape
    zc = jnp.zeros((bt, h, pw), a.dtype)
    a = jnp.concatenate([zc, a, zc], axis=2)          # (Bt, H, W + 2*pw)
    zr = jnp.zeros((bt, ph, w + 2 * pw), a.dtype)
    return jnp.concatenate([zr, a, zr], axis=1)       # (Bt, H + 2*ph, W + 2*pw)


def spatial_attention_kernel(x_ref, w7_ref, w5_ref, o_ref):
    # x_ref : (Bt, C, H, W)  one batch tile per grid step (VMEM)
    # w7_ref: (2*7*7,) f32 in SMEM  -- Conv2d(2->1, k=7) weight, [cin, kh, kw] flat
    # w5_ref: (5*5,)   f32 in SMEM  -- Conv2d(1->1, k=5) weight, [kh, kw] flat
    x = x_ref[...]                                    # native dtype, no f32 copy
    bt, c, h, w = x.shape

    # Channel-wise stats, accumulated in f32 (mean accuracy for low-precision x).
    avg = jnp.sum(x, axis=1, dtype=jnp.float32) * (1.0 / c)   # (Bt, H, W)
    mx = jnp.max(x, axis=1).astype(jnp.float32)               # (Bt, H, W)

    # --- Conv2d(2 -> 1, kernel=7, padding=3, bias=False) ---
    pa = _pad_hw(avg, 3, 3)                           # (Bt, H+6, W+6)
    pm = _pad_hw(mx, 3, 3)
    y1 = jnp.zeros((bt, h, w), jnp.float32)
    for kh in range(7):
        for kw in range(7):
            wa = w7_ref[0 * 49 + kh * 7 + kw]         # scalar from SMEM
            wm = w7_ref[1 * 49 + kh * 7 + kw]
            y1 = y1 + pa[:, kh:kh + h, kw:kw + w] * wa
            y1 = y1 + pm[:, kh:kh + h, kw:kw + w] * wm

    # --- Conv2d(1 -> 1, kernel=5, padding=2, bias=False) ---
    p1 = _pad_hw(y1, 2, 2)                            # (Bt, H+4, W+4)
    y2 = jnp.zeros((bt, h, w), jnp.float32)
    for kh in range(5):
        for kw in range(5):
            y2 = y2 + p1[:, kh:kh + h, kw:kw + w] * w5_ref[kh * 5 + kw]

    attn = jax.nn.sigmoid(y2)                         # (Bt, H, W) f32

    # Final scale in x's native dtype (halves write-path work for bf16 inputs).
    o_ref[...] = (x * attn[:, None, :, :].astype(x.dtype)).astype(o_ref.dtype)


def spatial_attention(x, w7, w5):
    """x: (B, C, H, W); w7: (1, 2, 7, 7) conv weight; w5: (1, 1, 5, 5) conv weight."""
    B, C, H, W = x.shape
    itemsize = jnp.dtype(x.dtype).itemsize
    per_batch = C * H * W * itemsize

    # Pick the batch tile: block <= ~2 MiB, grid length stays >= 2 when B >= 2
    # (so both v7x TensorCores get work); B must divide evenly.
    target_block_bytes = 2 << 20
    bt = 1
    for cand in range(1, B + 1):
        if B % cand != 0:
            continue
        if cand * per_batch > target_block_bytes:
            continue
        if (B // cand) < min(B, 2):
            continue
        bt = cand
    grid = (B // bt,)

    # Explicit VMEM budget: double-buffered in + out blocks plus headroom,
    # clamped to stay inside v7x's 64 MiB.
    block_bytes = bt * per_batch
    vmem_bytes = int(min(60 << 20, max(16 << 20, 4 * block_bytes + (2 << 20))))

    # Flatten weights once in the wrapper (no in-kernel transposes/reshapes).
    w7f = w7.reshape(-1).astype(jnp.float32)          # (98,)  [cin, kh, kw]
    w5f = w5.reshape(-1).astype(jnp.float32)          # (25,)  [kh, kw]

    out = pl.pallas_call(
        spatial_attention_kernel,
        out_shape=jax.ShapeDtypeStruct((B, C, H, W), x.dtype),
        grid_spec=pltpu.PrefetchScalarGridSpec(
            num_scalar_prefetch=0,
            grid=grid,
            in_specs=[
                pl.BlockSpec((bt, C, H, W), lambda b: (b, 0, 0, 0)),
                pl.BlockSpec(memory_space=pltpu.MemorySpace.SMEM),
                pl.BlockSpec(memory_space=pltpu.MemorySpace.SMEM),
            ],
            out_specs=pl.BlockSpec((bt, C, H, W), lambda b: (b, 0, 0, 0)),
        ),
        compiler_params=pltpu.CompilerParams(
            dimension_semantics=("parallel",),
            vmem_limit_bytes=vmem_bytes,
        ),
    )(x, w7f, w5f)
    return out


def spatial_attention_ref(x, w7, w5):
    avg = jnp.mean(x, axis=1, keepdims=True)
    mx = jnp.max(x, axis=1, keepdims=True)
    s = jnp.concatenate([avg, mx], axis=1)            # (B, 2, H, W)
    dn = ("NCHW", "OIHW", "NCHW")
    y = jax.lax.conv_general_dilated(s, w7, (1, 1), [(3, 3), (3, 3)],
                                     dimension_numbers=dn)
    y = jax.lax.conv_general_dilated(y, w5, (1, 1), [(2, 2), (2, 2)],
                                     dimension_numbers=dn)
    return jax.nn.sigmoid(y) * x


if __name__ == "__main__":
    B, C, H, W = 2, 16, 16, 16

    key = jax.random.PRNGKey(0)
    kx, k7, k5 = jax.random.split(key, 3)

    x = jax.random.normal(kx, (B, C, H, W), dtype=jnp.float32)
    # Deterministic synthetic conv weights (bias=False in the module).
    w7 = jax.random.normal(k7, (1, 2, 7, 7), dtype=jnp.float32) * (1.0 / jnp.sqrt(2 * 49))
    w5 = jax.random.normal(k5, (1, 1, 5, 5), dtype=jnp.float32) * (1.0 / jnp.sqrt(25))

    out = jax.block_until_ready(spatial_attention(x, w7, w5))

    ref = spatial_attention_ref(x, w7, w5)
    assert out.shape == (B, C, H, W)
    assert jnp.allclose(out, ref, atol=1e-4, rtol=1e-4), "mismatch vs reference"

    print("KERNEL_OK")
</pallas_src>

<mosaic_0001>
module attributes {stable_mosaic.version = 11 : i64} {
  func.func @spatial_attention_kernel(%arg0: i32, %arg1: memref<1x16x16x16xf32, #tpu.memory_space<vmem>>, %arg2: memref<98xf32, #tpu.memory_space<smem>>, %arg3: memref<25xf32, #tpu.memory_space<smem>>, %arg4: memref<1x16x16x16xf32, #tpu.memory_space<vmem>>) attributes {dimension_semantics = [#tpu.dimension_semantics<parallel>], iteration_bounds = array<i64: 2>, scalar_prefetch = 0 : i64, scratch_operands = 0 : i64, tpu.core_type = #tpu.core_type<tc>, window_params = [{transform_indices = @transform_0, window_bounds = array<i64: 1, 16, 16, 16>}, {transform_indices = @transform_1, window_bounds = array<i64: 98>}, {transform_indices = @transform_2, window_bounds = array<i64: 25>}, {transform_indices = @transform_3, window_bounds = array<i64: 1, 16, 16, 16>}]} {
    %c0 = arith.constant 0 : index
    %c0_0 = arith.constant 0 : index
    %c0_1 = arith.constant 0 : index
    %c0_2 = arith.constant 0 : index
    %0 = vector.load %arg1[%c0, %c0_0, %c0_1, %c0_2] : memref<1x16x16x16xf32, #tpu.memory_space<vmem>>, vector<1x16x16x16xf32>
    %cst = arith.constant dense<0.000000e+00> : vector<1x16x16xf32>
    %1 = vector.multi_reduction <add>, %0, %cst [1] : vector<1x16x16x16xf32> to vector<1x16x16xf32>
    %cst_3 = arith.constant 6.250000e-02 : f32
    %2 = vector.broadcast %cst_3 : f32 to vector<1x16x16xf32>
    %3 = arith.mulf %1, %2 : vector<1x16x16xf32>
    %cst_4 = arith.constant dense<0xFF800000> : vector<1x16x16xf32>
    %4 = vector.multi_reduction <maximumf>, %0, %cst_4 [1] : vector<1x16x16x16xf32> to vector<1x16x16xf32>
    %cst_5 = arith.constant 0.000000e+00 : f32
    %5 = vector.broadcast %cst_5 : f32 to vector<1x16x3xf32>
    %6 = tpu.concatenate %5, %3, %5 in 2 : vector<1x16x3xf32>, vector<1x16x16xf32>, vector<1x16x3xf32> -> vector<1x16x22xf32>
    %cst_6 = arith.constant 0.000000e+00 : f32
    %7 = vector.broadcast %cst_6 : f32 to vector<1x3x22xf32>
    %8 = tpu.concatenate %7, %6, %7 in 1 : vector<1x3x22xf32>, vector<1x16x22xf32>, vector<1x3x22xf32> -> vector<1x22x22xf32>
    %cst_7 = arith.constant 0.000000e+00 : f32
    %9 = vector.broadcast %cst_7 : f32 to vector<1x16x3xf32>
    %10 = tpu.concatenate %9, %4, %9 in 2 : vector<1x16x3xf32>, vector<1x16x16xf32>, vector<1x16x3xf32> -> vector<1x16x22xf32>
    %cst_8 = arith.constant 0.000000e+00 : f32
    %11 = vector.broadcast %cst_8 : f32 to vector<1x3x22xf32>
    %12 = tpu.concatenate %11, %10, %11 in 1 : vector<1x3x22xf32>, vector<1x16x22xf32>, vector<1x3x22xf32> -> vector<1x22x22xf32>
    %cst_9 = arith.constant 0.000000e+00 : f32
    %13 = vector.broadcast %cst_9 : f32 to vector<1x16x16xf32>
    %c0_10 = arith.constant 0 : index
    %14 = memref.load %arg2[%c0_10] : memref<98xf32, #tpu.memory_space<smem>>
    %c49 = arith.constant 49 : index
    %15 = memref.load %arg2[%c49] : memref<98xf32, #tpu.memory_space<smem>>
    %16 = vector.extract_strided_slice %8 {offsets = [0, 0, 0], sizes = [1, 16, 16], strides = [1, 1, 1]} : vector<1x22x22xf32> to vector<1x16x16xf32>
    %17 = vector.broadcast %14 : f32 to vector<1x16x16xf32>
    %18 = arith.mulf %16, %17 : vector<1x16x16xf32>
    %19 = arith.addf %13, %18 : vector<1x16x16xf32>
    %20 = vector.extract_strided_slice %12 {offsets = [0, 0, 0], sizes = [1, 16, 16], strides = [1, 1, 1]} : vector<1x22x22xf32> to vector<1x16x16xf32>
    %21 = vector.broadcast %15 : f32 to vector<1x16x16xf32>
    %22 = arith.mulf %20, %21 : vector<1x16x16xf32>
    %23 = arith.addf %19, %22 : vector<1x16x16xf32>
    %c1 = arith.constant 1 : index
    %24 = memref.load %arg2[%c1] : memref<98xf32, #tpu.memory_space<smem>>
    %c50 = arith.constant 50 : index
    %25 = memref.load %arg2[%c50] : memref<98xf32, #tpu.memory_space<smem>>
    %26 = vector.extract_strided_slice %8 {offsets = [0, 0, 1], sizes = [1, 16, 16], strides = [1, 1, 1]} : vector<1x22x22xf32> to vector<1x16x16xf32>
    %27 = vector.broadcast %24 : f32 to vector<1x16x16xf32>
    %28 = arith.mulf %26, %27 : vector<1x16x16xf32>
    %29 = arith.addf %23, %28 : vector<1x16x16xf32>
    %30 = vector.extract_strided_slice %12 {offsets = [0, 0, 1], sizes = [1, 16, 16], strides = [1, 1, 1]} : vector<1x22x22xf32> to vector<1x16x16xf32>
    %31 = vector.broadcast %25 : f32 to vector<1x16x16xf32>
    %32 = arith.mulf %30, %31 : vector<1x16x16xf32>
    %33 = arith.addf %29, %32 : vector<1x16x16xf32>
    %c2 = arith.constant 2 : index
    %34 = memref.load %arg2[%c2] : memref<98xf32, #tpu.memory_space<smem>>
    %c51 = arith.constant 51 : index
    %35 = memref.load %arg2[%c51] : memref<98xf32, #tpu.memory_space<smem>>
    %36 = vector.extract_strided_slice %8 {offsets = [0, 0, 2], sizes = [1, 16, 16], strides = [1, 1, 1]} : vector<1x22x22xf32> to vector<1x16x16xf32>
    %37 = vector.broadcast %34 : f32 to vector<1x16x16xf32>
    %38 = arith.mulf %36, %37 : vector<1x16x16xf32>
    %39 = arith.addf %33, %38 : vector<1x16x16xf32>
    %40 = vector.extract_strided_slice %12 {offsets = [0, 0, 2], sizes = [1, 16, 16], strides = [1, 1, 1]} : vector<1x22x22xf32> to vector<1x16x16xf32>
    %41 = vector.broadcast %35 : f32 to vector<1x16x16xf32>
    %42 = arith.mulf %40, %41 : vector<1x16x16xf32>
    %43 = arith.addf %39, %42 : vector<1x16x16xf32>
    %c3 = arith.constant 3 : index
    %44 = memref.load %arg2[%c3] : memref<98xf32, #tpu.memory_space<smem>>
    %c52 = arith.constant 52 : index
    %45 = memref.load %arg2[%c52] : memref<98xf32, #tpu.memory_space<smem>>
    %46 = vector.extract_strided_slice %8 {offsets = [0, 0, 3], sizes = [1, 16, 16], strides = [1, 1, 1]} : vector<1x22x22xf32> to vector<1x16x16xf32>
    %47 = vector.broadcast %44 : f32 to vector<1x16x16xf32>
    %48 = arith.mulf %46, %47 : vector<1x16x16xf32>
    %49 = arith.addf %43, %48 : vector<1x16x16xf32>
    %50 = vector.extract_strided_slice %12 {offsets = [0, 0, 3], sizes = [1, 16, 16], strides = [1, 1, 1]} : vector<1x22x22xf32> to vector<1x16x16xf32>
    %51 = vector.broadcast %45 : f32 to vector<1x16x16xf32>
    %52 = arith.mulf %50, %51 : vector<1x16x16xf32>
    %53 = arith.addf %49, %52 : vector<1x16x16xf32>
    %c4 = arith.constant 4 : index
    %54 = memref.load %arg2[%c4] : memref<98xf32, #tpu.memory_space<smem>>
    %c53 = arith.constant 53 : index
    %55 = memref.load %arg2[%c53] : memref<98xf32, #tpu.memory_space<smem>>
    %56 = vector.extract_strided_slice %8 {offsets = [0, 0, 4], sizes = [1, 16, 16], strides = [1, 1, 1]} : vector<1x22x22xf32> to vector<1x16x16xf32>
    %57 = vector.broadcast %54 : f32 to vector<1x16x16xf32>
    %58 = arith.mulf %56, %57 : vector<1x16x16xf32>
    %59 = arith.addf %53, %58 : vector<1x16x16xf32>
    %60 = vector.extract_strided_slice %12 {offsets = [0, 0, 4], sizes = [1, 16, 16], strides = [1, 1, 1]} : vector<1x22x22xf32> to vector<1x16x16xf32>
    %61 = vector.broadcast %55 : f32 to vector<1x16x16xf32>
    %62 = arith.mulf %60, %61 : vector<1x16x16xf32>
    %63 = arith.addf %59, %62 : vector<1x16x16xf32>
    %c5 = arith.constant 5 : index
    %64 = memref.load %arg2[%c5] : memref<98xf32, #tpu.memory_space<smem>>
    %c54 = arith.constant 54 : index
    %65 = memref.load %arg2[%c54] : memref<98xf32, #tpu.memory_space<smem>>
    %66 = vector.extract_strided_slice %8 {offsets = [0, 0, 5], sizes = [1, 16, 16], strides = [1, 1, 1]} : vector<1x22x22xf32> to vector<1x16x16xf32>
    %67 = vector.broadcast %64 : f32 to vector<1x16x16xf32>
    %68 = arith.mulf %66, %67 : vector<1x16x16xf32>
    %69 = arith.addf %63, %68 : vector<1x16x16xf32>
    %70 = vector.extract_strided_slice %12 {offsets = [0, 0, 5], sizes = [1, 16, 16], strides = [1, 1, 1]} : vector<1x22x22xf32> to vector<1x16x16xf32>
    %71 = vector.broadcast %65 : f32 to vector<1x16x16xf32>
    %72 = arith.mulf %70, %71 : vector<1x16x16xf32>
    %73 = arith.addf %69, %72 : vector<1x16x16xf32>
    %c6 = arith.constant 6 : index
    %74 = memref.load %arg2[%c6] : memref<98xf32, #tpu.memory_space<smem>>
    %c55 = arith.constant 55 : index
    %75 = memref.load %arg2[%c55] : memref<98xf32, #tpu.memory_space<smem>>
    %76 = vector.extract_strided_slice %8 {offsets = [0, 0, 6], sizes = [1, 16, 16], strides = [1, 1, 1]} : vector<1x22x22xf32> to vector<1x16x16xf32>
    %77 = vector.broadcast %74 : f32 to vector<1x16x16xf32>
    %78 = arith.mulf %76, %77 : vector<1x16x16xf32>
    %79 = arith.addf %73, %78 : vector<1x16x16xf32>
    %80 = vector.extract_strided_slice %12 {offsets = [0, 0, 6], sizes = [1, 16, 16], strides = [1, 1, 1]} : vector<1x22x22xf32> to vector<1x16x16xf32>
    %81 = vector.broadcast %75 : f32 to vector<1x16x16xf32>
    %82 = arith.mulf %80, %81 : vector<1x16x16xf32>
    %83 = arith.addf %79, %82 : vector<1x16x16xf32>
    %c7 = arith.constant 7 : index
    %84 = memref.load %arg2[%c7] : memref<98xf32, #tpu.memory_space<smem>>
    %c56 = arith.constant 56 : index
    %85 = memref.load %arg2[%c56] : memref<98xf32, #tpu.memory_space<smem>>
    %86 = vector.extract_strided_slice %8 {offsets = [0, 1, 0], sizes = [1, 16, 16], strides = [1, 1, 1]} : vector<1x22x22xf32> to vector<1x16x16xf32>
    %87 = vector.broadcast %84 : f32 to vector<1x16x16xf32>
    %88 = arith.mulf %86, %87 : vector<1x16x16xf32>
    %89 = arith.addf %83, %88 : vector<1x16x16xf32>
    %90 = vector.extract_strided_slice %12 {offsets = [0, 1, 0], sizes = [1, 16, 16], strides = [1, 1, 1]} : vector<1x22x22xf32> to vector<1x16x16xf32>
    %91 = vector.broadcast %85 : f32 to vector<1x16x16xf32>
    %92 = arith.mulf %90, %91 : vector<1x16x16xf32>
    %93 = arith.addf %89, %92 : vector<1x16x16xf32>
    %c8 = arith.constant 8 : index
    %94 = memref.load %arg2[%c8] : memref<98xf32, #tpu.memory_space<smem>>
    %c57 = arith.constant 57 : index
    %95 = memref.load %arg2[%c57] : memref<98xf32, #tpu.memory_space<smem>>
    %96 = vector.extract_strided_slice %8 {offsets = [0, 1, 1], sizes = [1, 16, 16], strides = [1, 1, 1]} : vector<1x22x22xf32> to vector<1x16x16xf32>
    %97 = vector.broadcast %94 : f32 to vector<1x16x16xf32>
    %98 = arith.mulf %96, %97 : vector<1x16x16xf32>
    %99 = arith.addf %93, %98 : vector<1x16x16xf32>
    %100 = vector.extract_strided_slice %12 {offsets = [0, 1, 1], sizes = [1, 16, 16], strides = [1, 1, 1]} : vector<1x22x22xf32> to vector<1x16x16xf32>
    %101 = vector.broadcast %95 : f32 to vector<1x16x16xf32>
    %102 = arith.mulf %100, %101 : vector<1x16x16xf32>
    %103 = arith.addf %99, %102 : vector<1x16x16xf32>
    %c9 = arith.constant 9 : index
    %104 = memref.load %arg2[%c9] : memref<98xf32, #tpu.memory_space<smem>>
    %c58 = arith.constant 58 : index
    %105 = memref.load %arg2[%c58] : memref<98xf32, #tpu.memory_space<smem>>
    %106 = vector.extract_strided_slice %8 {offsets = [0, 1, 2], sizes = [1, 16, 16], strides = [1, 1, 1]} : vector<1x22x22xf32> to vector<1x16x16xf32>
    %107 = vector.broadcast %104 : f32 to vector<1x16x16xf32>
    %108 = arith.mulf %106, %107 : vector<1x16x16xf32>
    %109 = arith.addf %103, %108 : vector<1x16x16xf32>
    %110 = vector.extract_strided_slice %12 {offsets = [0, 1, 2], sizes = [1, 16, 16], strides = [1, 1, 1]} : vector<1x22x22xf32> to vector<1x16x16xf32>
    %111 = vector.broadcast %105 : f32 to vector<1x16x16xf32>
    %112 = arith.mulf %110, %111 : vector<1x16x16xf32>
    %113 = arith.addf %109, %112 : vector<1x16x16xf32>
    %c10 = arith.constant 10 : index
    %114 = memref.load %arg2[%c10] : memref<98xf32, #tpu.memory_space<smem>>
    %c59 = arith.constant 59 : index
    %115 = memref.load %arg2[%c59] : memref<98xf32, #tpu.memory_space<smem>>
    %116 = vector.extract_strided_slice %8 {offsets = [0, 1, 3], sizes = [1, 16, 16], strides = [1, 1, 1]} : vector<1x22x22xf32> to vector<1x16x16xf32>
    %117 = vector.broadcast %114 : f32 to vector<1x16x16xf32>
    %118 = arith.mulf %116, %117 : vector<1x16x16xf32>
    %119 = arith.addf %113, %118 : vector<1x16x16xf32>
    %120 = vector.extract_strided_slice %12 {offsets = [0, 1, 3], sizes = [1, 16, 16], strides = [1, 1, 1]} : vector<1x22x22xf32> to vector<1x16x16xf32>
    %121 = vector.broadcast %115 : f32 to vector<1x16x16xf32>
    %122 = arith.mulf %120, %121 : vector<1x16x16xf32>
    %123 = arith.addf %119, %122 : vector<1x16x16xf32>
    %c11 = arith.constant 11 : index
    %124 = memref.load %arg2[%c11] : memref<98xf32, #tpu.memory_space<smem>>
    %c60 = arith.constant 60 : index
    %125 = memref.load %arg2[%c60] : memref<98xf32, #tpu.memory_space<smem>>
    %126 = vector.extract_strided_slice %8 {offsets = [0, 1, 4], sizes = [1, 16, 16], strides = [1, 1, 1]} : vector<1x22x22xf32> to vector<1x16x16xf32>
    %127 = vector.broadcast %124 : f32 to vector<1x16x16xf32>
    %128 = arith.mulf %126, %127 : vector<1x16x16xf32>
    %129 = arith.addf %123, %128 : vector<1x16x16xf32>
    %130 = vector.extract_strided_slice %12 {offsets = [0, 1, 4], sizes = [1, 16, 16], strides = [1, 1, 1]} : vector<1x22x22xf32> to vector<1x16x16xf32>
    %131 = vector.broadcast %125 : f32 to vector<1x16x16xf32>
    %132 = arith.mulf %130, %131 : vector<1x16x16xf32>
    %133 = arith.addf %129, %132 : vector<1x16x16xf32>
    %c12 = arith.constant 12 : index
    %134 = memref.load %arg2[%c12] : memref<98xf32, #tpu.memory_space<smem>>
    %c61 = arith.constant 61 : index
    %135 = memref.load %arg2[%c61] : memref<98xf32, #tpu.memory_space<smem>>
    %136 = vector.extract_strided_slice %8 {offsets = [0, 1, 5], sizes = [1, 16, 16], strides = [1, 1, 1]} : vector<1x22x22xf32> to vector<1x16x16xf32>
    %137 = vector.broadcast %134 : f32 to vector<1x16x16xf32>
    %138 = arith.mulf %136, %137 : vector<1x16x16xf32>
    %139 = arith.addf %133, %138 : vector<1x16x16xf32>
    %140 = vector.extract_strided_slice %12 {offsets = [0, 1, 5], sizes = [1, 16, 16], strides = [1, 1, 1]} : vector<1x22x22xf32> to vector<1x16x16xf32>
    %141 = vector.broadcast %135 : f32 to vector<1x16x16xf32>
    %142 = arith.mulf %140, %141 : vector<1x16x16xf32>
    %143 = arith.addf %139, %142 : vector<1x16x16xf32>
    %c13 = arith.constant 13 : index
    %144 = memref.load %arg2[%c13] : memref<98xf32, #tpu.memory_space<smem>>
    %c62 = arith.constant 62 : index
    %145 = memref.load %arg2[%c62] : memref<98xf32, #tpu.memory_space<smem>>
    %146 = vector.extract_strided_slice %8 {offsets = [0, 1, 6], sizes = [1, 16, 16], strides = [1, 1, 1]} : vector<1x22x22xf32> to vector<1x16x16xf32>
    %147 = vector.broadcast %144 : f32 to vector<1x16x16xf32>
    %148 = arith.mulf %146, %147 : vector<1x16x16xf32>
    %149 = arith.addf %143, %148 : vector<1x16x16xf32>
    %150 = vector.extract_strided_slice %12 {offsets = [0, 1, 6], sizes = [1, 16, 16], strides = [1, 1, 1]} : vector<1x22x22xf32> to vector<1x16x16xf32>
    %151 = vector.broadcast %145 : f32 to vector<1x16x16xf32>
    %152 = arith.mulf %150, %151 : vector<1x16x16xf32>
    %153 = arith.addf %149, %152 : vector<1x16x16xf32>
    %c14 = arith.constant 14 : index
    %154 = memref.load %arg2[%c14] : memref<98xf32, #tpu.memory_space<smem>>
    %c63 = arith.constant 63 : index
    %155 = memref.load %arg2[%c63] : memref<98xf32, #tpu.memory_space<smem>>
    %156 = vector.extract_strided_slice %8 {offsets = [0, 2, 0], sizes = [1, 16, 16], strides = [1, 1, 1]} : vector<1x22x22xf32> to vector<1x16x16xf32>
    %157 = vector.broadcast %154 : f32 to vector<1x16x16xf32>
    %158 = arith.mulf %156, %157 : vector<1x16x16xf32>
    %159 = arith.addf %153, %158 : vector<1x16x16xf32>
    %160 = vector.extract_strided_slice %12 {offsets = [0, 2, 0], sizes = [1, 16, 16], strides = [1, 1, 1]} : vector<1x22x22xf32> to vector<1x16x16xf32>
    %161 = vector.broadcast %155 : f32 to vector<1x16x16xf32>
    %162 = arith.mulf %160, %161 : vector<1x16x16xf32>
    %163 = arith.addf %159, %162 : vector<1x16x16xf32>
    %c15 = arith.constant 15 : index
    %164 = memref.load %arg2[%c15] : memref<98xf32, #tpu.memory_space<smem>>
    %c64 = arith.constant 64 : index
    %165 = memref.load %arg2[%c64] : memref<98xf32, #tpu.memory_space<smem>>
    %166 = vector.extract_strided_slice %8 {offsets = [0, 2, 1], sizes = [1, 16, 16], strides = [1, 1, 1]} : vector<1x22x22xf32> to vector<1x16x16xf32>
    %167 = vector.broadcast %164 : f32 to vector<1x16x16xf32>
    %168 = arith.mulf %166, %167 : vector<1x16x16xf32>
    %169 = arith.addf %163, %168 : vector<1x16x16xf32>
    %170 = vector.extract_strided_slice %12 {offsets = [0, 2, 1], sizes = [1, 16, 16], strides = [1, 1, 1]} : vector<1x22x22xf32> to vector<1x16x16xf32>
    %171 = vector.broadcast %165 : f32 to vector<1x16x16xf32>
    %172 = arith.mulf %170, %171 : vector<1x16x16xf32>
    %173 = arith.addf %169, %172 : vector<1x16x16xf32>
    %c16 = arith.constant 16 : index
    %174 = memref.load %arg2[%c16] : memref<98xf32, #tpu.memory_space<smem>>
    %c65 = arith.constant 65 : index
    %175 = memref.load %arg2[%c65] : memref<98xf32, #tpu.memory_space<smem>>
    %176 = vector.extract_strided_slice %8 {offsets = [0, 2, 2], sizes = [1, 16, 16], strides = [1, 1, 1]} : vector<1x22x22xf32> to vector<1x16x16xf32>
    %177 = vector.broadcast %174 : f32 to vector<1x16x16xf32>
    %178 = arith.mulf %176, %177 : vector<1x16x16xf32>
    %179 = arith.addf %173, %178 : vector<1x16x16xf32>
    %180 = vector.extract_strided_slice %12 {offsets = [0, 2, 2], sizes = [1, 16, 16], strides = [1, 1, 1]} : vector<1x22x22xf32> to vector<1x16x16xf32>
    %181 = vector.broadcast %175 : f32 to vector<1x16x16xf32>
    %182 = arith.mulf %180, %181 : vector<1x16x16xf32>
    %183 = arith.addf %179, %182 : vector<1x16x16xf32>
    %c17 = arith.constant 17 : index
    %184 = memref.load %arg2[%c17] : memref<98xf32, #tpu.memory_space<smem>>
    %c66 = arith.constant 66 : index
    %185 = memref.load %arg2[%c66] : memref<98xf32, #tpu.memory_space<smem>>
    %186 = vector.extract_strided_slice %8 {offsets = [0, 2, 3], sizes = [1, 16, 16], strides = [1, 1, 1]} : vector<1x22x22xf32> to vector<1x16x16xf32>
    %187 = vector.broadcast %184 : f32 to vector<1x16x16xf32>
    %188 = arith.mulf %186, %187 : vector<1x16x16xf32>
    %189 = arith.addf %183, %188 : vector<1x16x16xf32>
    %190 = vector.extract_strided_slice %12 {offsets = [0, 2, 3], sizes = [1, 16, 16], strides = [1, 1, 1]} : vector<1x22x22xf32> to vector<1x16x16xf32>
    %191 = vector.broadcast %185 : f32 to vector<1x16x16xf32>
    %192 = arith.mulf %190, %191 : vector<1x16x16xf32>
    %193 = arith.addf %189, %192 : vector<1x16x16xf32>
    %c18 = arith.constant 18 : index
    %194 = memref.load %arg2[%c18] : memref<98xf32, #tpu.memory_space<smem>>
    %c67 = arith.constant 67 : index
    %195 = memref.load %arg2[%c67] : memref<98xf32, #tpu.memory_space<smem>>
    %196 = vector.extract_strided_slice %8 {offsets = [0, 2, 4], sizes = [1, 16, 16], strides = [1, 1, 1]} : vector<1x22x22xf32> to vector<1x16x16xf32>
    %197 = vector.broadcast %194 : f32 to vector<1x16x16xf32>
    %198 = arith.mulf %196, %197 : vector<1x16x16xf32>
    %199 = arith.addf %193, %198 : vector<1x16x16xf32>
    %200 = vector.extract_strided_slice %12 {offsets = [0, 2, 4], sizes = [1, 16, 16], strides = [1, 1, 1]} : vector<1x22x22xf32> to vector<1x16x16xf32>
    %201 = vector.broadcast %195 : f32 to vector<1x16x16xf32>
    %202 = arith.mulf %200, %201 : vector<1x16x16xf32>
    %203 = arith.addf %199, %202 : vector<1x16x16xf32>
    %c19 = arith.constant 19 : index
    %204 = memref.load %arg2[%c19] : memref<98xf32, #tpu.memory_space<smem>>
    %c68 = arith.constant 68 : index
    %205 = memref.load %arg2[%c68] : memref<98xf32, #tpu.memory_space<smem>>
    %206 = vector.extract_strided_slice %8 {offsets = [0, 2, 5], sizes = [1, 16, 16], strides = [1, 1, 1]} : vector<1x22x22xf32> to vector<1x16x16xf32>
    %207 = vector.broadcast %204 : f32 to vector<1x16x16xf32>
    %208 = arith.mulf %206, %207 : vector<1x16x16xf32>
    %209 = arith.addf %203, %208 : vector<1x16x16xf32>
    %210 = vector.extract_strided_slice %12 {offsets = [0, 2, 5], sizes = [1, 16, 16], strides = [1, 1, 1]} : vector<1x22x22xf32> to vector<1x16x16xf32>
    %211 = vector.broadcast %205 : f32 to vector<1x16x16xf32>
    %212 = arith.mulf %210, %211 : vector<1x16x16xf32>
    %213 = arith.addf %209, %212 : vector<1x16x16xf32>
    %c20 = arith.constant 20 : index
    %214 = memref.load %arg2[%c20] : memref<98xf32, #tpu.memory_space<smem>>
    %c69 = arith.constant 69 : index
    %215 = memref.load %arg2[%c69] : memref<98xf32, #tpu.memory_space<smem>>
    %216 = vector.extract_strided_slice %8 {offsets = [0, 2, 6], sizes = [1, 16, 16], strides = [1, 1, 1]} : vector<1x22x22xf32> to vector<1x16x16xf32>
    %217 = vector.broadcast %214 : f32 to vector<1x16x16xf32>
    %218 = arith.mulf %216, %217 : vector<1x16x16xf32>
    %219 = arith.addf %213, %218 : vector<1x16x16xf32>
    %220 = vector.extract_strided_slice %12 {offsets = [0, 2, 6], sizes = [1, 16, 16], strides = [1, 1, 1]} : vector<1x22x22xf32> to vector<1x16x16xf32>
    %221 = vector.broadcast %215 : f32 to vector<1x16x16xf32>
    %222 = arith.mulf %220, %221 : vector<1x16x16xf32>
    %223 = arith.addf %219, %222 : vector<1x16x16xf32>
    %c21 = arith.constant 21 : index
    %224 = memref.load %arg2[%c21] : memref<98xf32, #tpu.memory_space<smem>>
    %c70 = arith.constant 70 : index
    %225 = memref.load %arg2[%c70] : memref<98xf32, #tpu.memory_space<smem>>
    %226 = vector.extract_strided_slice %8 {offsets = [0, 3, 0], sizes = [1, 16, 16], strides = [1, 1, 1]} : vector<1x22x22xf32> to vector<1x16x16xf32>
    %227 = vector.broadcast %224 : f32 to vector<1x16x16xf32>
    %228 = arith.mulf %226, %227 : vector<1x16x16xf32>
    %229 = arith.addf %223, %228 : vector<1x16x16xf32>
    %230 = vector.extract_strided_slice %12 {offsets = [0, 3, 0], sizes = [1, 16, 16], strides = [1, 1, 1]} : vector<1x22x22xf32> to vector<1x16x16xf32>
    %231 = vector.broadcast %225 : f32 to vector<1x16x16xf32>
    %232 = arith.mulf %230, %231 : vector<1x16x16xf32>
    %233 = arith.addf %229, %232 : vector<1x16x16xf32>
    %c22 = arith.constant 22 : index
    %234 = memref.load %arg2[%c22] : memref<98xf32, #tpu.memory_space<smem>>
    %c71 = arith.constant 71 : index
    %235 = memref.load %arg2[%c71] : memref<98xf32, #tpu.memory_space<smem>>
    %236 = vector.extract_strided_slice %8 {offsets = [0, 3, 1], sizes = [1, 16, 16], strides = [1, 1, 1]} : vector<1x22x22xf32> to vector<1x16x16xf32>
    %237 = vector.broadcast %234 : f32 to vector<1x16x16xf32>
    %238 = arith.mulf %236, %237 : vector<1x16x16xf32>
    %239 = arith.addf %233, %238 : vector<1x16x16xf32>
    %240 = vector.extract_strided_slice %12 {offsets = [0, 3, 1], sizes = [1, 16, 16], strides = [1, 1, 1]} : vector<1x22x22xf32> to vector<1x16x16xf32>
    %241 = vector.broadcast %235 : f32 to vector<1x16x16xf32>
    %242 = arith.mulf %240, %241 : vector<1x16x16xf32>
    %243 = arith.addf %239, %242 : vector<1x16x16xf32>
    %c23 = arith.constant 23 : index
    %244 = memref.load %arg2[%c23] : memref<98xf32, #tpu.memory_space<smem>>
    %c72 = arith.constant 72 : index
    %245 = memref.load %arg2[%c72] : memref<98xf32, #tpu.memory_space<smem>>
    %246 = vector.extract_strided_slice %8 {offsets = [0, 3, 2], sizes = [1, 16, 16], strides = [1, 1, 1]} : vector<1x22x22xf32> to vector<1x16x16xf32>
    %247 = vector.broadcast %244 : f32 to vector<1x16x16xf32>
    %248 = arith.mulf %246, %247 : vector<1x16x16xf32>
    %249 = arith.addf %243, %248 : vector<1x16x16xf32>
    %250 = vector.extract_strided_slice %12 {offsets = [0, 3, 2], sizes = [1, 16, 16], strides = [1, 1, 1]} : vector<1x22x22xf32> to vector<1x16x16xf32>
    %251 = vector.broadcast %245 : f32 to vector<1x16x16xf32>
    %252 = arith.mulf %250, %251 : vector<1x16x16xf32>
    %253 = arith.addf %249, %252 : vector<1x16x16xf32>
    %c24 = arith.constant 24 : index
    %254 = memref.load %arg2[%c24] : memref<98xf32, #tpu.memory_space<smem>>
    %c73 = arith.constant 73 : index
    %255 = memref.load %arg2[%c73] : memref<98xf32, #tpu.memory_space<smem>>
    %256 = vector.extract_strided_slice %8 {offsets = [0, 3, 3], sizes = [1, 16, 16], strides = [1, 1, 1]} : vector<1x22x22xf32> to vector<1x16x16xf32>
    %257 = vector.broadcast %254 : f32 to vector<1x16x16xf32>
    %258 = arith.mulf %256, %257 : vector<1x16x16xf32>
    %259 = arith.addf %253, %258 : vector<1x16x16xf32>
    %260 = vector.extract_strided_slice %12 {offsets = [0, 3, 3], sizes = [1, 16, 16], strides = [1, 1, 1]} : vector<1x22x22xf32> to vector<1x16x16xf32>
    %261 = vector.broadcast %255 : f32 to vector<1x16x16xf32>
    %262 = arith.mulf %260, %261 : vector<1x16x16xf32>
    %263 = arith.addf %259, %262 : vector<1x16x16xf32>
    %c25 = arith.constant 25 : index
    %264 = memref.load %arg2[%c25] : memref<98xf32, #tpu.memory_space<smem>>
    %c74 = arith.constant 74 : index
    %265 = memref.load %arg2[%c74] : memref<98xf32, #tpu.memory_space<smem>>
    %266 = vector.extract_strided_slice %8 {offsets = [0, 3, 4], sizes = [1, 16, 16], strides = [1, 1, 1]} : vector<1x22x22xf32> to vector<1x16x16xf32>
    %267 = vector.broadcast %264 : f32 to vector<1x16x16xf32>
    %268 = arith.mulf %266, %267 : vector<1x16x16xf32>
    %269 = arith.addf %263, %268 : vector<1x16x16xf32>
    %270 = vector.extract_strided_slice %12 {offsets = [0, 3, 4], sizes = [1, 16, 16], strides = [1, 1, 1]} : vector<1x22x22xf32> to vector<1x16x16xf32>
    %271 = vector.broadcast %265 : f32 to vector<1x16x16xf32>
    %272 = arith.mulf %270, %271 : vector<1x16x16xf32>
    %273 = arith.addf %269, %272 : vector<1x16x16xf32>
    %c26 = arith.constant 26 : index
    %274 = memref.load %arg2[%c26] : memref<98xf32, #tpu.memory_space<smem>>
    %c75 = arith.constant 75 : index
    %275 = memref.load %arg2[%c75] : memref<98xf32, #tpu.memory_space<smem>>
    %276 = vector.extract_strided_slice %8 {offsets = [0, 3, 5], sizes = [1, 16, 16], strides = [1, 1, 1]} : vector<1x22x22xf32> to vector<1x16x16xf32>
    %277 = vector.broadcast %274 : f32 to vector<1x16x16xf32>
    %278 = arith.mulf %276, %277 : vector<1x16x16xf32>
    %279 = arith.addf %273, %278 : vector<1x16x16xf32>
    %280 = vector.extract_strided_slice %12 {offsets = [0, 3, 5], sizes = [1, 16, 16], strides = [1, 1, 1]} : vector<1x22x22xf32> to vector<1x16x16xf32>
    %281 = vector.broadcast %275 : f32 to vector<1x16x16xf32>
    %282 = arith.mulf %280, %281 : vector<1x16x16xf32>
    %283 = arith.addf %279, %282 : vector<1x16x16xf32>
    %c27 = arith.constant 27 : index
    %284 = memref.load %arg2[%c27] : memref<98xf32, #tpu.memory_space<smem>>
    %c76 = arith.constant 76 : index
    %285 = memref.load %arg2[%c76] : memref<98xf32, #tpu.memory_space<smem>>
    %286 = vector.extract_strided_slice %8 {offsets = [0, 3, 6], sizes = [1, 16, 16], strides = [1, 1, 1]} : vector<1x22x22xf32> to vector<1x16x16xf32>
    %287 = vector.broadcast %284 : f32 to vector<1x16x16xf32>
    %288 = arith.mulf %286, %287 : vector<1x16x16xf32>
    %289 = arith.addf %283, %288 : vector<1x16x16xf32>
    %290 = vector.extract_strided_slice %12 {offsets = [0, 3, 6], sizes = [1, 16, 16], strides = [1, 1, 1]} : vector<1x22x22xf32> to vector<1x16x16xf32>
    %291 = vector.broadcast %285 : f32 to vector<1x16x16xf32>
    %292 = arith.mulf %290, %291 : vector<1x16x16xf32>
    %293 = arith.addf %289, %292 : vector<1x16x16xf32>
    %c28 = arith.constant 28 : index
    %294 = memref.load %arg2[%c28] : memref<98xf32, #tpu.memory_space<smem>>
    %c77 = arith.constant 77 : index
    %295 = memref.load %arg2[%c77] : memref<98xf32, #tpu.memory_space<smem>>
    %296 = vector.extract_strided_slice %8 {offsets = [0, 4, 0], sizes = [1, 16, 16], strides = [1, 1, 1]} : vector<1x22x22xf32> to vector<1x16x16xf32>
    %297 = vector.broadcast %294 : f32 to vector<1x16x16xf32>
    %298 = arith.mulf %296, %297 : vector<1x16x16xf32>
    %299 = arith.addf %293, %298 : vector<1x16x16xf32>
    %300 = vector.extract_strided_slice %12 {offsets = [0, 4, 0], sizes = [1, 16, 16], strides = [1, 1, 1]} : vector<1x22x22xf32> to vector<1x16x16xf32>
    %301 = vector.broadcast %295 : f32 to vector<1x16x16xf32>
    %302 = arith.mulf %300, %301 : vector<1x16x16xf32>
    %303 = arith.addf %299, %302 : vector<1x16x16xf32>
    %c29 = arith.constant 29 : index
    %304 = memref.load %arg2[%c29] : memref<98xf32, #tpu.memory_space<smem>>
    %c78 = arith.constant 78 : index
    %305 = memref.load %arg2[%c78] : memref<98xf32, #tpu.memory_space<smem>>
    %306 = vector.extract_strided_slice %8 {offsets = [0, 4, 1], sizes = [1, 16, 16], strides = [1, 1, 1]} : vector<1x22x22xf32> to vector<1x16x16xf32>
    %307 = vector.broadcast %304 : f32 to vector<1x16x16xf32>
    %308 = arith.mulf %306, %307 : vector<1x16x16xf32>
    %309 = arith.addf %303, %308 : vector<1x16x16xf32>
    %310 = vector.extract_strided_slice %12 {offsets = [0, 4, 1], sizes = [1, 16, 16], strides = [1, 1, 1]} : vector<1x22x22xf32> to vector<1x16x16xf32>
    %311 = vector.broadcast %305 : f32 to vector<1x16x16xf32>
    %312 = arith.mulf %310, %311 : vector<1x16x16xf32>
    %313 = arith.addf %309, %312 : vector<1x16x16xf32>
    %c30 = arith.constant 30 : index
    %314 = memref.load %arg2[%c30] : memref<98xf32, #tpu.memory_space<smem>>
    %c79 = arith.constant 79 : index
    %315 = memref.load %arg2[%c79] : memref<98xf32, #tpu.memory_space<smem>>
    %316 = vector.extract_strided_slice %8 {offsets = [0, 4, 2], sizes = [1, 16, 16], strides = [1, 1, 1]} : vector<1x22x22xf32> to vector<1x16x16xf32>
    %317 = vector.broadcast %314 : f32 to vector<1x16x16xf32>
    %318 = arith.mulf %316, %317 : vector<1x16x16xf32>
    %319 = arith.addf %313, %318 : vector<1x16x16xf32>
    %320 = vector.extract_strided_slice %12 {offsets = [0, 4, 2], sizes = [1, 16, 16], strides = [1, 1, 1]} : vector<1x22x22xf32> to vector<1x16x16xf32>
    %321 = vector.broadcast %315 : f32 to vector<1x16x16xf32>
    %322 = arith.mulf %320, %321 : vector<1x16x16xf32>
    %323 = arith.addf %319, %322 : vector<1x16x16xf32>
    %c31 = arith.constant 31 : index
    %324 = memref.load %arg2[%c31] : memref<98xf32, #tpu.memory_space<smem>>
    %c80 = arith.constant 80 : index
    %325 = memref.load %arg2[%c80] : memref<98xf32, #tpu.memory_space<smem>>
    %326 = vector.extract_strided_slice %8 {offsets = [0, 4, 3], sizes = [1, 16, 16], strides = [1, 1, 1]} : vector<1x22x22xf32> to vector<1x16x16xf32>
    %327 = vector.broadcast %324 : f32 to vector<1x16x16xf32>
    %328 = arith.mulf %326, %327 : vector<1x16x16xf32>
    %329 = arith.addf %323, %328 : vector<1x16x16xf32>
    %330 = vector.extract_strided_slice %12 {offsets = [0, 4, 3], sizes = [1, 16, 16], strides = [1, 1, 1]} : vector<1x22x22xf32> to vector<1x16x16xf32>
    %331 = vector.broadcast %325 : f32 to vector<1x16x16xf32>
    %332 = arith.mulf %330, %331 : vector<1x16x16xf32>
    %333 = arith.addf %329, %332 : vector<1x16x16xf32>
    %c32 = arith.constant 32 : index
    %334 = memref.load %arg2[%c32] : memref<98xf32, #tpu.memory_space<smem>>
    %c81 = arith.constant 81 : index
    %335 = memref.load %arg2[%c81] : memref<98xf32, #tpu.memory_space<smem>>
    %336 = vector.extract_strided_slice %8 {offsets = [0, 4, 4], sizes = [1, 16, 16], strides = [1, 1, 1]} : vector<1x22x22xf32> to vector<1x16x16xf32>
    %337 = vector.broadcast %334 : f32 to vector<1x16x16xf32>
    %338 = arith.mulf %336, %337 : vector<1x16x16xf32>
    %339 = arith.addf %333, %338 : vector<1x16x16xf32>
    %340 = vector.extract_strided_slice %12 {offsets = [0, 4, 4], sizes = [1, 16, 16], strides = [1, 1, 1]} : vector<1x22x22xf32> to vector<1x16x16xf32>
    %341 = vector.broadcast %335 : f32 to vector<1x16x16xf32>
    %342 = arith.mulf %340, %341 : vector<1x16x16xf32>
    %343 = arith.addf %339, %342 : vector<1x16x16xf32>
    %c33 = arith.constant 33 : index
    %344 = memref.load %arg2[%c33] : memref<98xf32, #tpu.memory_space<smem>>
    %c82 = arith.constant 82 : index
    %345 = memref.load %arg2[%c82] : memref<98xf32, #tpu.memory_space<smem>>
    %346 = vector.extract_strided_slice %8 {offsets = [0, 4, 5], sizes = [1, 16, 16], strides = [1, 1, 1]} : vector<1x22x22xf32> to vector<1x16x16xf32>
    %347 = vector.broadcast %344 : f32 to vector<1x16x16xf32>
    %348 = arith.mulf %346, %347 : vector<1x16x16xf32>
    %349 = arith.addf %343, %348 : vector<1x16x16xf32>
    %350 = vector.extract_strided_slice %12 {offsets = [0, 4, 5], sizes = [1, 16, 16], strides = [1, 1, 1]} : vector<1x22x22xf32> to vector<1x16x16xf32>
    %351 = vector.broadcast %345 : f32 to vector<1x16x16xf32>
    %352 = arith.mulf %350, %351 : vector<1x16x16xf32>
    %353 = arith.addf %349, %352 : vector<1x16x16xf32>
    %c34 = arith.constant 34 : index
    %354 = memref.load %arg2[%c34] : memref<98xf32, #tpu.memory_space<smem>>
    %c83 = arith.constant 83 : index
    %355 = memref.load %arg2[%c83] : memref<98xf32, #tpu.memory_space<smem>>
    %356 = vector.extract_strided_slice %8 {offsets = [0, 4, 6], sizes = [1, 16, 16], strides = [1, 1, 1]} : vector<1x22x22xf32> to vector<1x16x16xf32>
    %357 = vector.broadcast %354 : f32 to vector<1x16x16xf32>
    %358 = arith.mulf %356, %357 : vector<1x16x16xf32>
    %359 = arith.addf %353, %358 : vector<1x16x16xf32>
    %360 = vector.extract_strided_slice %12 {offsets = [0, 4, 6], sizes = [1, 16, 16], strides = [1, 1, 1]} : vector<1x22x22xf32> to vector<1x16x16xf32>
    %361 = vector.broadcast %355 : f32 to vector<1x16x16xf32>
    %362 = arith.mulf %360, %361 : vector<1x16x16xf32>
    %363 = arith.addf %359, %362 : vector<1x16x16xf32>
    %c35 = arith.constant 35 : index
    %364 = memref.load %arg2[%c35] : memref<98xf32, #tpu.memory_space<smem>>
    %c84 = arith.constant 84 : index
    %365 = memref.load %arg2[%c84] : memref<98xf32, #tpu.memory_space<smem>>
    %366 = vector.extract_strided_slice %8 {offsets = [0, 5, 0], sizes = [1, 16, 16], strides = [1, 1, 1]} : vector<1x22x22xf32> to vector<1x16x16xf32>
    %367 = vector.broadcast %364 : f32 to vector<1x16x16xf32>
    %368 = arith.mulf %366, %367 : vector<1x16x16xf32>
    %369 = arith.addf %363, %368 : vector<1x16x16xf32>
    %370 = vector.extract_strided_slice %12 {offsets = [0, 5, 0], sizes = [1, 16, 16], strides = [1, 1, 1]} : vector<1x22x22xf32> to vector<1x16x16xf32>
    %371 = vector.broadcast %365 : f32 to vector<1x16x16xf32>
    %372 = arith.mulf %370, %371 : vector<1x16x16xf32>
    %373 = arith.addf %369, %372 : vector<1x16x16xf32>
    %c36 = arith.constant 36 : index
    %374 = memref.load %arg2[%c36] : memref<98xf32, #tpu.memory_space<smem>>
    %c85 = arith.constant 85 : index
    %375 = memref.load %arg2[%c85] : memref<98xf32, #tpu.memory_space<smem>>
    %376 = vector.extract_strided_slice %8 {offsets = [0, 5, 1], sizes = [1, 16, 16], strides = [1, 1, 1]} : vector<1x22x22xf32> to vector<1x16x16xf32>
    %377 = vector.broadcast %374 : f32 to vector<1x16x16xf32>
    %378 = arith.mulf %376, %377 : vector<1x16x16xf32>
    %379 = arith.addf %373, %378 : vector<1x16x16xf32>
    %380 = vector.extract_strided_slice %12 {offsets = [0, 5, 1], sizes = [1, 16, 16], strides = [1, 1, 1]} : vector<1x22x22xf32> to vector<1x16x16xf32>
    %381 = vector.broadcast %375 : f32 to vector<1x16x16xf32>
    %382 = arith.mulf %380, %381 : vector<1x16x16xf32>
    %383 = arith.addf %379, %382 : vector<1x16x16xf32>
    %c37 = arith.constant 37 : index
    %384 = memref.load %arg2[%c37] : memref<98xf32, #tpu.memory_space<smem>>
    %c86 = arith.constant 86 : index
    %385 = memref.load %arg2[%c86] : memref<98xf32, #tpu.memory_space<smem>>
    %386 = vector.extract_strided_slice %8 {offsets = [0, 5, 2], sizes = [1, 16, 16], strides = [1, 1, 1]} : vector<1x22x22xf32> to vector<1x16x16xf32>
    %387 = vector.broadcast %384 : f32 to vector<1x16x16xf32>
    %388 = arith.mulf %386, %387 : vector<1x16x16xf32>
    %389 = arith.addf %383, %388 : vector<1x16x16xf32>
    %390 = vector.extract_strided_slice %12 {offsets = [0, 5, 2], sizes = [1, 16, 16], strides = [1, 1, 1]} : vector<1x22x22xf32> to vector<1x16x16xf32>
    %391 = vector.broadcast %385 : f32 to vector<1x16x16xf32>
    %392 = arith.mulf %390, %391 : vector<1x16x16xf32>
    %393 = arith.addf %389, %392 : vector<1x16x16xf32>
    %c38 = arith.constant 38 : index
    %394 = memref.load %arg2[%c38] : memref<98xf32, #tpu.memory_space<smem>>
    %c87 = arith.constant 87 : index
    %395 = memref.load %arg2[%c87] : memref<98xf32, #tpu.memory_space<smem>>
    %396 = vector.extract_strided_slice %8 {offsets = [0, 5, 3], sizes = [1, 16, 16], strides = [1, 1, 1]} : vector<1x22x22xf32> to vector<1x16x16xf32>
    %397 = vector.broadcast %394 : f32 to vector<1x16x16xf32>
    %398 = arith.mulf %396, %397 : vector<1x16x16xf32>
    %399 = arith.addf %393, %398 : vector<1x16x16xf32>
    %400 = vector.extract_strided_slice %12 {offsets = [0, 5, 3], sizes = [1, 16, 16], strides = [1, 1, 1]} : vector<1x22x22xf32> to vector<1x16x16xf32>
    %401 = vector.broadcast %395 : f32 to vector<1x16x16xf32>
    %402 = arith.mulf %400, %401 : vector<1x16x16xf32>
    %403 = arith.addf %399, %402 : vector<1x16x16xf32>
    %c39 = arith.constant 39 : index
    %404 = memref.load %arg2[%c39] : memref<98xf32, #tpu.memory_space<smem>>
    %c88 = arith.constant 88 : index
    %405 = memref.load %arg2[%c88] : memref<98xf32, #tpu.memory_space<smem>>
    %406 = vector.extract_strided_slice %8 {offsets = [0, 5, 4], sizes = [1, 16, 16], strides = [1, 1, 1]} : vector<1x22x22xf32> to vector<1x16x16xf32>
    %407 = vector.broadcast %404 : f32 to vector<1x16x16xf32>
    %408 = arith.mulf %406, %407 : vector<1x16x16xf32>
    %409 = arith.addf %403, %408 : vector<1x16x16xf32>
    %410 = vector.extract_strided_slice %12 {offsets = [0, 5, 4], sizes = [1, 16, 16], strides = [1, 1, 1]} : vector<1x22x22xf32> to vector<1x16x16xf32>
    %411 = vector.broadcast %405 : f32 to vector<1x16x16xf32>
    %412 = arith.mulf %410, %411 : vector<1x16x16xf32>
    %413 = arith.addf %409, %412 : vector<1x16x16xf32>
    %c40 = arith.constant 40 : index
    %414 = memref.load %arg2[%c40] : memref<98xf32, #tpu.memory_space<smem>>
    %c89 = arith.constant 89 : index
    %415 = memref.load %arg2[%c89] : memref<98xf32, #tpu.memory_space<smem>>
    %416 = vector.extract_strided_slice %8 {offsets = [0, 5, 5], sizes = [1, 16, 16], strides = [1, 1, 1]} : vector<1x22x22xf32> to vector<1x16x16xf32>
    %417 = vector.broadcast %414 : f32 to vector<1x16x16xf32>
    %418 = arith.mulf %416, %417 : vector<1x16x16xf32>
    %419 = arith.addf %413, %418 : vector<1x16x16xf32>
    %420 = vector.extract_strided_slice %12 {offsets = [0, 5, 5], sizes = [1, 16, 16], strides = [1, 1, 1]} : vector<1x22x22xf32> to vector<1x16x16xf32>
    %421 = vector.broadcast %415 : f32 to vector<1x16x16xf32>
    %422 = arith.mulf %420, %421 : vector<1x16x16xf32>
    %423 = arith.addf %419, %422 : vector<1x16x16xf32>
    %c41 = arith.constant 41 : index
    %424 = memref.load %arg2[%c41] : memref<98xf32, #tpu.memory_space<smem>>
    %c90 = arith.constant 90 : index
    %425 = memref.load %arg2[%c90] : memref<98xf32, #tpu.memory_space<smem>>
    %426 = vector.extract_strided_slice %8 {offsets = [0, 5, 6], sizes = [1, 16, 16], strides = [1, 1, 1]} : vector<1x22x22xf32> to vector<1x16x16xf32>
    %427 = vector.broadcast %424 : f32 to vector<1x16x16xf32>
    %428 = arith.mulf %426, %427 : vector<1x16x16xf32>
    %429 = arith.addf %423, %428 : vector<1x16x16xf32>
    %430 = vector.extract_strided_slice %12 {offsets = [0, 5, 6], sizes = [1, 16, 16], strides = [1, 1, 1]} : vector<1x22x22xf32> to vector<1x16x16xf32>
    %431 = vector.broadcast %425 : f32 to vector<1x16x16xf32>
    %432 = arith.mulf %430, %431 : vector<1x16x16xf32>
    %433 = arith.addf %429, %432 : vector<1x16x16xf32>
    %c42 = arith.constant 42 : index
    %434 = memref.load %arg2[%c42] : memref<98xf32, #tpu.memory_space<smem>>
    %c91 = arith.constant 91 : index
    %435 = memref.load %arg2[%c91] : memref<98xf32, #tpu.memory_space<smem>>
    %436 = vector.extract_strided_slice %8 {offsets = [0, 6, 0], sizes = [1, 16, 16], strides = [1, 1, 1]} : vector<1x22x22xf32> to vector<1x16x16xf32>
    %437 = vector.broadcast %434 : f32 to vector<1x16x16xf32>
    %438 = arith.mulf %436, %437 : vector<1x16x16xf32>
    %439 = arith.addf %433, %438 : vector<1x16x16xf32>
    %440 = vector.extract_strided_slice %12 {offsets = [0, 6, 0], sizes = [1, 16, 16], strides = [1, 1, 1]} : vector<1x22x22xf32> to vector<1x16x16xf32>
    %441 = vector.broadcast %435 : f32 to vector<1x16x16xf32>
    %442 = arith.mulf %440, %441 : vector<1x16x16xf32>
    %443 = arith.addf %439, %442 : vector<1x16x16xf32>
    %c43 = arith.constant 43 : index
    %444 = memref.load %arg2[%c43] : memref<98xf32, #tpu.memory_space<smem>>
    %c92 = arith.constant 92 : index
    %445 = memref.load %arg2[%c92] : memref<98xf32, #tpu.memory_space<smem>>
    %446 = vector.extract_strided_slice %8 {offsets = [0, 6, 1], sizes = [1, 16, 16], strides = [1, 1, 1]} : vector<1x22x22xf32> to vector<1x16x16xf32>
    %447 = vector.broadcast %444 : f32 to vector<1x16x16xf32>
    %448 = arith.mulf %446, %447 : vector<1x16x16xf32>
    %449 = arith.addf %443, %448 : vector<1x16x16xf32>
    %450 = vector.extract_strided_slice %12 {offsets = [0, 6, 1], sizes = [1, 16, 16], strides = [1, 1, 1]} : vector<1x22x22xf32> to vector<1x16x16xf32>
    %451 = vector.broadcast %445 : f32 to vector<1x16x16xf32>
    %452 = arith.mulf %450, %451 : vector<1x16x16xf32>
    %453 = arith.addf %449, %452 : vector<1x16x16xf32>
    %c44 = arith.constant 44 : index
    %454 = memref.load %arg2[%c44] : memref<98xf32, #tpu.memory_space<smem>>
    %c93 = arith.constant 93 : index
    %455 = memref.load %arg2[%c93] : memref<98xf32, #tpu.memory_space<smem>>
    %456 = vector.extract_strided_slice %8 {offsets = [0, 6, 2], sizes = [1, 16, 16], strides = [1, 1, 1]} : vector<1x22x22xf32> to vector<1x16x16xf32>
    %457 = vector.broadcast %454 : f32 to vector<1x16x16xf32>
    %458 = arith.mulf %456, %457 : vector<1x16x16xf32>
    %459 = arith.addf %453, %458 : vector<1x16x16xf32>
    %460 = vector.extract_strided_slice %12 {offsets = [0, 6, 2], sizes = [1, 16, 16], strides = [1, 1, 1]} : vector<1x22x22xf32> to vector<1x16x16xf32>
    %461 = vector.broadcast %455 : f32 to vector<1x16x16xf32>
    %462 = arith.mulf %460, %461 : vector<1x16x16xf32>
    %463 = arith.addf %459, %462 : vector<1x16x16xf32>
    %c45 = arith.constant 45 : index
    %464 = memref.load %arg2[%c45] : memref<98xf32, #tpu.memory_space<smem>>
    %c94 = arith.constant 94 : index
    %465 = memref.load %arg2[%c94] : memref<98xf32, #tpu.memory_space<smem>>
    %466 = vector.extract_strided_slice %8 {offsets = [0, 6, 3], sizes = [1, 16, 16], strides = [1, 1, 1]} : vector<1x22x22xf32> to vector<1x16x16xf32>
    %467 = vector.broadcast %464 : f32 to vector<1x16x16xf32>
    %468 = arith.mulf %466, %467 : vector<1x16x16xf32>
    %469 = arith.addf %463, %468 : vector<1x16x16xf32>
    %470 = vector.extract_strided_slice %12 {offsets = [0, 6, 3], sizes = [1, 16, 16], strides = [1, 1, 1]} : vector<1x22x22xf32> to vector<1x16x16xf32>
    %471 = vector.broadcast %465 : f32 to vector<1x16x16xf32>
    %472 = arith.mulf %470, %471 : vector<1x16x16xf32>
    %473 = arith.addf %469, %472 : vector<1x16x16xf32>
    %c46 = arith.constant 46 : index
    %474 = memref.load %arg2[%c46] : memref<98xf32, #tpu.memory_space<smem>>
    %c95 = arith.constant 95 : index
    %475 = memref.load %arg2[%c95] : memref<98xf32, #tpu.memory_space<smem>>
    %476 = vector.extract_strided_slice %8 {offsets = [0, 6, 4], sizes = [1, 16, 16], strides = [1, 1, 1]} : vector<1x22x22xf32> to vector<1x16x16xf32>
    %477 = vector.broadcast %474 : f32 to vector<1x16x16xf32>
    %478 = arith.mulf %476, %477 : vector<1x16x16xf32>
    %479 = arith.addf %473, %478 : vector<1x16x16xf32>
    %480 = vector.extract_strided_slice %12 {offsets = [0, 6, 4], sizes = [1, 16, 16], strides = [1, 1, 1]} : vector<1x22x22xf32> to vector<1x16x16xf32>
    %481 = vector.broadcast %475 : f32 to vector<1x16x16xf32>
    %482 = arith.mulf %480, %481 : vector<1x16x16xf32>
    %483 = arith.addf %479, %482 : vector<1x16x16xf32>
    %c47 = arith.constant 47 : index
    %484 = memref.load %arg2[%c47] : memref<98xf32, #tpu.memory_space<smem>>
    %c96 = arith.constant 96 : index
    %485 = memref.load %arg2[%c96] : memref<98xf32, #tpu.memory_space<smem>>
    %486 = vector.extract_strided_slice %8 {offsets = [0, 6, 5], sizes = [1, 16, 16], strides = [1, 1, 1]} : vector<1x22x22xf32> to vector<1x16x16xf32>
    %487 = vector.broadcast %484 : f32 to vector<1x16x16xf32>
    %488 = arith.mulf %486, %487 : vector<1x16x16xf32>
    %489 = arith.addf %483, %488 : vector<1x16x16xf32>
    %490 = vector.extract_strided_slice %12 {offsets = [0, 6, 5], sizes = [1, 16, 16], strides = [1, 1, 1]} : vector<1x22x22xf32> to vector<1x16x16xf32>
    %491 = vector.broadcast %485 : f32 to vector<1x16x16xf32>
    %492 = arith.mulf %490, %491 : vector<1x16x16xf32>
    %493 = arith.addf %489, %492 : vector<1x16x16xf32>
    %c48 = arith.constant 48 : index
    %494 = memref.load %arg2[%c48] : memref<98xf32, #tpu.memory_space<smem>>
    %c97 = arith.constant 97 : index
    %495 = memref.load %arg2[%c97] : memref<98xf32, #tpu.memory_space<smem>>
    %496 = vector.extract_strided_slice %8 {offsets = [0, 6, 6], sizes = [1, 16, 16], strides = [1, 1, 1]} : vector<1x22x22xf32> to vector<1x16x16xf32>
    %497 = vector.broadcast %494 : f32 to vector<1x16x16xf32>
    %498 = arith.mulf %496, %497 : vector<1x16x16xf32>
    %499 = arith.addf %493, %498 : vector<1x16x16xf32>
    %500 = vector.extract_strided_slice %12 {offsets = [0, 6, 6], sizes = [1, 16, 16], strides = [1, 1, 1]} : vector<1x22x22xf32> to vector<1x16x16xf32>
    %501 = vector.broadcast %495 : f32 to vector<1x16x16xf32>
    %502 = arith.mulf %500, %501 : vector<1x16x16xf32>
    %503 = arith.addf %499, %502 : vector<1x16x16xf32>
    %cst_11 = arith.constant 0.000000e+00 : f32
    %504 = vector.broadcast %cst_11 : f32 to vector<1x16x2xf32>
    %505 = tpu.concatenate %504, %503, %504 in 2 : vector<1x16x2xf32>, vector<1x16x16xf32>, vector<1x16x2xf32> -> vector<1x16x20xf32>
    %cst_12 = arith.constant 0.000000e+00 : f32
    %506 = vector.broadcast %cst_12 : f32 to vector<1x2x20xf32>
    %507 = tpu.concatenate %506, %505, %506 in 1 : vector<1x2x20xf32>, vector<1x16x20xf32>, vector<1x2x20xf32> -> vector<1x20x20xf32>
    %cst_13 = arith.constant 0.000000e+00 : f32
    %508 = vector.broadcast %cst_13 : f32 to vector<1x16x16xf32>
    %509 = vector.extract_strided_slice %507 {offsets = [0, 0, 0], sizes = [1, 16, 16], strides = [1, 1, 1]} : vector<1x20x20xf32> to vector<1x16x16xf32>
    %c0_14 = arith.constant 0 : index
    %510 = memref.load %arg3[%c0_14] : memref<25xf32, #tpu.memory_space<smem>>
    %511 = vector.broadcast %510 : f32 to vector<1x16x16xf32>
    %512 = arith.mulf %509, %511 : vector<1x16x16xf32>
    %513 = arith.addf %508, %512 : vector<1x16x16xf32>
    %514 = vector.extract_strided_slice %507 {offsets = [0, 0, 1], sizes = [1, 16, 16], strides = [1, 1, 1]} : vector<1x20x20xf32> to vector<1x16x16xf32>
    %c1_15 = arith.constant 1 : index
    %515 = memref.load %arg3[%c1_15] : memref<25xf32, #tpu.memory_space<smem>>
    %516 = vector.broadcast %515 : f32 to vector<1x16x16xf32>
    %517 = arith.mulf %514, %516 : vector<1x16x16xf32>
    %518 = arith.addf %513, %517 : vector<1x16x16xf32>
    %519 = vector.extract_strided_slice %507 {offsets = [0, 0, 2], sizes = [1, 16, 16], strides = [1, 1, 1]} : vector<1x20x20xf32> to vector<1x16x16xf32>
    %c2_16 = arith.constant 2 : index
    %520 = memref.load %arg3[%c2_16] : memref<25xf32, #tpu.memory_space<smem>>
    %521 = vector.broadcast %520 : f32 to vector<1x16x16xf32>
    %522 = arith.mulf %519, %521 : vector<1x16x16xf32>
    %523 = arith.addf %518, %522 : vector<1x16x16xf32>
    %524 = vector.extract_strided_slice %507 {offsets = [0, 0, 3], sizes = [1, 16, 16], strides = [1, 1, 1]} : vector<1x20x20xf32> to vector<1x16x16xf32>
    %c3_17 = arith.constant 3 : index
    %525 = memref.load %arg3[%c3_17] : memref<25xf32, #tpu.memory_space<smem>>
    %526 = vector.broadcast %525 : f32 to vector<1x16x16xf32>
    %527 = arith.mulf %524, %526 : vector<1x16x16xf32>
    %528 = arith.addf %523, %527 : vector<1x16x16xf32>
    %529 = vector.extract_strided_slice %507 {offsets = [0, 0, 4], sizes = [1, 16, 16], strides = [1, 1, 1]} : vector<1x20x20xf32> to vector<1x16x16xf32>
    %c4_18 = arith.constant 4 : index
    %530 = memref.load %arg3[%c4_18] : memref<25xf32, #tpu.memory_space<smem>>
    %531 = vector.broadcast %530 : f32 to vector<1x16x16xf32>
    %532 = arith.mulf %529, %531 : vector<1x16x16xf32>
    %533 = arith.addf %528, %532 : vector<1x16x16xf32>
    %534 = vector.extract_strided_slice %507 {offsets = [0, 1, 0], sizes = [1, 16, 16], strides = [1, 1, 1]} : vector<1x20x20xf32> to vector<1x16x16xf32>
    %c5_19 = arith.constant 5 : index
    %535 = memref.load %arg3[%c5_19] : memref<25xf32, #tpu.memory_space<smem>>
    %536 = vector.broadcast %535 : f32 to vector<1x16x16xf32>
    %537 = arith.mulf %534, %536 : vector<1x16x16xf32>
    %538 = arith.addf %533, %537 : vector<1x16x16xf32>
    %539 = vector.extract_strided_slice %507 {offsets = [0, 1, 1], sizes = [1, 16, 16], strides = [1, 1, 1]} : vector<1x20x20xf32> to vector<1x16x16xf32>
    %c6_20 = arith.constant 6 : index
    %540 = memref.load %arg3[%c6_20] : memref<25xf32, #tpu.memory_space<smem>>
    %541 = vector.broadcast %540 : f32 to vector<1x16x16xf32>
    %542 = arith.mulf %539, %541 : vector<1x16x16xf32>
    %543 = arith.addf %538, %542 : vector<1x16x16xf32>
    %544 = vector.extract_strided_slice %507 {offsets = [0, 1, 2], sizes = [1, 16, 16], strides = [1, 1, 1]} : vector<1x20x20xf32> to vector<1x16x16xf32>
    %c7_21 = arith.constant 7 : index
    %545 = memref.load %arg3[%c7_21] : memref<25xf32, #tpu.memory_space<smem>>
    %546 = vector.broadcast %545 : f32 to vector<1x16x16xf32>
    %547 = arith.mulf %544, %546 : vector<1x16x16xf32>
    %548 = arith.addf %543, %547 : vector<1x16x16xf32>
    %549 = vector.extract_strided_slice %507 {offsets = [0, 1, 3], sizes = [1, 16, 16], strides = [1, 1, 1]} : vector<1x20x20xf32> to vector<1x16x16xf32>
    %c8_22 = arith.constant 8 : index
    %550 = memref.load %arg3[%c8_22] : memref<25xf32, #tpu.memory_space<smem>>
    %551 = vector.broadcast %550 : f32 to vector<1x16x16xf32>
    %552 = arith.mulf %549, %551 : vector<1x16x16xf32>
    %553 = arith.addf %548, %552 : vector<1x16x16xf32>
    %554 = vector.extract_strided_slice %507 {offsets = [0, 1, 4], sizes = [1, 16, 16], strides = [1, 1, 1]} : vector<1x20x20xf32> to vector<1x16x16xf32>
    %c9_23 = arith.constant 9 : index
    %555 = memref.load %arg3[%c9_23] : memref<25xf32, #tpu.memory_space<smem>>
    %556 = vector.broadcast %555 : f32 to vector<1x16x16xf32>
    %557 = arith.mulf %554, %556 : vector<1x16x16xf32>
    %558 = arith.addf %553, %557 : vector<1x16x16xf32>
    %559 = vector.extract_strided_slice %507 {offsets = [0, 2, 0], sizes = [1, 16, 16], strides = [1, 1, 1]} : vector<1x20x20xf32> to vector<1x16x16xf32>
    %c10_24 = arith.constant 10 : index
    %560 = memref.load %arg3[%c10_24] : memref<25xf32, #tpu.memory_space<smem>>
    %561 = vector.broadcast %560 : f32 to vector<1x16x16xf32>
    %562 = arith.mulf %559, %561 : vector<1x16x16xf32>
    %563 = arith.addf %558, %562 : vector<1x16x16xf32>
    %564 = vector.extract_strided_slice %507 {offsets = [0, 2, 1], sizes = [1, 16, 16], strides = [1, 1, 1]} : vector<1x20x20xf32> to vector<1x16x16xf32>
    %c11_25 = arith.constant 11 : index
    %565 = memref.load %arg3[%c11_25] : memref<25xf32, #tpu.memory_space<smem>>
    %566 = vector.broadcast %565 : f32 to vector<1x16x16xf32>
    %567 = arith.mulf %564, %566 : vector<1x16x16xf32>
    %568 = arith.addf %563, %567 : vector<1x16x16xf32>
    %569 = vector.extract_strided_slice %507 {offsets = [0, 2, 2], sizes = [1, 16, 16], strides = [1, 1, 1]} : vector<1x20x20xf32> to vector<1x16x16xf32>
    %c12_26 = arith.constant 12 : index
    %570 = memref.load %arg3[%c12_26] : memref<25xf32, #tpu.memory_space<smem>>
    %571 = vector.broadcast %570 : f32 to vector<1x16x16xf32>
    %572 = arith.mulf %569, %571 : vector<1x16x16xf32>
    %573 = arith.addf %568, %572 : vector<1x16x16xf32>
    %574 = vector.extract_strided_slice %507 {offsets = [0, 2, 3], sizes = [1, 16, 16], strides = [1, 1, 1]} : vector<1x20x20xf32> to vector<1x16x16xf32>
    %c13_27 = arith.constant 13 : index
    %575 = memref.load %arg3[%c13_27] : memref<25xf32, #tpu.memory_space<smem>>
    %576 = vector.broadcast %575 : f32 to vector<1x16x16xf32>
    %577 = arith.mulf %574, %576 : vector<1x16x16xf32>
    %578 = arith.addf %573, %577 : vector<1x16x16xf32>
    %579 = vector.extract_strided_slice %507 {offsets = [0, 2, 4], sizes = [1, 16, 16], strides = [1, 1, 1]} : vector<1x20x20xf32> to vector<1x16x16xf32>
    %c14_28 = arith.constant 14 : index
    %580 = memref.load %arg3[%c14_28] : memref<25xf32, #tpu.memory_space<smem>>
    %581 = vector.broadcast %580 : f32 to vector<1x16x16xf32>
    %582 = arith.mulf %579, %581 : vector<1x16x16xf32>
    %583 = arith.addf %578, %582 : vector<1x16x16xf32>
    %584 = vector.extract_strided_slice %507 {offsets = [0, 3, 0], sizes = [1, 16, 16], strides = [1, 1, 1]} : vector<1x20x20xf32> to vector<1x16x16xf32>
    %c15_29 = arith.constant 15 : index
    %585 = memref.load %arg3[%c15_29] : memref<25xf32, #tpu.memory_space<smem>>
    %586 = vector.broadcast %585 : f32 to vector<1x16x16xf32>
    %587 = arith.mulf %584, %586 : vector<1x16x16xf32>
    %588 = arith.addf %583, %587 : vector<1x16x16xf32>
    %589 = vector.extract_strided_slice %507 {offsets = [0, 3, 1], sizes = [1, 16, 16], strides = [1, 1, 1]} : vector<1x20x20xf32> to vector<1x16x16xf32>
    %c16_30 = arith.constant 16 : index
    %590 = memref.load %arg3[%c16_30] : memref<25xf32, #tpu.memory_space<smem>>
    %591 = vector.broadcast %590 : f32 to vector<1x16x16xf32>
    %592 = arith.mulf %589, %591 : vector<1x16x16xf32>
    %593 = arith.addf %588, %592 : vector<1x16x16xf32>
    %594 = vector.extract_strided_slice %507 {offsets = [0, 3, 2], sizes = [1, 16, 16], strides = [1, 1, 1]} : vector<1x20x20xf32> to vector<1x16x16xf32>
    %c17_31 = arith.constant 17 : index
    %595 = memref.load %arg3[%c17_31] : memref<25xf32, #tpu.memory_space<smem>>
    %596 = vector.broadcast %595 : f32 to vector<1x16x16xf32>
    %597 = arith.mulf %594, %596 : vector<1x16x16xf32>
    %598 = arith.addf %593, %597 : vector<1x16x16xf32>
    %599 = vector.extract_strided_slice %507 {offsets = [0, 3, 3], sizes = [1, 16, 16], strides = [1, 1, 1]} : vector<1x20x20xf32> to vector<1x16x16xf32>
    %c18_32 = arith.constant 18 : index
    %600 = memref.load %arg3[%c18_32] : memref<25xf32, #tpu.memory_space<smem>>
    %601 = vector.broadcast %600 : f32 to vector<1x16x16xf32>
    %602 = arith.mulf %599, %601 : vector<1x16x16xf32>
    %603 = arith.addf %598, %602 : vector<1x16x16xf32>
    %604 = vector.extract_strided_slice %507 {offsets = [0, 3, 4], sizes = [1, 16, 16], strides = [1, 1, 1]} : vector<1x20x20xf32> to vector<1x16x16xf32>
    %c19_33 = arith.constant 19 : index
    %605 = memref.load %arg3[%c19_33] : memref<25xf32, #tpu.memory_space<smem>>
    %606 = vector.broadcast %605 : f32 to vector<1x16x16xf32>
    %607 = arith.mulf %604, %606 : vector<1x16x16xf32>
    %608 = arith.addf %603, %607 : vector<1x16x16xf32>
    %609 = vector.extract_strided_slice %507 {offsets = [0, 4, 0], sizes = [1, 16, 16], strides = [1, 1, 1]} : vector<1x20x20xf32> to vector<1x16x16xf32>
    %c20_34 = arith.constant 20 : index
    %610 = memref.load %arg3[%c20_34] : memref<25xf32, #tpu.memory_space<smem>>
    %611 = vector.broadcast %610 : f32 to vector<1x16x16xf32>
    %612 = arith.mulf %609, %611 : vector<1x16x16xf32>
    %613 = arith.addf %608, %612 : vector<1x16x16xf32>
    %614 = vector.extract_strided_slice %507 {offsets = [0, 4, 1], sizes = [1, 16, 16], strides = [1, 1, 1]} : vector<1x20x20xf32> to vector<1x16x16xf32>
    %c21_35 = arith.constant 21 : index
    %615 = memref.load %arg3[%c21_35] : memref<25xf32, #tpu.memory_space<smem>>
    %616 = vector.broadcast %615 : f32 to vector<1x16x16xf32>
    %617 = arith.mulf %614, %616 : vector<1x16x16xf32>
    %618 = arith.addf %613, %617 : vector<1x16x16xf32>
    %619 = vector.extract_strided_slice %507 {offsets = [0, 4, 2], sizes = [1, 16, 16], strides = [1, 1, 1]} : vector<1x20x20xf32> to vector<1x16x16xf32>
    %c22_36 = arith.constant 22 : index
    %620 = memref.load %arg3[%c22_36] : memref<25xf32, #tpu.memory_space<smem>>
    %621 = vector.broadcast %620 : f32 to vector<1x16x16xf32>
    %622 = arith.mulf %619, %621 : vector<1x16x16xf32>
    %623 = arith.addf %618, %622 : vector<1x16x16xf32>
    %624 = vector.extract_strided_slice %507 {offsets = [0, 4, 3], sizes = [1, 16, 16], strides = [1, 1, 1]} : vector<1x20x20xf32> to vector<1x16x16xf32>
    %c23_37 = arith.constant 23 : index
    %625 = memref.load %arg3[%c23_37] : memref<25xf32, #tpu.memory_space<smem>>
    %626 = vector.broadcast %625 : f32 to vector<1x16x16xf32>
    %627 = arith.mulf %624, %626 : vector<1x16x16xf32>
    %628 = arith.addf %623, %627 : vector<1x16x16xf32>
    %629 = vector.extract_strided_slice %507 {offsets = [0, 4, 4], sizes = [1, 16, 16], strides = [1, 1, 1]} : vector<1x20x20xf32> to vector<1x16x16xf32>
    %c24_38 = arith.constant 24 : index
    %630 = memref.load %arg3[%c24_38] : memref<25xf32, #tpu.memory_space<smem>>
    %631 = vector.broadcast %630 : f32 to vector<1x16x16xf32>
    %632 = arith.mulf %629, %631 : vector<1x16x16xf32>
    %633 = arith.addf %628, %632 : vector<1x16x16xf32>
    %634 = arith.negf %633 : vector<1x16x16xf32>
    %635 = math.exp %634 : vector<1x16x16xf32>
    %cst_39 = arith.constant 1.000000e+00 : f32
    %636 = vector.broadcast %cst_39 : f32 to vector<1x16x16xf32>
    %637 = arith.addf %636, %635 : vector<1x16x16xf32>
    %638 = arith.divf %636, %637 : vector<1x16x16xf32>
    %639 = vector.shape_cast %638 : vector<1x16x16xf32> to vector<1x1x16x16xf32>
    %640 = vector.broadcast %639 : vector<1x1x16x16xf32> to vector<1x16x16x16xf32>
    %641 = arith.mulf %0, %640 : vector<1x16x16x16xf32>
    %c0_40 = arith.constant 0 : index
    %c0_41 = arith.constant 0 : index
    %c0_42 = arith.constant 0 : index
    %c0_43 = arith.constant 0 : index
    %642 = vector.load %arg4[%c0_40, %c0_41, %c0_42, %c0_43] : memref<1x16x16x16xf32, #tpu.memory_space<vmem>>, vector<1x16x16x16xf32>
    tpu.vector_store %arg4[%c0_40, %c0_41, %c0_42, %c0_43], %641 {strides = array<i32>} : memref<1x16x16x16xf32, #tpu.memory_space<vmem>>, vector<1x16x16x16xf32>,
    return
  }
  func.func @transform_0(%arg0: i32) -> (i32, i32, i32, i32) {
    %c0_i32 = arith.constant 0 : i32
    %c0_i32_0 = arith.constant 0 : i32
    %c0_i32_1 = arith.constant 0 : i32
    %c0_i32_2 = arith.constant 0 : i32
    return %arg0, %c0_i32, %c0_i32_0, %c0_i32_1 : i32, i32, i32, i32
  }
  func.func @transform_1(%arg0: i32) -> i32 {
    %c0_i32 = arith.constant 0 : i32
    %c0_i32_0 = arith.constant 0 : i32
    return %c0_i32 : i32
  }
  func.func @transform_2(%arg0: i32) -> i32 {
    %c0_i32 = arith.constant 0 : i32
    %c0_i32_0 = arith.constant 0 : i32
    return %c0_i32 : i32
  }
  func.func @transform_3(%arg0: i32) -> (i32, i32, i32, i32) {
    %c0_i32 = arith.constant 0 : i32
    %c0_i32_0 = arith.constant 0 : i32
    %c0_i32_1 = arith.constant 0 : i32
    %c0_i32_2 = arith.constant 0 : i32
    return %arg0, %c0_i32, %c0_i32_0, %c0_i32_1 : i32, i32, i32, i32
  }
}

</mosaic_0001>

<llo_original>
// kernel: tpu_custom_call.1
$region0: #{tpu_custom_call.1}
  #allocation0 [shape = 'u32[]', space=smem, size = 0x4, offset = 0x4, fixed_abs, tag = 'smem constant byte address 0x4 - core index']
  #allocation1 [shape = 'u32[144,128]{1,0:T(1,128)}', space=vmem, size = 0x12000, scoped, tag = 'internal scratch']
  %s0 = inlined_call_operand.hbm [shape: f32[2,16,16,16], index: 0, kind: input, shape index: {}]
  %s1 = inlined_call_operand.vmem [shape: f32[98], index: 1, kind: input, shape index: {}]
  %s2 = inlined_call_operand.vmem [shape: f32[25], index: 2, kind: input, shape index: {}]
  %s3 = inlined_call_operand.hbm [shape: f32[2,16,16,16], index: 3, kind: output, shape index: {}]
  %s4 = sld [smem:[#allocation0]]
  $region57: #{tpu_custom_call.1} parent=0
    _
  %s6 = ssub.s32 1, %s4
  %s7 = scalar_select 0, %s6, %s4
  $region1: #{tpu_custom_call.1} parent=0
    #allocation2 [shape = 'u8[262144]{0}', space=vmem, size = 0x40000, scoped, tag = 'input window, operand 0']
    #allocation3 [shape = 's32[2]{0}', space=sflag, size = 0x8, scoped, tag = 'scoped memory for tpu_custom_call.1']
    #allocation4 [shape = 's32[2]{0}', space=sflag, size = 0x8, scoped, tag = 'scoped memory for tpu_custom_call.1']
    #allocation5 [shape = 's32[2]{0}', space=sflag, size = 0x8, scoped, tag = 'scoped memory for tpu_custom_call.1']
    #allocation6 [shape = 'u8[512]{0}', space=smem, size = 0x200, scoped, tag = 'input window, operand 1, single buffered']
    #allocation7 [shape = 'u8[512]{0}', space=smem, size = 0x200, scoped, tag = 'input window, operand 2, single buffered']
    #allocation8 [shape = 's32[1]{0}', space=sflag, size = 0x4, scoped, tag = 'scoped memory for tpu_custom_call.1']
    #allocation9 [shape = 'u8[262144]{0}', space=vmem, size = 0x40000, scoped, tag = 'output window, operand 0']
    %8 = vsyncpa [#allocation3], 0
    %s9 = scalar_lea.sflag [#allocation3], 1
    %10 = vsyncpa %s9, 0
    %11 = vsyncpa [#allocation5], 0
    %12 = vsyncpa [#allocation8], 0
    %13 = vsyncpa [#allocation4], 0
    %s14 = scalar_lea.sflag [#allocation4], 1
    %15 = vsyncpa %s14, 0
    loop: start=0, step=1, limit=4
    $region2: #{tpu_custom_call.1} parent=1 // loop_pre_header
      _
    $region3: #{tpu_custom_call.1} parent=1 // loop_header
      %s17 = sphi 0, %s21
      %p18 = scmp.ge.s32.totalorder %s17, 4
      %s27 = sphi 0, %s29
      %s30 = sphi 0, %s27
      %s31 = sphi 0, %s30
      %s47 = sphi 0, %s31
      %s51 = sphi 0, %s51
      %s53 = sphi 0, %s51
      %s54 = sphi 0, %s53
      %s68 = sphi 0, %s54
      %s72 = sphi 0, %s72
      %s74 = sphi 0, %s72
      %s75 = sphi 0, %s74
      %s89 = sphi 0, %s75
      %s95 = sphi 0, %s97
      %s98 = sphi 0, %s95
      %s99 = sphi 0, %s98
      %s115 = sphi 0, %s99
    $region4: #{tpu_custom_call.1} parent=1 // loop_header_branch
      %20 = sbr.rel (%p18) target = $region8
    $region5: #{tpu_custom_call.1} parent=1 // loop_body
      %s22 = ssub.s32 %s17, 1
      %s23 = ssub.s32 %s17, 2
      %s24 = sadd.s32 %s17, 1
      %s25 = ssub.s32 %s17, %s24
      %p26 = scmp.eq.s32.totalorder %s25, 0
      %s28 = sadd.s32 %s27, 1
      %s29 = scalar_select %p26, %s27, %s28
      %p32 = pneg %p26
      %p33 = scmp.eq.s32.totalorder %s17, 1
      %p34 = por %p32, %p33
      %p35 = scmp.ne.s32.totalorder %s27, %s30
      %p36 = scmp.eq.s32.totalorder %s17, 0
      %p37 = por %p35, %p36
      %p38 = scmp.ne.s32.totalorder %s27, %s30
      %p39 = scmp.eq.s32.totalorder %s22, 1
      %p40 = por %p38, %p39
      %p41 = scmp.ne.s32.totalorder %s30, %s31
      %p42 = scmp.eq.s32.totalorder %s22, 0
      %p43 = por %p41, %p42
      %p44 = scmp.ne.s32.totalorder %s30, %s31
      %p45 = scmp.eq.s32.totalorder %s23, 1
      %p46 = por %p44, %p45
      %p48 = scmp.ne.s32.totalorder %s31, %s47
      %p49 = scmp.eq.s32.totalorder %s23, 0
      %p50 = por %p48, %p49
      %s52 = sadd.s32 %s51, 1
      %p55 = scmp.eq.s32.totalorder %s17, 1
      %p56 = scmp.ne.s32.totalorder %s51, %s53
      %p57 = scmp.eq.s32.totalorder %s17, 0
      %p58 = por %p56, %p57
      %p59 = scmp.ne.s32.totalorder %s51, %s53
      %p60 = scmp.eq.s32.totalorder %s22, 1
      %p61 = por %p59, %p60
      %p62 = scmp.ne.s32.totalorder %s53, %s54
      %p63 = scmp.eq.s32.totalorder %s22, 0
      %p64 = por %p62, %p63
      %p65 = scmp.ne.s32.totalorder %s53, %s54
      %p66 = scmp.eq.s32.totalorder %s23, 1
      %p67 = por %p65, %p66
      %p69 = scmp.ne.s32.totalorder %s54, %s68
      %p70 = scmp.eq.s32.totalorder %s23, 0
      %p71 = por %p69, %p70
      %s73 = sadd.s32 %s72, 1
      %p76 = scmp.eq.s32.totalorder %s17, 1
      %p77 = scmp.ne.s32.totalorder %s72, %s74
      %p78 = scmp.eq.s32.totalorder %s17, 0
      %p79 = por %p77, %p78
      %p80 = scmp.ne.s32.totalorder %s72, %s74
      %p81 = scmp.eq.s32.totalorder %s22, 1
      %p82 = por %p80, %p81
      %p83 = scmp.ne.s32.totalorder %s74, %s75
      %p84 = scmp.eq.s32.totalorder %s22, 0
      %p85 = por %p83, %p84
      %p86 = scmp.ne.s32.totalorder %s74, %s75
      %p87 = scmp.eq.s32.totalorder %s23, 1
      %p88 = por %p86, %p87
      %p90 = scmp.ne.s32.totalorder %s75, %s89
      %p91 = scmp.eq.s32.totalorder %s23, 0
      %p92 = por %p90, %p91
      %s93 = ssub.s32 %s17, %s24
      %p94 = scmp.eq.s32.totalorder %s93, 0
      %s96 = sadd.s32 %s95, 1
      %s97 = scalar_select %p94, %s95, %s96
      %p100 = pneg %p94
      %p101 = scmp.eq.s32.totalorder %s17, 1
      %p102 = por %p100, %p101
      %p103 = scmp.ne.s32.totalorder %s95, %s98
      %p104 = scmp.eq.s32.totalorder %s17, 0
      %p105 = por %p103, %p104
      %p106 = scmp.ne.s32.totalorder %s95, %s98
      %p107 = scmp.eq.s32.totalorder %s22, 1
      %p108 = por %p106, %p107
      %p109 = scmp.ne.s32.totalorder %s98, %s99
      %p110 = scmp.eq.s32.totalorder %s22, 0
      %p111 = por %p109, %p110
      %p112 = scmp.ne.s32.totalorder %s98, %s99
      %p113 = scmp.eq.s32.totalorder %s23, 1
      %p114 = por %p112, %p113
      %p116 = scmp.ne.s32.totalorder %s99, %s115
      %p117 = scmp.eq.s32.totalorder %s23, 0
      %p118 = por %p116, %p117
      %p119 = scmp.le.s32.totalorder 1, %s17
      %p120 = scmp.lt.s32.totalorder %s17, 3
      %p121 = pnand %p119, %p120
      %p122 = pneg %p121
      // Predicated region
      $region9: #{tpu_custom_call.1} parent=5 // pred_check
        _
      $region10: #{tpu_custom_call.1} parent=5 // pred_check_branch
        %124 = sbr.rel (%p121) target = $region12
      $region11: #{tpu_custom_call.1} parent=5 // pred_region
        %s125 = ssub.s32 %s17, 1
        // Predicated region
        $region13: #{tpu_custom_call.1} parent=11 // pred_check
          %p126 = pneg %p64
        $region14: #{tpu_custom_call.1} parent=11 // pred_check_branch
          %128 = sbr.rel (%p126) target = $region16
        $region15: #{tpu_custom_call.1} parent=11 // pred_region
          %s130 = ssub.s32 16, 16
          %131 = vsyncadd [#allocation5], %s130
          %s133 = sshll.u32 %s1, 4
          %s134 = int_to_ptr.vmem [resolvable:$true] %s133
          %136 = dma.vmem_to_smem %s134, 16, [#allocation6], [#allocation5]
        $region16: #{tpu_custom_call.1} parent=11 // pred_fallthru
          _
        // Predicated region
        $region17: #{tpu_custom_call.1} parent=11 // pred_check
          %p137 = pneg %p85
        $region18: #{tpu_custom_call.1} parent=11 // pred_check_branch
          %139 = sbr.rel (%p137) target = $region20
        $region19: #{tpu_custom_call.1} parent=11 // pred_region
          %s141 = ssub.s32 16, 16
          %142 = vsyncadd [#allocation8], %s141
          %s144 = sshll.u32 %s2, 4
          %s145 = int_to_ptr.vmem [resolvable:$true] %s144
          %147 = dma.vmem_to_smem %s145, 16, [#allocation7], [#allocation8]
        $region20: #{tpu_custom_call.1} parent=11 // pred_fallthru
          _
      $region12: #{tpu_custom_call.1} parent=5 // pred_fallthru
        _
      %p148 = scmp.lt.s32.totalorder %s17, 2
      // Predicated region
      $region21: #{tpu_custom_call.1} parent=5 // pred_check
        %p149 = pneg %p148
      $region22: #{tpu_custom_call.1} parent=5 // pred_check_branch
        %151 = sbr.rel (%p149) target = $region24
      $region23: #{tpu_custom_call.1} parent=5 // pred_region
        // Predicated region
        $region25: #{tpu_custom_call.1} parent=23 // pred_check
          %p152 = pneg %p37
        $region26: #{tpu_custom_call.1} parent=23 // pred_check_branch
          %154 = sbr.rel (%p152) target = $region28
        $region27: #{tpu_custom_call.1} parent=23 // pred_region
          %s155 = sand.u32 %s27, 1
          %s156 = scalar_lea.sflag [#allocation3], %s155
          %s157 = sand.u32 %s27, 1
          %s158 = smul.addr %s157, 256
          %s159 = scalar_lea.vmem [#allocation2], %s158
          %s161 = ssub.s32 4096, 4096
          %162 = vsyncadd %s156, %s161
          %s163 = smul.addr %s17, 32
          %s164 = smul.addr %s163, 128
          %s165 = scalar_lea.hbm %s0, %s164
          %s166 = sshll.u32 %s159, 4
          %s167 = int_to_ptr.vmem [resolvable:$true] %s166
          %172 = dma.hbm_to_vmem [thread:$0]  %s165, 4096, %s167, %s156, 128, 128, 8
        $region28: #{tpu_custom_call.1} parent=23 // pred_fallthru
          _
      $region24: #{tpu_custom_call.1} parent=5 // pred_fallthru
        _
      %p173 = scmp.le.s32.totalorder 1, %s17
      %p174 = scmp.lt.s32.totalorder %s17, 3
      %p175 = pnand %p173, %p174
      %p176 = pneg %p175
      // Predicated region
      $region29: #{tpu_custom_call.1} parent=5 // pred_check
        _
      $region30: #{tpu_custom_call.1} parent=5 // pred_check_branch
        %178 = sbr.rel (%p175) target = $region32
      $region31: #{tpu_custom_call.1} parent=5 // pred_region
        %s179 = ssub.s32 %s17, 1
        %s180 = sand.u32 %s30, 1
        %s181 = scalar_lea.sflag [#allocation3], %s180
        %s182 = sand.u32 %s30, 1
        %s183 = smul.addr %s182, 256
        %s184 = scalar_lea.vmem [#allocation2], %s183
        // Predicated region
        $region33: #{tpu_custom_call.1} parent=31 // pred_check
          %p185 = pneg %p43
        $region34: #{tpu_custom_call.1} parent=31 // pred_check_branch
          %187 = sbr.rel (%p185) target = $region36
        $region35: #{tpu_custom_call.1} parent=31 // pred_region
          %188 = dma.done %s181, 4096
        $region36: #{tpu_custom_call.1} parent=31 // pred_fallthru
          _
        // Predicated region
        $region37: #{tpu_custom_call.1} parent=31 // pred_check
          %p189 = pneg %p64
        $region38: #{tpu_custom_call.1} parent=31 // pred_check_branch
          %191 = sbr.rel (%p189) target = $region40
        $region39: #{tpu_custom_call.1} parent=31 // pred_region
          %192 = dma.done [#allocation5], 16
        $region40: #{tpu_custom_call.1} parent=31 // pred_fallthru
          _
        // Predicated region
        $region41: #{tpu_custom_call.1} parent=31 // pred_check
          %p193 = pneg %p85
        $region42: #{tpu_custom_call.1} parent=31 // pred_check_branch
          %195 = sbr.rel (%p193) target = $region44
        $region43: #{tpu_custom_call.1} parent=31 // pred_region
          %196 = dma.done [#allocation8], 16
        $region44: #{tpu_custom_call.1} parent=31 // pred_fallthru
          _
        %197 = sfence
        %s198 = sand.u32 %s30, 1
        %s199 = scalar_lea.sflag [#allocation3], %s198
        %s200 = sand.u32 %s30, 1
        %s201 = smul.addr %s200, 256
        %s202 = scalar_lea.vmem [#allocation2], %s201
        %p203 = pneg %p43
        %p204 = pneg %p40
        %p205 = pneg %p64
        %p206 = pneg %p61
        %p207 = pneg %p85
        %p208 = pneg %p82
        %p209 = pneg %p111
        %p210 = pneg %p108
        %s211 = sand.u32 %s98, 1
        %s212 = scalar_lea.sflag [#allocation4], %s211
        %s213 = sand.u32 %s98, 1
        %s214 = smul.addr %s213, 256
        %s215 = scalar_lea.vmem [#allocation9], %s214
        %v216 = vld [vmem:[%s184] sm:$0xff]
        %v217 = vld [vmem:[%s184 + $0x8] sm:$0xff]
        %v218 = vld [vmem:[%s184 + $0x10] sm:$0xff]
        %v219 = vld [vmem:[%s184 + $0x18] sm:$0xff]
        %v220 = vld [vmem:[%s184 + $0x20] sm:$0xff]
        %v221 = vld [vmem:[%s184 + $0x28] sm:$0xff]
        %v222 = vld [vmem:[%s184 + $0x30] sm:$0xff]
        %v223 = vld [vmem:[%s184 + $0x38] sm:$0xff]
        %v224 = vld [vmem:[%s184 + $0x40] sm:$0xff]
        %v225 = vld [vmem:[%s184 + $0x48] sm:$0xff]
        %v226 = vld [vmem:[%s184 + $0x50] sm:$0xff]
        %v227 = vld [vmem:[%s184 + $0x58] sm:$0xff]
        %v228 = vld [vmem:[%s184 + $0x60] sm:$0xff]
        %v229 = vld [vmem:[%s184 + $0x68] sm:$0xff]
        %v230 = vld [vmem:[%s184 + $0x70] sm:$0xff]
        %v231 = vld [vmem:[%s184 + $0x78] sm:$0xff]
        %v232 = vld [vmem:[%s184 + $0x80] sm:$0xff]
        %v233 = vld [vmem:[%s184 + $0x88] sm:$0xff]
        %v234 = vld [vmem:[%s184 + $0x90] sm:$0xff]
        %v235 = vld [vmem:[%s184 + $0x98] sm:$0xff]
        %v236 = vld [vmem:[%s184 + $0xa0] sm:$0xff]
        %v237 = vld [vmem:[%s184 + $0xa8] sm:$0xff]
        %v238 = vld [vmem:[%s184 + $0xb0] sm:$0xff]
        %v239 = vld [vmem:[%s184 + $0xb8] sm:$0xff]
        %v240 = vld [vmem:[%s184 + $0xc0] sm:$0xff]
        %v241 = vld [vmem:[%s184 + $0xc8] sm:$0xff]
        %v242 = vld [vmem:[%s184 + $0xd0] sm:$0xff]
        %v243 = vld [vmem:[%s184 + $0xd8] sm:$0xff]
        %v244 = vld [vmem:[%s184 + $0xe0] sm:$0xff]
        %v245 = vld [vmem:[%s184 + $0xe8] sm:$0xff]
        %v246 = vld [vmem:[%s184 + $0xf0] sm:$0xff]
        %v247 = vld [vmem:[%s184 + $0xf8] sm:$0xff]
        %vm248 = vcmask 130048
        %v249 = vsel %vm248, %v216, 0.0
        %v250 = vsel %vm248, %v218, 0.0
        %v251 = vadd.f32 %v249, %v250
        %v252 = vsel %vm248, %v220, 0.0
        %v253 = vadd.f32 %v251, %v252
        %v254 = vsel %vm248, %v222, 0.0
        %v255 = vadd.f32 %v253, %v254
        %v256 = vsel %vm248, %v224, 0.0
        %v257 = vadd.f32 %v255, %v256
        %v258 = vsel %vm248, %v226, 0.0
        %v259 = vadd.f32 %v257, %v258
        %v260 = vsel %vm248, %v228, 0.0
        %v261 = vadd.f32 %v259, %v260
        %v262 = vsel %vm248, %v230, 0.0
        %v263 = vadd.f32 %v261, %v262
        %v264 = vsel %vm248, %v232, 0.0
        %v265 = vadd.f32 %v263, %v264
        %v266 = vsel %vm248, %v234, 0.0
        %v267 = vadd.f32 %v265, %v266
        %v268 = vsel %vm248, %v236, 0.0
        %v269 = vadd.f32 %v267, %v268
        %v270 = vsel %vm248, %v238, 0.0
        %v271 = vadd.f32 %v269, %v270
        %v272 = vsel %vm248, %v240, 0.0
        %v273 = vadd.f32 %v271, %v272
        %v274 = vsel %vm248, %v242, 0.0
        %v275 = vadd.f32 %v273, %v274
        %v276 = vsel %vm248, %v244, 0.0
        %v277 = vadd.f32 %v275, %v276
        %v278 = vsel %vm248, %v246, 0.0
        %v279 = vadd.f32 %v277, %v278
        %v280 = vsel %vm248, %v217, 0.0
        %v281 = vsel %vm248, %v219, 0.0
        %v282 = vadd.f32 %v280, %v281
        %v283 = vsel %vm248, %v221, 0.0
        %v284 = vadd.f32 %v282, %v283
        %v285 = vsel %vm248, %v223, 0.0
        %v286 = vadd.f32 %v284, %v285
        %v287 = vsel %vm248, %v225, 0.0
        %v288 = vadd.f32 %v286, %v287
        %v289 = vsel %vm248, %v227, 0.0
        %v290 = vadd.f32 %v288, %v289
        %v291 = vsel %vm248, %v229, 0.0
        %v292 = vadd.f32 %v290, %v291
        %v293 = vsel %vm248, %v231, 0.0
        %v294 = vadd.f32 %v292, %v293
        %v295 = vsel %vm248, %v233, 0.0
        %v296 = vadd.f32 %v294, %v295
        %v297 = vsel %vm248, %v235, 0.0
        %v298 = vadd.f32 %v296, %v297
        %v299 = vsel %vm248, %v237, 0.0
        %v300 = vadd.f32 %v298, %v299
        %v301 = vsel %vm248, %v239, 0.0
        %v302 = vadd.f32 %v300, %v301
        %v303 = vsel %vm248, %v241, 0.0
        %v304 = vadd.f32 %v302, %v303
        %v305 = vsel %vm248, %v243, 0.0
        %v306 = vadd.f32 %v304, %v305
        %v307 = vsel %vm248, %v245, 0.0
        %v308 = vadd.f32 %v306, %v307
        %v309 = vsel %vm248, %v247, 0.0
        %v310 = vadd.f32 %v308, %v309
        %v311 = vmul.f32 %v279, 0.0625
        %v312 = vmul.f32 %v310, 0.0625
        %v313 = vsel %vm248, %v216, -inf
        %v314 = vsel %vm248, %v218, -inf
        %v315 = vsel %vm248, %v220, -inf
        %v316 = vmax.f32 %v313, %v315
        %v317 = vsel %vm248, %v222, -inf
        %v318 = vmax.f32 %v314, %v317
        %v319 = vsel %vm248, %v224, -inf
        %v320 = vmax.f32 %v316, %v319
        %v321 = vsel %vm248, %v226, -inf
        %v322 = vmax.f32 %v318, %v321
        %v323 = vsel %vm248, %v228, -inf
        %v324 = vmax.f32 %v320, %v323
        %v325 = vsel %vm248, %v230, -inf
        %v326 = vmax.f32 %v322, %v325
        %v327 = vsel %vm248, %v232, -inf
        %v328 = vmax.f32 %v324, %v327
        %v329 = vsel %vm248, %v234, -inf
        %v330 = vmax.f32 %v326, %v329
        %v331 = vsel %vm248, %v236, -inf
        %v332 = vmax.f32 %v328, %v331
        %v333 = vsel %vm248, %v238, -inf
        %v334 = vmax.f32 %v330, %v333
        %v335 = vsel %vm248, %v240, -inf
        %v336 = vmax.f32 %v332, %v335
        %v337 = vsel %vm248, %v242, -inf
        %v338 = vmax.f32 %v334, %v337
        %v339 = vsel %vm248, %v244, -inf
        %v340 = vmax.f32 %v336, %v339
        %v341 = vsel %vm248, %v246, -inf
        %v342 = vmax.f32 %v338, %v341
        %v343 = vmax.f32 %v340, %v342
        %v344 = vsel %vm248, %v217, -inf
        %v345 = vsel %vm248, %v219, -inf
        %v346 = vsel %vm248, %v221, -inf
        %v347 = vmax.f32 %v344, %v346
        %v348 = vsel %vm248, %v223, -inf
        %v349 = vmax.f32 %v345, %v348
        %v350 = vsel %vm248, %v225, -inf
        %v351 = vmax.f32 %v347, %v350
        %v352 = vsel %vm248, %v227, -inf
        %v353 = vmax.f32 %v349, %v352
        %v354 = vsel %vm248, %v229, -inf
        %v355 = vmax.f32 %v351, %v354
        %v356 = vsel %vm248, %v231, -inf
        %v357 = vmax.f32 %v353, %v356
        %v358 = vsel %vm248, %v233, -inf
        %v359 = vmax.f32 %v355, %v358
        %v360 = vsel %vm248, %v235, -inf
        %v361 = vmax.f32 %v357, %v360
        %v362 = vsel %vm248, %v237, -inf
        %v363 = vmax.f32 %v359, %v362
        %v364 = vsel %vm248, %v239, -inf
        %v365 = vmax.f32 %v361, %v364
        %v366 = vsel %vm248, %v241, -inf
        %v367 = vmax.f32 %v363, %v366
        %v368 = vsel %vm248, %v243, -inf
        %v369 = vmax.f32 %v365, %v368
        %v370 = vsel %vm248, %v245, -inf
        %v371 = vmax.f32 %v367, %v370
        %v372 = vsel %vm248, %v247, -inf
        %v373 = vmax.f32 %v369, %v372
        %v374 = vmax.f32 %v371, %v373
        %377 = vrot.lane.b32.xlu0 %v311, 3
        %v378 = vpop.permute.xlu0 %377
        %379 = vrot.lane.b32.xlu0 %v312, 3
        %v380 = vpop.permute.xlu0 %379
        %vm383 = vcmask 23552
        %v384 = vsel %vm383, 0.0, %v378
        %v385 = vsel %vm383, 0.0, %v380
        %vm386 = vcmask 154624
        %v387 = vsel %vm386, %v384, 0.0
        %v388 = vsel %vm386, %v385, 0.0
        %vm391 = vcmask 1042432
        %v392 = vrot.slane %v387, 5
        %v393 = vrot.slane %v388, 5
        %v394 = vsel %vm391, %v392, %v393
        %v398 = vsel %vm391, 0.0, %v392
        %v399 = vsel %vm391, %v393, 0.0
        %402 = vrot.lane.b32.xlu0 %v343, 3
        %v403 = vpop.permute.xlu0 %402
        %404 = vrot.lane.b32.xlu0 %v374, 3
        %v405 = vpop.permute.xlu0 %404
        %v408 = vsel %vm383, 0.0, %v403
        %v409 = vsel %vm383, 0.0, %v405
        %v410 = vsel %vm386, %v408, 0.0
        %v411 = vsel %vm386, %v409, 0.0
        %v414 = vrot.slane %v410, 5
        %v415 = vrot.slane %v411, 5
        %v416 = vsel %vm391, %v414, %v415
        %v420 = vsel %vm391, 0.0, %v414
        %v421 = vsel %vm391, %v415, 0.0
        %s422 = sld [smem:[#allocation6]]
        %s423 = sld [smem:[#allocation6 + $0x31]]
        %v424 = vstv %s422
        %v425 = vmul.f32 %v398, %v424
        %v426 = vmul.f32 %v394, %v424
        %v427 = vadd.f32 %v425, 0.0
        %v428 = vadd.f32 %v426, 0.0
        %v429 = vstv %s423
        %v430 = vmul.f32 %v420, %v429
        %v431 = vmul.f32 %v416, %v429
        %v432 = vadd.f32 %v427, %v430
        %v433 = vadd.f32 %v428, %v431
        %s434 = sld [smem:[#allocation6 + $0x1]]
        %s435 = sld [smem:[#allocation6 + $0x32]]
        %v436 = vstv %s434
        %v437 = vmul.f32 %v398, %v436
        %v438 = vmul.f32 %v394, %v436
        %441 = vrot.lane.b32.xlu0 %v437, 127
        %v442 = vpop.permute.xlu0 %441
        %443 = vrot.lane.b32.xlu0 %v438, 127
        %v444 = vpop.permute.xlu0 %443
        %v447 = vadd.f32 %v432, %v442
        %v448 = vadd.f32 %v433, %v444
        %v449 = vstv %s435
        %v450 = vmul.f32 %v420, %v449
        %v451 = vmul.f32 %v416, %v449
        %454 = vrot.lane.b32.xlu0 %v450, 127
        %v455 = vpop.permute.xlu0 %454
        %456 = vrot.lane.b32.xlu0 %v451, 127
        %v457 = vpop.permute.xlu0 %456
        %v460 = vadd.f32 %v447, %v455
        %v461 = vadd.f32 %v448, %v457
        %s462 = sld [smem:[#allocation6 + $0x2]]
        %s463 = sld [smem:[#allocation6 + $0x33]]
        %v464 = vstv %s462
        %v465 = vmul.f32 %v398, %v464
        %v466 = vmul.f32 %v394, %v464
        %469 = vrot.lane.b32.xlu0 %v465, 126
        %v470 = vpop.permute.xlu0 %469
        %471 = vrot.lane.b32.xlu0 %v466, 126
        %v472 = vpop.permute.xlu0 %471
        %v475 = vadd.f32 %v460, %v470
        %v476 = vadd.f32 %v461, %v472
        %v477 = vstv %s463
        %v478 = vmul.f32 %v420, %v477
        %v479 = vmul.f32 %v416, %v477
        %482 = vrot.lane.b32.xlu0 %v478, 126
        %v483 = vpop.permute.xlu0 %482
        %484 = vrot.lane.b32.xlu0 %v479, 126
        %v485 = vpop.permute.xlu0 %484
        %v488 = vadd.f32 %v475, %v483
        %v489 = vadd.f32 %v476, %v485
        %s490 = sld [smem:[#allocation6 + $0x3]]
        %s491 = sld [smem:[#allocation6 + $0x34]]
        %v492 = vstv %s490
        %v493 = vmul.f32 %v398, %v492
        %v494 = vmul.f32 %v394, %v492
        %497 = vrot.lane.b32.xlu0 %v493, 125
        %v498 = vpop.permute.xlu0 %497
        %499 = vrot.lane.b32.xlu0 %v494, 125
        %v500 = vpop.permute.xlu0 %499
        %v503 = vadd.f32 %v488, %v498
        %v504 = vadd.f32 %v489, %v500
        %v505 = vstv %s491
        %v506 = vmul.f32 %v420, %v505
        %v507 = vmul.f32 %v416, %v505
        %510 = vrot.lane.b32.xlu0 %v506, 125
        %v511 = vpop.permute.xlu0 %510
        %512 = vrot.lane.b32.xlu0 %v507, 125
        %v513 = vpop.permute.xlu0 %512
        %v516 = vadd.f32 %v503, %v511
        %v517 = vadd.f32 %v504, %v513
        %s518 = sld [smem:[#allocation6 + $0x4]]
        %s519 = sld [smem:[#allocation6 + $0x35]]
        %v520 = vstv %s518
        %v521 = vmul.f32 %v398, %v520
        %v522 = vmul.f32 %v394, %v520
        %525 = vrot.lane.b32.xlu0 %v521, 124
        %v526 = vpop.permute.xlu0 %525
        %527 = vrot.lane.b32.xlu0 %v522, 124
        %v528 = vpop.permute.xlu0 %527
        %v531 = vadd.f32 %v516, %v526
        %v532 = vadd.f32 %v517, %v528
        %v533 = vstv %s519
        %v534 = vmul.f32 %v420, %v533
        %v535 = vmul.f32 %v416, %v533
        %538 = vrot.lane.b32.xlu0 %v534, 124
        %v539 = vpop.permute.xlu0 %538
        %540 = vrot.lane.b32.xlu0 %v535, 124
        %v541 = vpop.permute.xlu0 %540
        %v544 = vadd.f32 %v531, %v539
        %v545 = vadd.f32 %v532, %v541
        %s546 = sld [smem:[#allocation6 + $0x5]]
        %s547 = sld [smem:[#allocation6 + $0x36]]
        %v548 = vstv %s546
        %v549 = vmul.f32 %v398, %v548
        %v550 = vmul.f32 %v394, %v548
        %553 = vrot.lane.b32.xlu0 %v549, 123
        %v554 = vpop.permute.xlu0 %553
        %555 = vrot.lane.b32.xlu0 %v550, 123
        %v556 = vpop.permute.xlu0 %555
        %v559 = vadd.f32 %v544, %v554
        %v560 = vadd.f32 %v545, %v556
        %v561 = vstv %s547
        %v562 = vmul.f32 %v420, %v561
        %v563 = vmul.f32 %v416, %v561
        %566 = vrot.lane.b32.xlu0 %v562, 123
        %v567 = vpop.permute.xlu0 %566
        %568 = vrot.lane.b32.xlu0 %v563, 123
        %v569 = vpop.permute.xlu0 %568
        %v572 = vadd.f32 %v559, %v567
        %v573 = vadd.f32 %v560, %v569
        %s574 = sld [smem:[#allocation6 + $0x6]]
        %s575 = sld [smem:[#allocation6 + $0x37]]
        %v576 = vstv %s574
        %v577 = vmul.f32 %v398, %v576
        %v578 = vmul.f32 %v394, %v576
        %581 = vrot.lane.b32.xlu0 %v577, 122
        %v582 = vpop.permute.xlu0 %581
        %583 = vrot.lane.b32.xlu0 %v578, 122
        %v584 = vpop.permute.xlu0 %583
        %v587 = vadd.f32 %v572, %v582
        %v588 = vadd.f32 %v573, %v584
        %v589 = vstv %s575
        %v590 = vmul.f32 %v420, %v589
        %v591 = vmul.f32 %v416, %v589
        %594 = vrot.lane.b32.xlu0 %v590, 122
        %v595 = vpop.permute.xlu0 %594
        %596 = vrot.lane.b32.xlu0 %v591, 122
        %v597 = vpop.permute.xlu0 %596
        %v600 = vadd.f32 %v587, %v595
        %v601 = vadd.f32 %v588, %v597
        %s602 = sld [smem:[#allocation6 + $0x7]]
        %s603 = sld [smem:[#allocation6 + $0x38]]
        %v604 = vstv %s602
        %v605 = vmul.f32 %v398, %v604
        %v606 = vmul.f32 %v394, %v604
        %v607 = vmul.f32 %v399, %v604
        %vm611 = vcmask 1046528
        %v612 = vrot.slane %v605, 1
        %v613 = vrot.slane %v606, 1
        %v614 = vsel %vm611, %v612, %v613
        %v615 = vrot.slane %v607, 1
        %v616 = vsel %vm611, %v613, %v615
        %v619 = vadd.f32 %v600, %v614
        %v620 = vadd.f32 %v601, %v616
        %v621 = vstv %s603
        %v622 = vmul.f32 %v420, %v621
        %v623 = vmul.f32 %v416, %v621
        %v624 = vmul.f32 %v421, %v621
        %v628 = vrot.slane %v622, 1
        %v629 = vrot.slane %v623, 1
        %v630 = vsel %vm611, %v628, %v629
        %v631 = vrot.slane %v624, 1
        %v632 = vsel %vm611, %v629, %v631
        %v635 = vadd.f32 %v619, %v630
        %v636 = vadd.f32 %v620, %v632
        %s637 = sld [smem:[#allocation6 + $0x8]]
        %s638 = sld [smem:[#allocation6 + $0x39]]
        %v639 = vstv %s637
        %v640 = vmul.f32 %v398, %v639
        %v641 = vmul.f32 %v394, %v639
        %v642 = vmul.f32 %v399, %v639
        %v646 = vrot.slane %v640, 1
        %v647 = vrot.slane %v641, 1
        %v648 = vsel %vm611, %v646, %v647
        %v649 = vrot.slane %v642, 1
        %v650 = vsel %vm611, %v647, %v649
        %651 = vrot.lane.b32.xlu0 %v648, 127
        %v652 = vpop.permute.xlu0 %651
        %653 = vrot.lane.b32.xlu0 %v650, 127
        %v654 = vpop.permute.xlu0 %653
        %v657 = vadd.f32 %v635, %v652
        %v658 = vadd.f32 %v636, %v654
        %v659 = vstv %s638
        %v660 = vmul.f32 %v420, %v659
        %v661 = vmul.f32 %v416, %v659
        %v662 = vmul.f32 %v421, %v659
        %v666 = vrot.slane %v660, 1
        %v667 = vrot.slane %v661, 1
        %v668 = vsel %vm611, %v666, %v667
        %v669 = vrot.slane %v662, 1
        %v670 = vsel %vm611, %v667, %v669
        %671 = vrot.lane.b32.xlu0 %v668, 127
        %v672 = vpop.permute.xlu0 %671
        %673 = vrot.lane.b32.xlu0 %v670, 127
        %v674 = vpop.permute.xlu0 %673
        %v677 = vadd.f32 %v657, %v672
        %v678 = vadd.f32 %v658, %v674
        %s679 = sld [smem:[#allocation6 + $0x9]]
        %s680 = sld [smem:[#allocation6 + $0x3a]]
        %v681 = vstv %s679
        %v682 = vmul.f32 %v398, %v681
        %v683 = vmul.f32 %v394, %v681
        %v684 = vmul.f32 %v399, %v681
        %v688 = vrot.slane %v682, 1
        %v689 = vrot.slane %v683, 1
        %v690 = vsel %vm611, %v688, %v689
        %v691 = vrot.slane %v684, 1
        %v692 = vsel %vm611, %v689, %v691
        %693 = vrot.lane.b32.xlu0 %v690, 126
        %v694 = vpop.permute.xlu0 %693
        %695 = vrot.lane.b32.xlu0 %v692, 126
        %v696 = vpop.permute.xlu0 %695
        %v699 = vadd.f32 %v677, %v694
        %v700 = vadd.f32 %v678, %v696
        %v701 = vstv %s680
        %v702 = vmul.f32 %v420, %v701
        %v703 = vmul.f32 %v416, %v701
        %v704 = vmul.f32 %v421, %v701
        %v708 = vrot.slane %v702, 1
        %v709 = vrot.slane %v703, 1
        %v710 = vsel %vm611, %v708, %v709
        %v711 = vrot.slane %v704, 1
        %v712 = vsel %vm611, %v709, %v711
        %713 = vrot.lane.b32.xlu0 %v710, 126
        %v714 = vpop.permute.xlu0 %713
        %715 = vrot.lane.b32.xlu0 %v712, 126
        %v716 = vpop.permute.xlu0 %715
        %v719 = vadd.f32 %v699, %v714
        %v720 = vadd.f32 %v700, %v716
        %s721 = sld [smem:[#allocation6 + $0xa]]
        %s722 = sld [smem:[#allocation6 + $0x3b]]
        %v723 = vstv %s721
        %v724 = vmul.f32 %v398, %v723
        %v725 = vmul.f32 %v394, %v723
        %v726 = vmul.f32 %v399, %v723
        %v730 = vrot.slane %v724, 1
        %v731 = vrot.slane %v725, 1
        %v732 = vsel %vm611, %v730, %v731
        %v733 = vrot.slane %v726, 1
        %v734 = vsel %vm611, %v731, %v733
        %735 = vrot.lane.b32.xlu0 %v732, 125
        %v736 = vpop.permute.xlu0 %735
        %737 = vrot.lane.b32.xlu0 %v734, 125
        %v738 = vpop.permute.xlu0 %737
        %v741 = vadd.f32 %v719, %v736
        %v742 = vadd.f32 %v720, %v738
        %v743 = vstv %s722
        %v744 = vmul.f32 %v420, %v743
        %v745 = vmul.f32 %v416, %v743
        %v746 = vmul.f32 %v421, %v743
        %v750 = vrot.slane %v744, 1
        %v751 = vrot.slane %v745, 1
        %v752 = vsel %vm611, %v750, %v751
        %v753 = vrot.slane %v746, 1
        %v754 = vsel %vm611, %v751, %v753
        %755 = vrot.lane.b32.xlu0 %v752, 125
        %v756 = vpop.permute.xlu0 %755
        %757 = vrot.lane.b32.xlu0 %v754, 125
        %v758 = vpop.permute.xlu0 %757
        %v761 = vadd.f32 %v741, %v756
        %v762 = vadd.f32 %v742, %v758
        %s763 = sld [smem:[#allocation6 + $0xb]]
        %s764 = sld [smem:[#allocation6 + $0x3c]]
        %v765 = vstv %s763
        %v766 = vmul.f32 %v398, %v765
        %v767 = vmul.f32 %v394, %v765
        %v768 = vmul.f32 %v399, %v765
        %v772 = vrot.slane %v766, 1
        %v773 = vrot.slane %v767, 1
        %v774 = vsel %vm611, %v772, %v773
        %v775 = vrot.slane %v768, 1
        %v776 = vsel %vm611, %v773, %v775
        %777 = vrot.lane.b32.xlu0 %v774, 124
        %v778 = vpop.permute.xlu0 %777
        %779 = vrot.lane.b32.xlu0 %v776, 124
        %v780 = vpop.permute.xlu0 %779
        %v783 = vadd.f32 %v761, %v778
        %v784 = vadd.f32 %v762, %v780
        %v785 = vstv %s764
        %v786 = vmul.f32 %v420, %v785
        %v787 = vmul.f32 %v416, %v785
        %v788 = vmul.f32 %v421, %v785
        %v792 = vrot.slane %v786, 1
        %v793 = vrot.slane %v787, 1
        %v794 = vsel %vm611, %v792, %v793
        %v795 = vrot.slane %v788, 1
        %v796 = vsel %vm611, %v793, %v795
        %797 = vrot.lane.b32.xlu0 %v794, 124
        %v798 = vpop.permute.xlu0 %797
        %799 = vrot.lane.b32.xlu0 %v796, 124
        %v800 = vpop.permute.xlu0 %799
        %v803 = vadd.f32 %v783, %v798
        %v804 = vadd.f32 %v784, %v800
        %s805 = sld [smem:[#allocation6 + $0xc]]
        %s806 = sld [smem:[#allocation6 + $0x3d]]
        %v807 = vstv %s805
        %v808 = vmul.f32 %v398, %v807
        %v809 = vmul.f32 %v394, %v807
        %v810 = vmul.f32 %v399, %v807
        %v814 = vrot.slane %v808, 1
        %v815 = vrot.slane %v809, 1
        %v816 = vsel %vm611, %v814, %v815
        %v817 = vrot.slane %v810, 1
        %v818 = vsel %vm611, %v815, %v817
        %819 = vrot.lane.b32.xlu0 %v816, 123
        %v820 = vpop.permute.xlu0 %819
        %821 = vrot.lane.b32.xlu0 %v818, 123
        %v822 = vpop.permute.xlu0 %821
        %v825 = vadd.f32 %v803, %v820
        %v826 = vadd.f32 %v804, %v822
        %v827 = vstv %s806
        %v828 = vmul.f32 %v420, %v827
        %v829 = vmul.f32 %v416, %v827
        %v830 = vmul.f32 %v421, %v827
        %v834 = vrot.slane %v828, 1
        %v835 = vrot.slane %v829, 1
        %v836 = vsel %vm611, %v834, %v835
        %v837 = vrot.slane %v830, 1
        %v838 = vsel %vm611, %v835, %v837
        %839 = vrot.lane.b32.xlu0 %v836, 123
        %v840 = vpop.permute.xlu0 %839
        %841 = vrot.lane.b32.xlu0 %v838, 123
        %v842 = vpop.permute.xlu0 %841
        %v845 = vadd.f32 %v825, %v840
        %v846 = vadd.f32 %v826, %v842
        %s847 = sld [smem:[#allocation6 + $0xd]]
        %s848 = sld [smem:[#allocation6 + $0x3e]]
        %v849 = vstv %s847
        %v850 = vmul.f32 %v398, %v849
        %v851 = vmul.f32 %v394, %v849
        %v852 = vmul.f32 %v399, %v849
        %v856 = vrot.slane %v850, 1
        %v857 = vrot.slane %v851, 1
        %v858 = vsel %vm611, %v856, %v857
        %v859 = vrot.slane %v852, 1
        %v860 = vsel %vm611, %v857, %v859
        %861 = vrot.lane.b32.xlu0 %v858, 122
        %v862 = vpop.permute.xlu0 %861
        %863 = vrot.lane.b32.xlu0 %v860, 122
        %v864 = vpop.permute.xlu0 %863
        %v867 = vadd.f32 %v845, %v862
        %v868 = vadd.f32 %v846, %v864
        %v869 = vstv %s848
        %v870 = vmul.f32 %v420, %v869
        %v871 = vmul.f32 %v416, %v869
        %v872 = vmul.f32 %v421, %v869
        %v876 = vrot.slane %v870, 1
        %v877 = vrot.slane %v871, 1
        %v878 = vsel %vm611, %v876, %v877
        %v879 = vrot.slane %v872, 1
        %v880 = vsel %vm611, %v877, %v879
        %881 = vrot.lane.b32.xlu0 %v878, 122
        %v882 = vpop.permute.xlu0 %881
        %883 = vrot.lane.b32.xlu0 %v880, 122
        %v884 = vpop.permute.xlu0 %883
        %v887 = vadd.f32 %v867, %v882
        %v888 = vadd.f32 %v868, %v884
        %s889 = sld [smem:[#allocation6 + $0xe]]
        %s890 = sld [smem:[#allocation6 + $0x3f]]
        %v891 = vstv %s889
        %v892 = vmul.f32 %v398, %v891
        %v893 = vmul.f32 %v394, %v891
        %v894 = vmul.f32 %v399, %v891
        %vm898 = vcmask 1045504
        %v899 = vrot.slane %v892, 2
        %v900 = vrot.slane %v893, 2
        %v901 = vsel %vm898, %v899, %v900
        %v902 = vrot.slane %v894, 2
        %v903 = vsel %vm898, %v900, %v902
        %v906 = vadd.f32 %v887, %v901
        %v907 = vadd.f32 %v888, %v903
        %v908 = vstv %s890
        %v909 = vmul.f32 %v420, %v908
        %v910 = vmul.f32 %v416, %v908
        %v911 = vmul.f32 %v421, %v908
        %v915 = vrot.slane %v909, 2
        %v916 = vrot.slane %v910, 2
        %v917 = vsel %vm898, %v915, %v916
        %v918 = vrot.slane %v911, 2
        %v919 = vsel %vm898, %v916, %v918
        %v922 = vadd.f32 %v906, %v917
        %v923 = vadd.f32 %v907, %v919
        %s924 = sld [smem:[#allocation6 + $0xf]]
        %s925 = sld [smem:[#allocation6 + $0x40]]
        %v926 = vstv %s924
        %v927 = vmul.f32 %v398, %v926
        %v928 = vmul.f32 %v394, %v926
        %v929 = vmul.f32 %v399, %v926
        %v933 = vrot.slane %v927, 2
        %v934 = vrot.slane %v928, 2
        %v935 = vsel %vm898, %v933, %v934
        %v936 = vrot.slane %v929, 2
        %v937 = vsel %vm898, %v934, %v936
        %938 = vrot.lane.b32.xlu0 %v935, 127
        %v939 = vpop.permute.xlu0 %938
        %940 = vrot.lane.b32.xlu0 %v937, 127
        %v941 = vpop.permute.xlu0 %940
        %v944 = vadd.f32 %v922, %v939
        %v945 = vadd.f32 %v923, %v941
        %v946 = vstv %s925
        %v947 = vmul.f32 %v420, %v946
        %v948 = vmul.f32 %v416, %v946
        %v949 = vmul.f32 %v421, %v946
        %v953 = vrot.slane %v947, 2
        %v954 = vrot.slane %v948, 2
        %v955 = vsel %vm898, %v953, %v954
        %v956 = vrot.slane %v949, 2
        %v957 = vsel %vm898, %v954, %v956
        %958 = vrot.lane.b32.xlu0 %v955, 127
        %v959 = vpop.permute.xlu0 %958
        %960 = vrot.lane.b32.xlu0 %v957, 127
        %v961 = vpop.permute.xlu0 %960
        %v964 = vadd.f32 %v944, %v959
        %v965 = vadd.f32 %v945, %v961
        %s966 = sld [smem:[#allocation6 + $0x10]]
        %s967 = sld [smem:[#allocation6 + $0x41]]
        %v968 = vstv %s966
        %v969 = vmul.f32 %v398, %v968
        %v970 = vmul.f32 %v394, %v968
        %v971 = vmul.f32 %v399, %v968
        %v975 = vrot.slane %v969, 2
        %v976 = vrot.slane %v970, 2
        %v977 = vsel %vm898, %v975, %v976
        %v978 = vrot.slane %v971, 2
        %v979 = vsel %vm898, %v976, %v978
        %980 = vrot.lane.b32.xlu0 %v977, 126
        %v981 = vpop.permute.xlu0 %980
        %982 = vrot.lane.b32.xlu0 %v979, 126
        %v983 = vpop.permute.xlu0 %982
        %v986 = vadd.f32 %v964, %v981
        %v987 = vadd.f32 %v965, %v983
        %v988 = vstv %s967
        %v989 = vmul.f32 %v420, %v988
        %v990 = vmul.f32 %v416, %v988
        %v991 = vmul.f32 %v421, %v988
        %v995 = vrot.slane %v989, 2
        %v996 = vrot.slane %v990, 2
        %v997 = vsel %vm898, %v995, %v996
        %v998 = vrot.slane %v991, 2
        %v999 = vsel %vm898, %v996, %v998
        %1000 = vrot.lane.b32.xlu0 %v997, 126
        %v1001 = vpop.permute.xlu0 %1000
        %1002 = vrot.lane.b32.xlu0 %v999, 126
        %v1003 = vpop.permute.xlu0 %1002
        %v1006 = vadd.f32 %v986, %v1001
        %v1007 = vadd.f32 %v987, %v1003
        %s1008 = sld [smem:[#allocation6 + $0x11]]
        %s1009 = sld [smem:[#allocation6 + $0x42]]
        %v1010 = vstv %s1008
        %v1011 = vmul.f32 %v398, %v1010
        %v1012 = vmul.f32 %v394, %v1010
        %v1013 = vmul.f32 %v399, %v1010
        %v1017 = vrot.slane %v1011, 2
        %v1018 = vrot.slane %v1012, 2
        %v1019 = vsel %vm898, %v1017, %v1018
        %v1020 = vrot.slane %v1013, 2
        %v1021 = vsel %vm898, %v1018, %v1020
        %1022 = vrot.lane.b32.xlu0 %v1019, 125
        %v1023 = vpop.permute.xlu0 %1022
        %1024 = vrot.lane.b32.xlu0 %v1021, 125
        %v1025 = vpop.permute.xlu0 %1024
        %v1028 = vadd.f32 %v1006, %v1023
        %v1029 = vadd.f32 %v1007, %v1025
        %v1030 = vstv %s1009
        %v1031 = vmul.f32 %v420, %v1030
        %v1032 = vmul.f32 %v416, %v1030
        %v1033 = vmul.f32 %v421, %v1030
        %v1037 = vrot.slane %v1031, 2
        %v1038 = vrot.slane %v1032, 2
        %v1039 = vsel %vm898, %v1037, %v1038
        %v1040 = vrot.slane %v1033, 2
        %v1041 = vsel %vm898, %v1038, %v1040
        %1042 = vrot.lane.b32.xlu0 %v1039, 125
        %v1043 = vpop.permute.xlu0 %1042
        %1044 = vrot.lane.b32.xlu0 %v1041, 125
        %v1045 = vpop.permute.xlu0 %1044
        %v1048 = vadd.f32 %v1028, %v1043
        %v1049 = vadd.f32 %v1029, %v1045
        %s1050 = sld [smem:[#allocation6 + $0x12]]
        %s1051 = sld [smem:[#allocation6 + $0x43]]
        %v1052 = vstv %s1050
        %v1053 = vmul.f32 %v398, %v1052
        %v1054 = vmul.f32 %v394, %v1052
        %v1055 = vmul.f32 %v399, %v1052
        %v1059 = vrot.slane %v1053, 2
        %v1060 = vrot.slane %v1054, 2
        %v1061 = vsel %vm898, %v1059, %v1060
        %v1062 = vrot.slane %v1055, 2
        %v1063 = vsel %vm898, %v1060, %v1062
        %1064 = vrot.lane.b32.xlu0 %v1061, 124
        %v1065 = vpop.permute.xlu0 %1064
        %1066 = vrot.lane.b32.xlu0 %v1063, 124
        %v1067 = vpop.permute.xlu0 %1066
        %v1070 = vadd.f32 %v1048, %v1065
        %v1071 = vadd.f32 %v1049, %v1067
        %v1072 = vstv %s1051
        %v1073 = vmul.f32 %v420, %v1072
        %v1074 = vmul.f32 %v416, %v1072
        %v1075 = vmul.f32 %v421, %v1072
        %v1079 = vrot.slane %v1073, 2
        %v1080 = vrot.slane %v1074, 2
        %v1081 = vsel %vm898, %v1079, %v1080
        %v1082 = vrot.slane %v1075, 2
        %v1083 = vsel %vm898, %v1080, %v1082
        %1084 = vrot.lane.b32.xlu0 %v1081, 124
        %v1085 = vpop.permute.xlu0 %1084
        %1086 = vrot.lane.b32.xlu0 %v1083, 124
        %v1087 = vpop.permute.xlu0 %1086
        %v1090 = vadd.f32 %v1070, %v1085
        %v1091 = vadd.f32 %v1071, %v1087
        %s1092 = sld [smem:[#allocation6 + $0x13]]
        %s1093 = sld [smem:[#allocation6 + $0x44]]
        %v1094 = vstv %s1092
        %v1095 = vmul.f32 %v398, %v1094
        %v1096 = vmul.f32 %v394, %v1094
        %v1097 = vmul.f32 %v399, %v1094
        %v1101 = vrot.slane %v1095, 2
        %v1102 = vrot.slane %v1096, 2
        %v1103 = vsel %vm898, %v1101, %v1102
        %v1104 = vrot.slane %v1097, 2
        %v1105 = vsel %vm898, %v1102, %v1104
        %1106 = vrot.lane.b32.xlu0 %v1103, 123
        %v1107 = vpop.permute.xlu0 %1106
        %1108 = vrot.lane.b32.xlu0 %v1105, 123
        %v1109 = vpop.permute.xlu0 %1108
        %v1112 = vadd.f32 %v1090, %v1107
        %v1113 = vadd.f32 %v1091, %v1109
        %v1114 = vstv %s1093
        %v1115 = vmul.f32 %v420, %v1114
        %v1116 = vmul.f32 %v416, %v1114
        %v1117 = vmul.f32 %v421, %v1114
        %v1121 = vrot.slane %v1115, 2
        %v1122 = vrot.slane %v1116, 2
        %v1123 = vsel %vm898, %v1121, %v1122
        %v1124 = vrot.slane %v1117, 2
        %v1125 = vsel %vm898, %v1122, %v1124
        %1126 = vrot.lane.b32.xlu0 %v1123, 123
        %v1127 = vpop.permute.xlu0 %1126
        %1128 = vrot.lane.b32.xlu0 %v1125, 123
        %v1129 = vpop.permute.xlu0 %1128
        %v1132 = vadd.f32 %v1112, %v1127
        %v1133 = vadd.f32 %v1113, %v1129
        %s1134 = sld [smem:[#allocation6 + $0x14]]
        %s1135 = sld [smem:[#allocation6 + $0x45]]
        %v1136 = vstv %s1134
        %v1137 = vmul.f32 %v398, %v1136
        %v1138 = vmul.f32 %v394, %v1136
        %v1139 = vmul.f32 %v399, %v1136
        %v1143 = vrot.slane %v1137, 2
        %v1144 = vrot.slane %v1138, 2
        %v1145 = vsel %vm898, %v1143, %v1144
        %v1146 = vrot.slane %v1139, 2
        %v1147 = vsel %vm898, %v1144, %v1146
        %1148 = vrot.lane.b32.xlu0 %v1145, 122
        %v1149 = vpop.permute.xlu0 %1148
        %1150 = vrot.lane.b32.xlu0 %v1147, 122
        %v1151 = vpop.permute.xlu0 %1150
        %v1154 = vadd.f32 %v1132, %v1149
        %v1155 = vadd.f32 %v1133, %v1151
        %v1156 = vstv %s1135
        %v1157 = vmul.f32 %v420, %v1156
        %v1158 = vmul.f32 %v416, %v1156
        %v1159 = vmul.f32 %v421, %v1156
        %v1163 = vrot.slane %v1157, 2
        %v1164 = vrot.slane %v1158, 2
        %v1165 = vsel %vm898, %v1163, %v1164
        %v1166 = vrot.slane %v1159, 2
        %v1167 = vsel %vm898, %v1164, %v1166
        %1168 = vrot.lane.b32.xlu0 %v1165, 122
        %v1169 = vpop.permute.xlu0 %1168
        %1170 = vrot.lane.b32.xlu0 %v1167, 122
        %v1171 = vpop.permute.xlu0 %1170
        %v1174 = vadd.f32 %v1154, %v1169
        %v1175 = vadd.f32 %v1155, %v1171
        %s1176 = sld [smem:[#allocation6 + $0x15]]
        %s1177 = sld [smem:[#allocation6 + $0x46]]
        %v1178 = vstv %s1176
        %v1179 = vmul.f32 %v398, %v1178
        %v1180 = vmul.f32 %v394, %v1178
        %v1181 = vmul.f32 %v399, %v1178
        %vm1185 = vcmask 1044480
        %v1186 = vrot.slane %v1179, 3
        %v1187 = vrot.slane %v1180, 3
        %v1188 = vsel %vm1185, %v1186, %v1187
        %v1189 = vrot.slane %v1181, 3
        %v1190 = vsel %vm1185, %v1187, %v1189
        %v1193 = vadd.f32 %v1174, %v1188
        %v1194 = vadd.f32 %v1175, %v1190
        %v1195 = vstv %s1177
        %v1196 = vmul.f32 %v420, %v1195
        %v1197 = vmul.f32 %v416, %v1195
        %v1198 = vmul.f32 %v421, %v1195
        %v1202 = vrot.slane %v1196, 3
        %v1203 = vrot.slane %v1197, 3
        %v1204 = vsel %vm1185, %v1202, %v1203
        %v1205 = vrot.slane %v1198, 3
        %v1206 = vsel %vm1185, %v1203, %v1205
        %v1209 = vadd.f32 %v1193, %v1204
        %v1210 = vadd.f32 %v1194, %v1206
        %s1211 = sld [smem:[#allocation6 + $0x16]]
        %s1212 = sld [smem:[#allocation6 + $0x47]]
        %v1213 = vstv %s1211
        %v1214 = vmul.f32 %v398, %v1213
        %v1215 = vmul.f32 %v394, %v1213
        %v1216 = vmul.f32 %v399, %v1213
        %v1220 = vrot.slane %v1214, 3
        %v1221 = vrot.slane %v1215, 3
        %v1222 = vsel %vm1185, %v1220, %v1221
        %v1223 = vrot.slane %v1216, 3
        %v1224 = vsel %vm1185, %v1221, %v1223
        %1225 = vrot.lane.b32.xlu0 %v1222, 127
        %v1226 = vpop.permute.xlu0 %1225
        %1227 = vrot.lane.b32.xlu0 %v1224, 127
        %v1228 = vpop.permute.xlu0 %1227
        %v1231 = vadd.f32 %v1209, %v1226
        %v1232 = vadd.f32 %v1210, %v1228
        %v1233 = vstv %s1212
        %v1234 = vmul.f32 %v420, %v1233
        %v1235 = vmul.f32 %v416, %v1233
        %v1236 = vmul.f32 %v421, %v1233
        %v1240 = vrot.slane %v1234, 3
        %v1241 = vrot.slane %v1235, 3
        %v1242 = vsel %vm1185, %v1240, %v1241
        %v1243 = vrot.slane %v1236, 3
        %v1244 = vsel %vm1185, %v1241, %v1243
        %1245 = vrot.lane.b32.xlu0 %v1242, 127
        %v1246 = vpop.permute.xlu0 %1245
        %1247 = vrot.lane.b32.xlu0 %v1244, 127
        %v1248 = vpop.permute.xlu0 %1247
        %v1251 = vadd.f32 %v1231, %v1246
        %v1252 = vadd.f32 %v1232, %v1248
        %s1253 = sld [smem:[#allocation6 + $0x17]]
        %s1254 = sld [smem:[#allocation6 + $0x48]]
        %v1255 = vstv %s1253
        %v1256 = vmul.f32 %v398, %v1255
        %v1257 = vmul.f32 %v394, %v1255
        %v1258 = vmul.f32 %v399, %v1255
        %v1262 = vrot.slane %v1256, 3
        %v1263 = vrot.slane %v1257, 3
        %v1264 = vsel %vm1185, %v1262, %v1263
        %v1265 = vrot.slane %v1258, 3
        %v1266 = vsel %vm1185, %v1263, %v1265
        %1267 = vrot.lane.b32.xlu0 %v1264, 126
        %v1268 = vpop.permute.xlu0 %1267
        %1269 = vrot.lane.b32.xlu0 %v1266, 126
        %v1270 = vpop.permute.xlu0 %1269
        %v1273 = vadd.f32 %v1251, %v1268
        %v1274 = vadd.f32 %v1252, %v1270
        %v1275 = vstv %s1254
        %v1276 = vmul.f32 %v420, %v1275
        %v1277 = vmul.f32 %v416, %v1275
        %v1278 = vmul.f32 %v421, %v1275
        %v1282 = vrot.slane %v1276, 3
        %v1283 = vrot.slane %v1277, 3
        %v1284 = vsel %vm1185, %v1282, %v1283
        %v1285 = vrot.slane %v1278, 3
        %v1286 = vsel %vm1185, %v1283, %v1285
        %1287 = vrot.lane.b32.xlu0 %v1284, 126
        %v1288 = vpop.permute.xlu0 %1287
        %1289 = vrot.lane.b32.xlu0 %v1286, 126
        %v1290 = vpop.permute.xlu0 %1289
        %v1293 = vadd.f32 %v1273, %v1288
        %v1294 = vadd.f32 %v1274, %v1290
        %s1295 = sld [smem:[#allocation6 + $0x18]]
        %s1296 = sld [smem:[#allocation6 + $0x49]]
        %v1297 = vstv %s1295
        %v1298 = vmul.f32 %v398, %v1297
        %v1299 = vmul.f32 %v394, %v1297
        %v1300 = vmul.f32 %v399, %v1297
        %v1304 = vrot.slane %v1298, 3
        %v1305 = vrot.slane %v1299, 3
        %v1306 = vsel %vm1185, %v1304, %v1305
        %v1307 = vrot.slane %v1300, 3
        %v1308 = vsel %vm1185, %v1305, %v1307
        %1309 = vrot.lane.b32.xlu0 %v1306, 125
        %v1310 = vpop.permute.xlu0 %1309
        %1311 = vrot.lane.b32.xlu0 %v1308, 125
        %v1312 = vpop.permute.xlu0 %1311
        %v1315 = vadd.f32 %v1293, %v1310
        %v1316 = vadd.f32 %v1294, %v1312
        %v1317 = vstv %s1296
        %v1318 = vmul.f32 %v420, %v1317
        %v1319 = vmul.f32 %v416, %v1317
        %v1320 = vmul.f32 %v421, %v1317
        %v1324 = vrot.slane %v1318, 3
        %v1325 = vrot.slane %v1319, 3
        %v1326 = vsel %vm1185, %v1324, %v1325
        %v1327 = vrot.slane %v1320, 3
        %v1328 = vsel %vm1185, %v1325, %v1327
        %1329 = vrot.lane.b32.xlu0 %v1326, 125
        %v1330 = vpop.permute.xlu0 %1329
        %1331 = vrot.lane.b32.xlu0 %v1328, 125
        %v1332 = vpop.permute.xlu0 %1331
        %v1335 = vadd.f32 %v1315, %v1330
        %v1336 = vadd.f32 %v1316, %v1332
        %s1337 = sld [smem:[#allocation6 + $0x19]]
        %s1338 = sld [smem:[#allocation6 + $0x4a]]
        %v1339 = vstv %s1337
        %v1340 = vmul.f32 %v398, %v1339
        %v1341 = vmul.f32 %v394, %v1339
        %v1342 = vmul.f32 %v399, %v1339
        %v1346 = vrot.slane %v1340, 3
        %v1347 = vrot.slane %v1341, 3
        %v1348 = vsel %vm1185, %v1346, %v1347
        %v1349 = vrot.slane %v1342, 3
        %v1350 = vsel %vm1185, %v1347, %v1349
        %1351 = vrot.lane.b32.xlu0 %v1348, 124
        %v1352 = vpop.permute.xlu0 %1351
        %1353 = vrot.lane.b32.xlu0 %v1350, 124
        %v1354 = vpop.permute.xlu0 %1353
        %v1357 = vadd.f32 %v1335, %v1352
        %v1358 = vadd.f32 %v1336, %v1354
        %v1359 = vstv %s1338
        %v1360 = vmul.f32 %v420, %v1359
        %v1361 = vmul.f32 %v416, %v1359
        %v1362 = vmul.f32 %v421, %v1359
        %v1366 = vrot.slane %v1360, 3
        %v1367 = vrot.slane %v1361, 3
        %v1368 = vsel %vm1185, %v1366, %v1367
        %v1369 = vrot.slane %v1362, 3
        %v1370 = vsel %vm1185, %v1367, %v1369
        %1371 = vrot.lane.b32.xlu0 %v1368, 124
        %v1372 = vpop.permute.xlu0 %1371
        %1373 = vrot.lane.b32.xlu0 %v1370, 124
        %v1374 = vpop.permute.xlu0 %1373
        %v1377 = vadd.f32 %v1357, %v1372
        %v1378 = vadd.f32 %v1358, %v1374
        %s1379 = sld [smem:[#allocation6 + $0x1a]]
        %s1380 = sld [smem:[#allocation6 + $0x4b]]
        %v1381 = vstv %s1379
        %v1382 = vmul.f32 %v398, %v1381
        %v1383 = vmul.f32 %v394, %v1381
        %v1384 = vmul.f32 %v399, %v1381
        %v1388 = vrot.slane %v1382, 3
        %v1389 = vrot.slane %v1383, 3
        %v1390 = vsel %vm1185, %v1388, %v1389
        %v1391 = vrot.slane %v1384, 3
        %v1392 = vsel %vm1185, %v1389, %v1391
        %1393 = vrot.lane.b32.xlu0 %v1390, 123
        %v1394 = vpop.permute.xlu0 %1393
        %1395 = vrot.lane.b32.xlu0 %v1392, 123
        %v1396 = vpop.permute.xlu0 %1395
        %v1399 = vadd.f32 %v1377, %v1394
        %v1400 = vadd.f32 %v1378, %v1396
        %v1401 = vstv %s1380
        %v1402 = vmul.f32 %v420, %v1401
        %v1403 = vmul.f32 %v416, %v1401
        %v1404 = vmul.f32 %v421, %v1401
        %v1408 = vrot.slane %v1402, 3
        %v1409 = vrot.slane %v1403, 3
        %v1410 = vsel %vm1185, %v1408, %v1409
        %v1411 = vrot.slane %v1404, 3
        %v1412 = vsel %vm1185, %v1409, %v1411
        %1413 = vrot.lane.b32.xlu0 %v1410, 123
        %v1414 = vpop.permute.xlu0 %1413
        %1415 = vrot.lane.b32.xlu0 %v1412, 123
        %v1416 = vpop.permute.xlu0 %1415
        %v1419 = vadd.f32 %v1399, %v1414
        %v1420 = vadd.f32 %v1400, %v1416
        %s1421 = sld [smem:[#allocation6 + $0x1b]]
        %s1422 = sld [smem:[#allocation6 + $0x4c]]
        %v1423 = vstv %s1421
        %v1424 = vmul.f32 %v398, %v1423
        %v1425 = vmul.f32 %v394, %v1423
        %v1426 = vmul.f32 %v399, %v1423
        %v1430 = vrot.slane %v1424, 3
        %v1431 = vrot.slane %v1425, 3
        %v1432 = vsel %vm1185, %v1430, %v1431
        %v1433 = vrot.slane %v1426, 3
        %v1434 = vsel %vm1185, %v1431, %v1433
        %1435 = vrot.lane.b32.xlu0 %v1432, 122
        %v1436 = vpop.permute.xlu0 %1435
        %1437 = vrot.lane.b32.xlu0 %v1434, 122
        %v1438 = vpop.permute.xlu0 %1437
        %v1441 = vadd.f32 %v1419, %v1436
        %v1442 = vadd.f32 %v1420, %v1438
        %v1443 = vstv %s1422
        %v1444 = vmul.f32 %v420, %v1443
        %v1445 = vmul.f32 %v416, %v1443
        %v1446 = vmul.f32 %v421, %v1443
        %v1450 = vrot.slane %v1444, 3
        %v1451 = vrot.slane %v1445, 3
        %v1452 = vsel %vm1185, %v1450, %v1451
        %v1453 = vrot.slane %v1446, 3
        %v1454 = vsel %vm1185, %v1451, %v1453
        %1455 = vrot.lane.b32.xlu0 %v1452, 122
        %v1456 = vpop.permute.xlu0 %1455
        %1457 = vrot.lane.b32.xlu0 %v1454, 122
        %v1458 = vpop.permute.xlu0 %1457
        %v1461 = vadd.f32 %v1441, %v1456
        %v1462 = vadd.f32 %v1442, %v1458
        %s1463 = sld [smem:[#allocation6 + $0x1c]]
        %s1464 = sld [smem:[#allocation6 + $0x4d]]
        %v1465 = vstv %s1463
        %v1466 = vmul.f32 %v398, %v1465
        %v1467 = vmul.f32 %v394, %v1465
        %v1468 = vmul.f32 %v399, %v1465
        %vm1472 = vcmask 1043456
        %v1473 = vrot.slane %v1466, 4
        %v1474 = vrot.slane %v1467, 4
        %v1475 = vsel %vm1472, %v1473, %v1474
        %v1476 = vrot.slane %v1468, 4
        %v1477 = vsel %vm1472, %v1474, %v1476
        %v1480 = vadd.f32 %v1461, %v1475
        %v1481 = vadd.f32 %v1462, %v1477
        %v1482 = vstv %s1464
        %v1483 = vmul.f32 %v420, %v1482
        %v1484 = vmul.f32 %v416, %v1482
        %v1485 = vmul.f32 %v421, %v1482
        %v1489 = vrot.slane %v1483, 4
        %v1490 = vrot.slane %v1484, 4
        %v1491 = vsel %vm1472, %v1489, %v1490
        %v1492 = vrot.slane %v1485, 4
        %v1493 = vsel %vm1472, %v1490, %v1492
        %v1496 = vadd.f32 %v1480, %v1491
        %v1497 = vadd.f32 %v1481, %v1493
        %s1498 = sld [smem:[#allocation6 + $0x1d]]
        %s1499 = sld [smem:[#allocation6 + $0x4e]]
        %v1500 = vstv %s1498
        %v1501 = vmul.f32 %v398, %v1500
        %v1502 = vmul.f32 %v394, %v1500
        %v1503 = vmul.f32 %v399, %v1500
        %v1507 = vrot.slane %v1501, 4
        %v1508 = vrot.slane %v1502, 4
        %v1509 = vsel %vm1472, %v1507, %v1508
        %v1510 = vrot.slane %v1503, 4
        %v1511 = vsel %vm1472, %v1508, %v1510
        %1512 = vrot.lane.b32.xlu0 %v1509, 127
        %v1513 = vpop.permute.xlu0 %1512
        %1514 = vrot.lane.b32.xlu0 %v1511, 127
        %v1515 = vpop.permute.xlu0 %1514
        %v1518 = vadd.f32 %v1496, %v1513
        %v1519 = vadd.f32 %v1497, %v1515
        %v1520 = vstv %s1499
        %v1521 = vmul.f32 %v420, %v1520
        %v1522 = vmul.f32 %v416, %v1520
        %v1523 = vmul.f32 %v421, %v1520
        %v1527 = vrot.slane %v1521, 4
        %v1528 = vrot.slane %v1522, 4
        %v1529 = vsel %vm1472, %v1527, %v1528
        %v1530 = vrot.slane %v1523, 4
        %v1531 = vsel %vm1472, %v1528, %v1530
        %1532 = vrot.lane.b32.xlu0 %v1529, 127
        %v1533 = vpop.permute.xlu0 %1532
        %1534 = vrot.lane.b32.xlu0 %v1531, 127
        %v1535 = vpop.permute.xlu0 %1534
        %v1538 = vadd.f32 %v1518, %v1533
        %v1539 = vadd.f32 %v1519, %v1535
        %s1540 = sld [smem:[#allocation6 + $0x1e]]
        %s1541 = sld [smem:[#allocation6 + $0x4f]]
        %v1542 = vstv %s1540
        %v1543 = vmul.f32 %v398, %v1542
        %v1544 = vmul.f32 %v394, %v1542
        %v1545 = vmul.f32 %v399, %v1542
        %v1549 = vrot.slane %v1543, 4
        %v1550 = vrot.slane %v1544, 4
        %v1551 = vsel %vm1472, %v1549, %v1550
        %v1552 = vrot.slane %v1545, 4
        %v1553 = vsel %vm1472, %v1550, %v1552
        %1554 = vrot.lane.b32.xlu0 %v1551, 126
        %v1555 = vpop.permute.xlu0 %1554
        %1556 = vrot.lane.b32.xlu0 %v1553, 126
        %v1557 = vpop.permute.xlu0 %1556
        %v1560 = vadd.f32 %v1538, %v1555
        %v1561 = vadd.f32 %v1539, %v1557
        %v1562 = vstv %s1541
        %v1563 = vmul.f32 %v420, %v1562
        %v1564 = vmul.f32 %v416, %v1562
        %v1565 = vmul.f32 %v421, %v1562
        %v1569 = vrot.slane %v1563, 4
        %v1570 = vrot.slane %v1564, 4
        %v1571 = vsel %vm1472, %v1569, %v1570
        %v1572 = vrot.slane %v1565, 4
        %v1573 = vsel %vm1472, %v1570, %v1572
        %1574 = vrot.lane.b32.xlu0 %v1571, 126
        %v1575 = vpop.permute.xlu0 %1574
        %1576 = vrot.lane.b32.xlu0 %v1573, 126
        %v1577 = vpop.permute.xlu0 %1576
        %v1580 = vadd.f32 %v1560, %v1575
        %v1581 = vadd.f32 %v1561, %v1577
        %s1582 = sld [smem:[#allocation6 + $0x1f]]
        %s1583 = sld [smem:[#allocation6 + $0x50]]
        %v1584 = vstv %s1582
        %v1585 = vmul.f32 %v398, %v1584
        %v1586 = vmul.f32 %v394, %v1584
        %v1587 = vmul.f32 %v399, %v1584
        %v1591 = vrot.slane %v1585, 4
        %v1592 = vrot.slane %v1586, 4
        %v1593 = vsel %vm1472, %v1591, %v1592
        %v1594 = vrot.slane %v1587, 4
        %v1595 = vsel %vm1472, %v1592, %v1594
        %1596 = vrot.lane.b32.xlu0 %v1593, 125
        %v1597 = vpop.permute.xlu0 %1596
        %1598 = vrot.lane.b32.xlu0 %v1595, 125
        %v1599 = vpop.permute.xlu0 %1598
        %v1602 = vadd.f32 %v1580, %v1597
        %v1603 = vadd.f32 %v1581, %v1599
        %v1604 = vstv %s1583
        %v1605 = vmul.f32 %v420, %v1604
        %v1606 = vmul.f32 %v416, %v1604
        %v1607 = vmul.f32 %v421, %v1604
        %v1611 = vrot.slane %v1605, 4
        %v1612 = vrot.slane %v1606, 4
        %v1613 = vsel %vm1472, %v1611, %v1612
        %v1614 = vrot.slane %v1607, 4
        %v1615 = vsel %vm1472, %v1612, %v1614
        %1616 = vrot.lane.b32.xlu0 %v1613, 125
        %v1617 = vpop.permute.xlu0 %1616
        %1618 = vrot.lane.b32.xlu0 %v1615, 125
        %v1619 = vpop.permute.xlu0 %1618
        %v1622 = vadd.f32 %v1602, %v1617
        %v1623 = vadd.f32 %v1603, %v1619
        %s1624 = sld [smem:[#allocation6 + $0x20]]
        %s1625 = sld [smem:[#allocation6 + $0x51]]
        %v1626 = vstv %s1624
        %v1627 = vmul.f32 %v398, %v1626
        %v1628 = vmul.f32 %v394, %v1626
        %v1629 = vmul.f32 %v399, %v1626
        %v1633 = vrot.slane %v1627, 4
        %v1634 = vrot.slane %v1628, 4
        %v1635 = vsel %vm1472, %v1633, %v1634
        %v1636 = vrot.slane %v1629, 4
        %v1637 = vsel %vm1472, %v1634, %v1636
        %1638 = vrot.lane.b32.xlu0 %v1635, 124
        %v1639 = vpop.permute.xlu0 %1638
        %1640 = vrot.lane.b32.xlu0 %v1637, 124
        %v1641 = vpop.permute.xlu0 %1640
        %v1644 = vadd.f32 %v1622, %v1639
        %v1645 = vadd.f32 %v1623, %v1641
        %v1646 = vstv %s1625
        %v1647 = vmul.f32 %v420, %v1646
        %v1648 = vmul.f32 %v416, %v1646
        %v1649 = vmul.f32 %v421, %v1646
        %v1653 = vrot.slane %v1647, 4
        %v1654 = vrot.slane %v1648, 4
        %v1655 = vsel %vm1472, %v1653, %v1654
        %v1656 = vrot.slane %v1649, 4
        %v1657 = vsel %vm1472, %v1654, %v1656
        %1658 = vrot.lane.b32.xlu0 %v1655, 124
        %v1659 = vpop.permute.xlu0 %1658
        %1660 = vrot.lane.b32.xlu0 %v1657, 124
        %v1661 = vpop.permute.xlu0 %1660
        %v1664 = vadd.f32 %v1644, %v1659
        %v1665 = vadd.f32 %v1645, %v1661
        %s1666 = sld [smem:[#allocation6 + $0x21]]
        %s1667 = sld [smem:[#allocation6 + $0x52]]
        %v1668 = vstv %s1666
        %v1669 = vmul.f32 %v398, %v1668
        %v1670 = vmul.f32 %v394, %v1668
        %v1671 = vmul.f32 %v399, %v1668
        %v1675 = vrot.slane %v1669, 4
        %v1676 = vrot.slane %v1670, 4
        %v1677 = vsel %vm1472, %v1675, %v1676
        %v1678 = vrot.slane %v1671, 4
        %v1679 = vsel %vm1472, %v1676, %v1678
        %1680 = vrot.lane.b32.xlu0 %v1677, 123
        %v1681 = vpop.permute.xlu0 %1680
        %1682 = vrot.lane.b32.xlu0 %v1679, 123
        %v1683 = vpop.permute.xlu0 %1682
        %v1686 = vadd.f32 %v1664, %v1681
        %v1687 = vadd.f32 %v1665, %v1683
        %v1688 = vstv %s1667
        %v1689 = vmul.f32 %v420, %v1688
        %v1690 = vmul.f32 %v416, %v1688
        %v1691 = vmul.f32 %v421, %v1688
        %v1695 = vrot.slane %v1689, 4
        %v1696 = vrot.slane %v1690, 4
        %v1697 = vsel %vm1472, %v1695, %v1696
        %v1698 = vrot.slane %v1691, 4
        %v1699 = vsel %vm1472, %v1696, %v1698
        %1700 = vrot.lane.b32.xlu0 %v1697, 123
        %v1701 = vpop.permute.xlu0 %1700
        %1702 = vrot.lane.b32.xlu0 %v1699, 123
        %v1703 = vpop.permute.xlu0 %1702
        %v1706 = vadd.f32 %v1686, %v1701
        %v1707 = vadd.f32 %v1687, %v1703
        %s1708 = sld [smem:[#allocation6 + $0x22]]
        %s1709 = sld [smem:[#allocation6 + $0x53]]
        %v1710 = vstv %s1708
        %v1711 = vmul.f32 %v398, %v1710
        %v1712 = vmul.f32 %v394, %v1710
        %v1713 = vmul.f32 %v399, %v1710
        %v1717 = vrot.slane %v1711, 4
        %v1718 = vrot.slane %v1712, 4
        %v1719 = vsel %vm1472, %v1717, %v1718
        %v1720 = vrot.slane %v1713, 4
        %v1721 = vsel %vm1472, %v1718, %v1720
        %1722 = vrot.lane.b32.xlu0 %v1719, 122
        %v1723 = vpop.permute.xlu0 %1722
        %1724 = vrot.lane.b32.xlu0 %v1721, 122
        %v1725 = vpop.permute.xlu0 %1724
        %v1728 = vadd.f32 %v1706, %v1723
        %v1729 = vadd.f32 %v1707, %v1725
        %v1730 = vstv %s1709
        %v1731 = vmul.f32 %v420, %v1730
        %v1732 = vmul.f32 %v416, %v1730
        %v1733 = vmul.f32 %v421, %v1730
        %v1737 = vrot.slane %v1731, 4
        %v1738 = vrot.slane %v1732, 4
        %v1739 = vsel %vm1472, %v1737, %v1738
        %v1740 = vrot.slane %v1733, 4
        %v1741 = vsel %vm1472, %v1738, %v1740
        %1742 = vrot.lane.b32.xlu0 %v1739, 122
        %v1743 = vpop.permute.xlu0 %1742
        %1744 = vrot.lane.b32.xlu0 %v1741, 122
        %v1745 = vpop.permute.xlu0 %1744
        %v1748 = vadd.f32 %v1728, %v1743
        %v1749 = vadd.f32 %v1729, %v1745
        %s1750 = sld [smem:[#allocation6 + $0x23]]
        %s1751 = sld [smem:[#allocation6 + $0x54]]
        %v1752 = vstv %s1750
        %v1753 = vmul.f32 %v398, %v1752
        %v1754 = vmul.f32 %v394, %v1752
        %v1755 = vmul.f32 %v399, %v1752
        %v1759 = vrot.slane %v1753, 5
        %v1760 = vrot.slane %v1754, 5
        %v1761 = vsel %vm391, %v1759, %v1760
        %v1762 = vrot.slane %v1755, 5
        %v1763 = vsel %vm391, %v1760, %v1762
        %v1766 = vadd.f32 %v1748, %v1761
        %v1767 = vadd.f32 %v1749, %v1763
        %v1768 = vstv %s1751
        %v1769 = vmul.f32 %v420, %v1768
        %v1770 = vmul.f32 %v416, %v1768
        %v1771 = vmul.f32 %v421, %v1768
        %v1775 = vrot.slane %v1769, 5
        %v1776 = vrot.slane %v1770, 5
        %v1777 = vsel %vm391, %v1775, %v1776
        %v1778 = vrot.slane %v1771, 5
        %v1779 = vsel %vm391, %v1776, %v1778
        %v1782 = vadd.f32 %v1766, %v1777
        %v1783 = vadd.f32 %v1767, %v1779
        %s1784 = sld [smem:[#allocation6 + $0x24]]
        %s1785 = sld [smem:[#allocation6 + $0x55]]
        %v1786 = vstv %s1784
        %v1787 = vmul.f32 %v398, %v1786
        %v1788 = vmul.f32 %v394, %v1786
        %v1789 = vmul.f32 %v399, %v1786
        %v1793 = vrot.slane %v1787, 5
        %v1794 = vrot.slane %v1788, 5
        %v1795 = vsel %vm391, %v1793, %v1794
        %v1796 = vrot.slane %v1789, 5
        %v1797 = vsel %vm391, %v1794, %v1796
        %1798 = vrot.lane.b32.xlu0 %v1795, 127
        %v1799 = vpop.permute.xlu0 %1798
        %1800 = vrot.lane.b32.xlu0 %v1797, 127
        %v1801 = vpop.permute.xlu0 %1800
        %v1804 = vadd.f32 %v1782, %v1799
        %v1805 = vadd.f32 %v1783, %v1801
        %v1806 = vstv %s1785
        %v1807 = vmul.f32 %v420, %v1806
        %v1808 = vmul.f32 %v416, %v1806
        %v1809 = vmul.f32 %v421, %v1806
        %v1813 = vrot.slane %v1807, 5
        %v1814 = vrot.slane %v1808, 5
        %v1815 = vsel %vm391, %v1813, %v1814
        %v1816 = vrot.slane %v1809, 5
        %v1817 = vsel %vm391, %v1814, %v1816
        %1818 = vrot.lane.b32.xlu0 %v1815, 127
        %v1819 = vpop.permute.xlu0 %1818
        %1820 = vrot.lane.b32.xlu0 %v1817, 127
        %v1821 = vpop.permute.xlu0 %1820
        %v1824 = vadd.f32 %v1804, %v1819
        %v1825 = vadd.f32 %v1805, %v1821
        %s1826 = sld [smem:[#allocation6 + $0x25]]
        %s1827 = sld [smem:[#allocation6 + $0x56]]
        %v1828 = vstv %s1826
        %v1829 = vmul.f32 %v398, %v1828
        %v1830 = vmul.f32 %v394, %v1828
        %v1831 = vmul.f32 %v399, %v1828
        %v1835 = vrot.slane %v1829, 5
        %v1836 = vrot.slane %v1830, 5
        %v1837 = vsel %vm391, %v1835, %v1836
        %v1838 = vrot.slane %v1831, 5
        %v1839 = vsel %vm391, %v1836, %v1838
        %1840 = vrot.lane.b32.xlu0 %v1837, 126
        %v1841 = vpop.permute.xlu0 %1840
        %1842 = vrot.lane.b32.xlu0 %v1839, 126
        %v1843 = vpop.permute.xlu0 %1842
        %v1846 = vadd.f32 %v1824, %v1841
        %v1847 = vadd.f32 %v1825, %v1843
        %v1848 = vstv %s1827
        %v1849 = vmul.f32 %v420, %v1848
        %v1850 = vmul.f32 %v416, %v1848
        %v1851 = vmul.f32 %v421, %v1848
        %v1855 = vrot.slane %v1849, 5
        %v1856 = vrot.slane %v1850, 5
        %v1857 = vsel %vm391, %v1855, %v1856
        %v1858 = vrot.slane %v1851, 5
        %v1859 = vsel %vm391, %v1856, %v1858
        %1860 = vrot.lane.b32.xlu0 %v1857, 126
        %v1861 = vpop.permute.xlu0 %1860
        %1862 = vrot.lane.b32.xlu0 %v1859, 126
        %v1863 = vpop.permute.xlu0 %1862
        %v1866 = vadd.f32 %v1846, %v1861
        %v1867 = vadd.f32 %v1847, %v1863
        %s1868 = sld [smem:[#allocation6 + $0x26]]
        %s1869 = sld [smem:[#allocation6 + $0x57]]
        %v1870 = vstv %s1868
        %v1871 = vmul.f32 %v398, %v1870
        %v1872 = vmul.f32 %v394, %v1870
        %v1873 = vmul.f32 %v399, %v1870
        %v1877 = vrot.slane %v1871, 5
        %v1878 = vrot.slane %v1872, 5
        %v1879 = vsel %vm391, %v1877, %v1878
        %v1880 = vrot.slane %v1873, 5
        %v1881 = vsel %vm391, %v1878, %v1880
        %1882 = vrot.lane.b32.xlu0 %v1879, 125
        %v1883 = vpop.permute.xlu0 %1882
        %1884 = vrot.lane.b32.xlu0 %v1881, 125
        %v1885 = vpop.permute.xlu0 %1884
        %v1888 = vadd.f32 %v1866, %v1883
        %v1889 = vadd.f32 %v1867, %v1885
        %v1890 = vstv %s1869
        %v1891 = vmul.f32 %v420, %v1890
        %v1892 = vmul.f32 %v416, %v1890
        %v1893 = vmul.f32 %v421, %v1890
        %v1897 = vrot.slane %v1891, 5
        %v1898 = vrot.slane %v1892, 5
        %v1899 = vsel %vm391, %v1897, %v1898
        %v1900 = vrot.slane %v1893, 5
        %v1901 = vsel %vm391, %v1898, %v1900
        %1902 = vrot.lane.b32.xlu0 %v1899, 125
        %v1903 = vpop.permute.xlu0 %1902
        %1904 = vrot.lane.b32.xlu0 %v1901, 125
        %v1905 = vpop.permute.xlu0 %1904
        %v1908 = vadd.f32 %v1888, %v1903
        %v1909 = vadd.f32 %v1889, %v1905
        %s1910 = sld [smem:[#allocation6 + $0x27]]
        %s1911 = sld [smem:[#allocation6 + $0x58]]
        %v1912 = vstv %s1910
        %v1913 = vmul.f32 %v398, %v1912
        %v1914 = vmul.f32 %v394, %v1912
        %v1915 = vmul.f32 %v399, %v1912
        %v1919 = vrot.slane %v1913, 5
        %v1920 = vrot.slane %v1914, 5
        %v1921 = vsel %vm391, %v1919, %v1920
        %v1922 = vrot.slane %v1915, 5
        %v1923 = vsel %vm391, %v1920, %v1922
        %1924 = vrot.lane.b32.xlu0 %v1921, 124
        %v1925 = vpop.permute.xlu0 %1924
        %1926 = vrot.lane.b32.xlu0 %v1923, 124
        %v1927 = vpop.permute.xlu0 %1926
        %v1930 = vadd.f32 %v1908, %v1925
        %v1931 = vadd.f32 %v1909, %v1927
        %v1932 = vstv %s1911
        %v1933 = vmul.f32 %v420, %v1932
        %v1934 = vmul.f32 %v416, %v1932
        %v1935 = vmul.f32 %v421, %v1932
        %v1939 = vrot.slane %v1933, 5
        %v1940 = vrot.slane %v1934, 5
        %v1941 = vsel %vm391, %v1939, %v1940
        %v1942 = vrot.slane %v1935, 5
        %v1943 = vsel %vm391, %v1940, %v1942
        %1944 = vrot.lane.b32.xlu0 %v1941, 124
        %v1945 = vpop.permute.xlu0 %1944
        %1946 = vrot.lane.b32.xlu0 %v1943, 124
        %v1947 = vpop.permute.xlu0 %1946
        %v1950 = vadd.f32 %v1930, %v1945
        %v1951 = vadd.f32 %v1931, %v1947
        %s1952 = sld [smem:[#allocation6 + $0x28]]
        %s1953 = sld [smem:[#allocation6 + $0x59]]
        %v1954 = vstv %s1952
        %v1955 = vmul.f32 %v398, %v1954
        %v1956 = vmul.f32 %v394, %v1954
        %v1957 = vmul.f32 %v399, %v1954
        %v1961 = vrot.slane %v1955, 5
        %v1962 = vrot.slane %v1956, 5
        %v1963 = vsel %vm391, %v1961, %v1962
        %v1964 = vrot.slane %v1957, 5
        %v1965 = vsel %vm391, %v1962, %v1964
        %1966 = vrot.lane.b32.xlu0 %v1963, 123
        %v1967 = vpop.permute.xlu0 %1966
        %1968 = vrot.lane.b32.xlu0 %v1965, 123
        %v1969 = vpop.permute.xlu0 %1968
        %v1972 = vadd.f32 %v1950, %v1967
        %v1973 = vadd.f32 %v1951, %v1969
        %v1974 = vstv %s1953
        %v1975 = vmul.f32 %v420, %v1974
        %v1976 = vmul.f32 %v416, %v1974
        %v1977 = vmul.f32 %v421, %v1974
        %v1981 = vrot.slane %v1975, 5
        %v1982 = vrot.slane %v1976, 5
        %v1983 = vsel %vm391, %v1981, %v1982
        %v1984 = vrot.slane %v1977, 5
        %v1985 = vsel %vm391, %v1982, %v1984
        %1986 = vrot.lane.b32.xlu0 %v1983, 123
        %v1987 = vpop.permute.xlu0 %1986
        %1988 = vrot.lane.b32.xlu0 %v1985, 123
        %v1989 = vpop.permute.xlu0 %1988
        %v1992 = vadd.f32 %v1972, %v1987
        %v1993 = vadd.f32 %v1973, %v1989
        %s1994 = sld [smem:[#allocation6 + $0x29]]
        %s1995 = sld [smem:[#allocation6 + $0x5a]]
        %v1996 = vstv %s1994
        %v1997 = vmul.f32 %v398, %v1996
        %v1998 = vmul.f32 %v394, %v1996
        %v1999 = vmul.f32 %v399, %v1996
        %v2003 = vrot.slane %v1997, 5
        %v2004 = vrot.slane %v1998, 5
        %v2005 = vsel %vm391, %v2003, %v2004
        %v2006 = vrot.slane %v1999, 5
        %v2007 = vsel %vm391, %v2004, %v2006
        %2008 = vrot.lane.b32.xlu0 %v2005, 122
        %v2009 = vpop.permute.xlu0 %2008
        %2010 = vrot.lane.b32.xlu0 %v2007, 122
        %v2011 = vpop.permute.xlu0 %2010
        %v2014 = vadd.f32 %v1992, %v2009
        %v2015 = vadd.f32 %v1993, %v2011
        %v2016 = vstv %s1995
        %v2017 = vmul.f32 %v420, %v2016
        %v2018 = vmul.f32 %v416, %v2016
        %v2019 = vmul.f32 %v421, %v2016
        %v2023 = vrot.slane %v2017, 5
        %v2024 = vrot.slane %v2018, 5
        %v2025 = vsel %vm391, %v2023, %v2024
        %v2026 = vrot.slane %v2019, 5
        %v2027 = vsel %vm391, %v2024, %v2026
        %2028 = vrot.lane.b32.xlu0 %v2025, 122
        %v2029 = vpop.permute.xlu0 %2028
        %2030 = vrot.lane.b32.xlu0 %v2027, 122
        %v2031 = vpop.permute.xlu0 %2030
        %v2034 = vadd.f32 %v2014, %v2029
        %v2035 = vadd.f32 %v2015, %v2031
        %s2036 = sld [smem:[#allocation6 + $0x2a]]
        %s2037 = sld [smem:[#allocation6 + $0x5b]]
        %v2038 = vstv %s2036
        %v2039 = vmul.f32 %v398, %v2038
        %v2040 = vmul.f32 %v394, %v2038
        %v2041 = vmul.f32 %v399, %v2038
        %vm2045 = vcmask 1041408
        %v2046 = vrot.slane %v2039, 6
        %v2047 = vrot.slane %v2040, 6
        %v2048 = vsel %vm2045, %v2046, %v2047
        %v2049 = vrot.slane %v2041, 6
        %v2050 = vsel %vm2045, %v2047, %v2049
        %v2053 = vadd.f32 %v2034, %v2048
        %v2054 = vadd.f32 %v2035, %v2050
        %v2055 = vstv %s2037
        %v2056 = vmul.f32 %v420, %v2055
        %v2057 = vmul.f32 %v416, %v2055
        %v2058 = vmul.f32 %v421, %v2055
        %v2062 = vrot.slane %v2056, 6
        %v2063 = vrot.slane %v2057, 6
        %v2064 = vsel %vm2045, %v2062, %v2063
        %v2065 = vrot.slane %v2058, 6
        %v2066 = vsel %vm2045, %v2063, %v2065
        %v2069 = vadd.f32 %v2053, %v2064
        %v2070 = vadd.f32 %v2054, %v2066
        %s2071 = sld [smem:[#allocation6 + $0x2b]]
        %s2072 = sld [smem:[#allocation6 + $0x5c]]
        %v2073 = vstv %s2071
        %v2074 = vmul.f32 %v398, %v2073
        %v2075 = vmul.f32 %v394, %v2073
        %v2076 = vmul.f32 %v399, %v2073
        %v2080 = vrot.slane %v2074, 6
        %v2081 = vrot.slane %v2075, 6
        %v2082 = vsel %vm2045, %v2080, %v2081
        %v2083 = vrot.slane %v2076, 6
        %v2084 = vsel %vm2045, %v2081, %v2083
        %2085 = vrot.lane.b32.xlu0 %v2082, 127
        %v2086 = vpop.permute.xlu0 %2085
        %2087 = vrot.lane.b32.xlu0 %v2084, 127
        %v2088 = vpop.permute.xlu0 %2087
        %v2091 = vadd.f32 %v2069, %v2086
        %v2092 = vadd.f32 %v2070, %v2088
        %v2093 = vstv %s2072
        %v2094 = vmul.f32 %v420, %v2093
        %v2095 = vmul.f32 %v416, %v2093
        %v2096 = vmul.f32 %v421, %v2093
        %v2100 = vrot.slane %v2094, 6
        %v2101 = vrot.slane %v2095, 6
        %v2102 = vsel %vm2045, %v2100, %v2101
        %v2103 = vrot.slane %v2096, 6
        %v2104 = vsel %vm2045, %v2101, %v2103
        %2105 = vrot.lane.b32.xlu0 %v2102, 127
        %v2106 = vpop.permute.xlu0 %2105
        %2107 = vrot.lane.b32.xlu0 %v2104, 127
        %v2108 = vpop.permute.xlu0 %2107
        %v2111 = vadd.f32 %v2091, %v2106
        %v2112 = vadd.f32 %v2092, %v2108
        %s2113 = sld [smem:[#allocation6 + $0x2c]]
        %s2114 = sld [smem:[#allocation6 + $0x5d]]
        %v2115 = vstv %s2113
        %v2116 = vmul.f32 %v398, %v2115
        %v2117 = vmul.f32 %v394, %v2115
        %v2118 = vmul.f32 %v399, %v2115
        %v2122 = vrot.slane %v2116, 6
        %v2123 = vrot.slane %v2117, 6
        %v2124 = vsel %vm2045, %v2122, %v2123
        %v2125 = vrot.slane %v2118, 6
        %v2126 = vsel %vm2045, %v2123, %v2125
        %2127 = vrot.lane.b32.xlu0 %v2124, 126
        %v2128 = vpop.permute.xlu0 %2127
        %2129 = vrot.lane.b32.xlu0 %v2126, 126
        %v2130 = vpop.permute.xlu0 %2129
        %v2133 = vadd.f32 %v2111, %v2128
        %v2134 = vadd.f32 %v2112, %v2130
        %v2135 = vstv %s2114
        %v2136 = vmul.f32 %v420, %v2135
        %v2137 = vmul.f32 %v416, %v2135
        %v2138 = vmul.f32 %v421, %v2135
        %v2142 = vrot.slane %v2136, 6
        %v2143 = vrot.slane %v2137, 6
        %v2144 = vsel %vm2045, %v2142, %v2143
        %v2145 = vrot.slane %v2138, 6
        %v2146 = vsel %vm2045, %v2143, %v2145
        %2147 = vrot.lane.b32.xlu0 %v2144, 126
        %v2148 = vpop.permute.xlu0 %2147
        %2149 = vrot.lane.b32.xlu0 %v2146, 126
        %v2150 = vpop.permute.xlu0 %2149
        %v2153 = vadd.f32 %v2133, %v2148
        %v2154 = vadd.f32 %v2134, %v2150
        %s2155 = sld [smem:[#allocation6 + $0x2d]]
        %s2156 = sld [smem:[#allocation6 + $0x5e]]
        %v2157 = vstv %s2155
        %v2158 = vmul.f32 %v398, %v2157
        %v2159 = vmul.f32 %v394, %v2157
        %v2160 = vmul.f32 %v399, %v2157
        %v2164 = vrot.slane %v2158, 6
        %v2165 = vrot.slane %v2159, 6
        %v2166 = vsel %vm2045, %v2164, %v2165
        %v2167 = vrot.slane %v2160, 6
        %v2168 = vsel %vm2045, %v2165, %v2167
        %2169 = vrot.lane.b32.xlu0 %v2166, 125
        %v2170 = vpop.permute.xlu0 %2169
        %2171 = vrot.lane.b32.xlu0 %v2168, 125
        %v2172 = vpop.permute.xlu0 %2171
        %v2175 = vadd.f32 %v2153, %v2170
        %v2176 = vadd.f32 %v2154, %v2172
        %v2177 = vstv %s2156
        %v2178 = vmul.f32 %v420, %v2177
        %v2179 = vmul.f32 %v416, %v2177
        %v2180 = vmul.f32 %v421, %v2177
        %v2184 = vrot.slane %v2178, 6
        %v2185 = vrot.slane %v2179, 6
        %v2186 = vsel %vm2045, %v2184, %v2185
        %v2187 = vrot.slane %v2180, 6
        %v2188 = vsel %vm2045, %v2185, %v2187
        %2189 = vrot.lane.b32.xlu0 %v2186, 125
        %v2190 = vpop.permute.xlu0 %2189
        %2191 = vrot.lane.b32.xlu0 %v2188, 125
        %v2192 = vpop.permute.xlu0 %2191
        %v2195 = vadd.f32 %v2175, %v2190
        %v2196 = vadd.f32 %v2176, %v2192
        %s2197 = sld [smem:[#allocation6 + $0x2e]]
        %s2198 = sld [smem:[#allocation6 + $0x5f]]
        %v2199 = vstv %s2197
        %v2200 = vmul.f32 %v398, %v2199
        %v2201 = vmul.f32 %v394, %v2199
        %v2202 = vmul.f32 %v399, %v2199
        %v2206 = vrot.slane %v2200, 6
        %v2207 = vrot.slane %v2201, 6
        %v2208 = vsel %vm2045, %v2206, %v2207
        %v2209 = vrot.slane %v2202, 6
        %v2210 = vsel %vm2045, %v2207, %v2209
        %2211 = vrot.lane.b32.xlu0 %v2208, 124
        %v2212 = vpop.permute.xlu0 %2211
        %2213 = vrot.lane.b32.xlu0 %v2210, 124
        %v2214 = vpop.permute.xlu0 %2213
        %v2217 = vadd.f32 %v2195, %v2212
        %v2218 = vadd.f32 %v2196, %v2214
        %v2219 = vstv %s2198
        %v2220 = vmul.f32 %v420, %v2219
        %v2221 = vmul.f32 %v416, %v2219
        %v2222 = vmul.f32 %v421, %v2219
        %v2226 = vrot.slane %v2220, 6
        %v2227 = vrot.slane %v2221, 6
        %v2228 = vsel %vm2045, %v2226, %v2227
        %v2229 = vrot.slane %v2222, 6
        %v2230 = vsel %vm2045, %v2227, %v2229
        %2231 = vrot.lane.b32.xlu0 %v2228, 124
        %v2232 = vpop.permute.xlu0 %2231
        %2233 = vrot.lane.b32.xlu0 %v2230, 124
        %v2234 = vpop.permute.xlu0 %2233
        %v2237 = vadd.f32 %v2217, %v2232
        %v2238 = vadd.f32 %v2218, %v2234
        %s2239 = sld [smem:[#allocation6 + $0x2f]]
        %s2240 = sld [smem:[#allocation6 + $0x60]]
        %v2241 = vstv %s2239
        %v2242 = vmul.f32 %v398, %v2241
        %v2243 = vmul.f32 %v394, %v2241
        %v2244 = vmul.f32 %v399, %v2241
        %v2248 = vrot.slane %v2242, 6
        %v2249 = vrot.slane %v2243, 6
        %v2250 = vsel %vm2045, %v2248, %v2249
        %v2251 = vrot.slane %v2244, 6
        %v2252 = vsel %vm2045, %v2249, %v2251
        %2253 = vrot.lane.b32.xlu0 %v2250, 123
        %v2254 = vpop.permute.xlu0 %2253
        %2255 = vrot.lane.b32.xlu0 %v2252, 123
        %v2256 = vpop.permute.xlu0 %2255
        %v2259 = vadd.f32 %v2237, %v2254
        %v2260 = vadd.f32 %v2238, %v2256
        %v2261 = vstv %s2240
        %v2262 = vmul.f32 %v420, %v2261
        %v2263 = vmul.f32 %v416, %v2261
        %v2264 = vmul.f32 %v421, %v2261
        %v2268 = vrot.slane %v2262, 6
        %v2269 = vrot.slane %v2263, 6
        %v2270 = vsel %vm2045, %v2268, %v2269
        %v2271 = vrot.slane %v2264, 6
        %v2272 = vsel %vm2045, %v2269, %v2271
        %2273 = vrot.lane.b32.xlu0 %v2270, 123
        %v2274 = vpop.permute.xlu0 %2273
        %2275 = vrot.lane.b32.xlu0 %v2272, 123
        %v2276 = vpop.permute.xlu0 %2275
        %v2279 = vadd.f32 %v2259, %v2274
        %v2280 = vadd.f32 %v2260, %v2276
        %s2281 = sld [smem:[#allocation6 + $0x30]]
        %s2282 = sld [smem:[#allocation6 + $0x61]]
        %v2283 = vstv %s2281
        %v2284 = vmul.f32 %v398, %v2283
        %v2285 = vmul.f32 %v394, %v2283
        %v2286 = vmul.f32 %v399, %v2283
        %v2290 = vrot.slane %v2284, 6
        %v2291 = vrot.slane %v2285, 6
        %v2292 = vsel %vm2045, %v2290, %v2291
        %v2293 = vrot.slane %v2286, 6
        %v2294 = vsel %vm2045, %v2291, %v2293
        %2295 = vrot.lane.b32.xlu0 %v2292, 122
        %v2296 = vpop.permute.xlu0 %2295
        %2297 = vrot.lane.b32.xlu0 %v2294, 122
        %v2298 = vpop.permute.xlu0 %2297
        %v2301 = vadd.f32 %v2279, %v2296
        %v2302 = vadd.f32 %v2280, %v2298
        %v2303 = vstv %s2282
        %v2304 = vmul.f32 %v420, %v2303
        %v2305 = vmul.f32 %v416, %v2303
        %v2306 = vmul.f32 %v421, %v2303
        %v2310 = vrot.slane %v2304, 6
        %v2311 = vrot.slane %v2305, 6
        %v2312 = vsel %vm2045, %v2310, %v2311
        %v2313 = vrot.slane %v2306, 6
        %v2314 = vsel %vm2045, %v2311, %v2313
        %2315 = vrot.lane.b32.xlu0 %v2312, 122
        %v2316 = vpop.permute.xlu0 %2315
        %2317 = vrot.lane.b32.xlu0 %v2314, 122
        %v2318 = vpop.permute.xlu0 %2317
        %v2321 = vadd.f32 %v2301, %v2316
        %v2322 = vadd.f32 %v2302, %v2318
        %2325 = vrot.lane.b32.xlu0 %v2321, 2
        %v2326 = vpop.permute.xlu0 %2325
        %2327 = vrot.lane.b32.xlu0 %v2322, 2
        %v2328 = vpop.permute.xlu0 %2327
        %vm2331 = vcmask 15360
        %v2332 = vsel %vm2331, 0.0, %v2326
        %v2333 = vsel %vm2331, 0.0, %v2328
        %vm2334 = vcmask 146432
        %v2335 = vsel %vm2334, %v2332, 0.0
        %v2336 = vsel %vm2334, %v2333, 0.0
        %v2339 = vrot.slane %v2335, 6
        %v2340 = vrot.slane %v2336, 6
        %v2341 = vsel %vm2045, %v2339, %v2340
        %v2345 = vsel %vm2045, 0.0, %v2339
        %v2346 = vsel %vm2045, %v2340, 0.0
        %s2347 = sld [smem:[#allocation7]]
        %v2348 = vstv %s2347
        %v2349 = vmul.f32 %v2345, %v2348
        %v2350 = vmul.f32 %v2341, %v2348
        %v2351 = vadd.f32 %v2349, 0.0
        %v2352 = vadd.f32 %v2350, 0.0
        %s2353 = sld [smem:[#allocation7 + $0x1]]
        %v2354 = vstv %s2353
        %v2355 = vmul.f32 %v2345, %v2354
        %v2356 = vmul.f32 %v2341, %v2354
        %2359 = vrot.lane.b32.xlu0 %v2355, 127
        %v2360 = vpop.permute.xlu0 %2359
        %2361 = vrot.lane.b32.xlu0 %v2356, 127
        %v2362 = vpop.permute.xlu0 %2361
        %v2365 = vadd.f32 %v2351, %v2360
        %v2366 = vadd.f32 %v2352, %v2362
        %s2367 = sld [smem:[#allocation7 + $0x2]]
        %v2368 = vstv %s2367
        %v2369 = vmul.f32 %v2345, %v2368
        %v2370 = vmul.f32 %v2341, %v2368
        %2373 = vrot.lane.b32.xlu0 %v2369, 126
        %v2374 = vpop.permute.xlu0 %2373
        %2375 = vrot.lane.b32.xlu0 %v2370, 126
        %v2376 = vpop.permute.xlu0 %2375
        %v2379 = vadd.f32 %v2365, %v2374
        %v2380 = vadd.f32 %v2366, %v2376
        %s2381 = sld [smem:[#allocation7 + $0x3]]
        %v2382 = vstv %s2381
        %v2383 = vmul.f32 %v2345, %v2382
        %v2384 = vmul.f32 %v2341, %v2382
        %2387 = vrot.lane.b32.xlu0 %v2383, 125
        %v2388 = vpop.permute.xlu0 %2387
        %2389 = vrot.lane.b32.xlu0 %v2384, 125
        %v2390 = vpop.permute.xlu0 %2389
        %v2393 = vadd.f32 %v2379, %v2388
        %v2394 = vadd.f32 %v2380, %v2390
        %s2395 = sld [smem:[#allocation7 + $0x4]]
        %v2396 = vstv %s2395
        %v2397 = vmul.f32 %v2345, %v2396
        %v2398 = vmul.f32 %v2341, %v2396
        %2401 = vrot.lane.b32.xlu0 %v2397, 124
        %v2402 = vpop.permute.xlu0 %2401
        %2403 = vrot.lane.b32.xlu0 %v2398, 124
        %v2404 = vpop.permute.xlu0 %2403
        %v2407 = vadd.f32 %v2393, %v2402
        %v2408 = vadd.f32 %v2394, %v2404
        %s2409 = sld [smem:[#allocation7 + $0x5]]
        %v2410 = vstv %s2409
        %v2411 = vmul.f32 %v2345, %v2410
        %v2412 = vmul.f32 %v2341, %v2410
        %v2413 = vmul.f32 %v2346, %v2410
        %v2417 = vrot.slane %v2411, 1
        %v2418 = vrot.slane %v2412, 1
        %v2419 = vsel %vm611, %v2417, %v2418
        %v2420 = vrot.slane %v2413, 1
        %v2421 = vsel %vm611, %v2418, %v2420
        %v2424 = vadd.f32 %v2407, %v2419
        %v2425 = vadd.f32 %v2408, %v2421
        %s2426 = sld [smem:[#allocation7 + $0x6]]
        %v2427 = vstv %s2426
        %v2428 = vmul.f32 %v2345, %v2427
        %v2429 = vmul.f32 %v2341, %v2427
        %v2430 = vmul.f32 %v2346, %v2427
        %v2434 = vrot.slane %v2428, 1
        %v2435 = vrot.slane %v2429, 1
        %v2436 = vsel %vm611, %v2434, %v2435
        %v2437 = vrot.slane %v2430, 1
        %v2438 = vsel %vm611, %v2435, %v2437
        %2439 = vrot.lane.b32.xlu0 %v2436, 127
        %v2440 = vpop.permute.xlu0 %2439
        %2441 = vrot.lane.b32.xlu0 %v2438, 127
        %v2442 = vpop.permute.xlu0 %2441
        %v2445 = vadd.f32 %v2424, %v2440
        %v2446 = vadd.f32 %v2425, %v2442
        %s2447 = sld [smem:[#allocation7 + $0x7]]
        %v2448 = vstv %s2447
        %v2449 = vmul.f32 %v2345, %v2448
        %v2450 = vmul.f32 %v2341, %v2448
        %v2451 = vmul.f32 %v2346, %v2448
        %v2455 = vrot.slane %v2449, 1
        %v2456 = vrot.slane %v2450, 1
        %v2457 = vsel %vm611, %v2455, %v2456
        %v2458 = vrot.slane %v2451, 1
        %v2459 = vsel %vm611, %v2456, %v2458
        %2460 = vrot.lane.b32.xlu0 %v2457, 126
        %v2461 = vpop.permute.xlu0 %2460
        %2462 = vrot.lane.b32.xlu0 %v2459, 126
        %v2463 = vpop.permute.xlu0 %2462
        %v2466 = vadd.f32 %v2445, %v2461
        %v2467 = vadd.f32 %v2446, %v2463
        %s2468 = sld [smem:[#allocation7 + $0x8]]
        %v2469 = vstv %s2468
        %v2470 = vmul.f32 %v2345, %v2469
        %v2471 = vmul.f32 %v2341, %v2469
        %v2472 = vmul.f32 %v2346, %v2469
        %v2476 = vrot.slane %v2470, 1
        %v2477 = vrot.slane %v2471, 1
        %v2478 = vsel %vm611, %v2476, %v2477
        %v2479 = vrot.slane %v2472, 1
        %v2480 = vsel %vm611, %v2477, %v2479
        %2481 = vrot.lane.b32.xlu0 %v2478, 125
        %v2482 = vpop.permute.xlu0 %2481
        %2483 = vrot.lane.b32.xlu0 %v2480, 125
        %v2484 = vpop.permute.xlu0 %2483
        %v2487 = vadd.f32 %v2466, %v2482
        %v2488 = vadd.f32 %v2467, %v2484
        %s2489 = sld [smem:[#allocation7 + $0x9]]
        %v2490 = vstv %s2489
        %v2491 = vmul.f32 %v2345, %v2490
        %v2492 = vmul.f32 %v2341, %v2490
        %v2493 = vmul.f32 %v2346, %v2490
        %v2497 = vrot.slane %v2491, 1
        %v2498 = vrot.slane %v2492, 1
        %v2499 = vsel %vm611, %v2497, %v2498
        %v2500 = vrot.slane %v2493, 1
        %v2501 = vsel %vm611, %v2498, %v2500
        %2502 = vrot.lane.b32.xlu0 %v2499, 124
        %v2503 = vpop.permute.xlu0 %2502
        %2504 = vrot.lane.b32.xlu0 %v2501, 124
        %v2505 = vpop.permute.xlu0 %2504
        %v2508 = vadd.f32 %v2487, %v2503
        %v2509 = vadd.f32 %v2488, %v2505
        %s2510 = sld [smem:[#allocation7 + $0xa]]
        %v2511 = vstv %s2510
        %v2512 = vmul.f32 %v2345, %v2511
        %v2513 = vmul.f32 %v2341, %v2511
        %v2514 = vmul.f32 %v2346, %v2511
        %v2518 = vrot.slane %v2512, 2
        %v2519 = vrot.slane %v2513, 2
        %v2520 = vsel %vm898, %v2518, %v2519
        %v2521 = vrot.slane %v2514, 2
        %v2522 = vsel %vm898, %v2519, %v2521
        %v2525 = vadd.f32 %v2508, %v2520
        %v2526 = vadd.f32 %v2509, %v2522
        %s2527 = sld [smem:[#allocation7 + $0xb]]
        %v2528 = vstv %s2527
        %v2529 = vmul.f32 %v2345, %v2528
        %v2530 = vmul.f32 %v2341, %v2528
        %v2531 = vmul.f32 %v2346, %v2528
        %v2535 = vrot.slane %v2529, 2
        %v2536 = vrot.slane %v2530, 2
        %v2537 = vsel %vm898, %v2535, %v2536
        %v2538 = vrot.slane %v2531, 2
        %v2539 = vsel %vm898, %v2536, %v2538
        %2540 = vrot.lane.b32.xlu0 %v2537, 127
        %v2541 = vpop.permute.xlu0 %2540
        %2542 = vrot.lane.b32.xlu0 %v2539, 127
        %v2543 = vpop.permute.xlu0 %2542
        %v2546 = vadd.f32 %v2525, %v2541
        %v2547 = vadd.f32 %v2526, %v2543
        %s2548 = sld [smem:[#allocation7 + $0xc]]
        %v2549 = vstv %s2548
        %v2550 = vmul.f32 %v2345, %v2549
        %v2551 = vmul.f32 %v2341, %v2549
        %v2552 = vmul.f32 %v2346, %v2549
        %v2556 = vrot.slane %v2550, 2
        %v2557 = vrot.slane %v2551, 2
        %v2558 = vsel %vm898, %v2556, %v2557
        %v2559 = vrot.slane %v2552, 2
        %v2560 = vsel %vm898, %v2557, %v2559
        %2561 = vrot.lane.b32.xlu0 %v2558, 126
        %v2562 = vpop.permute.xlu0 %2561
        %2563 = vrot.lane.b32.xlu0 %v2560, 126
        %v2564 = vpop.permute.xlu0 %2563
        %v2567 = vadd.f32 %v2546, %v2562
        %v2568 = vadd.f32 %v2547, %v2564
        %s2569 = sld [smem:[#allocation7 + $0xd]]
        %v2570 = vstv %s2569
        %v2571 = vmul.f32 %v2345, %v2570
        %v2572 = vmul.f32 %v2341, %v2570
        %v2573 = vmul.f32 %v2346, %v2570
        %v2577 = vrot.slane %v2571, 2
        %v2578 = vrot.slane %v2572, 2
        %v2579 = vsel %vm898, %v2577, %v2578
        %v2580 = vrot.slane %v2573, 2
        %v2581 = vsel %vm898, %v2578, %v2580
        %2582 = vrot.lane.b32.xlu0 %v2579, 125
        %v2583 = vpop.permute.xlu0 %2582
        %2584 = vrot.lane.b32.xlu0 %v2581, 125
        %v2585 = vpop.permute.xlu0 %2584
        %v2588 = vadd.f32 %v2567, %v2583
        %v2589 = vadd.f32 %v2568, %v2585
        %s2590 = sld [smem:[#allocation7 + $0xe]]
        %v2591 = vstv %s2590
        %v2592 = vmul.f32 %v2345, %v2591
        %v2593 = vmul.f32 %v2341, %v2591
        %v2594 = vmul.f32 %v2346, %v2591
        %v2598 = vrot.slane %v2592, 2
        %v2599 = vrot.slane %v2593, 2
        %v2600 = vsel %vm898, %v2598, %v2599
        %v2601 = vrot.slane %v2594, 2
        %v2602 = vsel %vm898, %v2599, %v2601
        %2603 = vrot.lane.b32.xlu0 %v2600, 124
        %v2604 = vpop.permute.xlu0 %2603
        %2605 = vrot.lane.b32.xlu0 %v2602, 124
        %v2606 = vpop.permute.xlu0 %2605
        %v2609 = vadd.f32 %v2588, %v2604
        %v2610 = vadd.f32 %v2589, %v2606
        %s2611 = sld [smem:[#allocation7 + $0xf]]
        %v2612 = vstv %s2611
        %v2613 = vmul.f32 %v2345, %v2612
        %v2614 = vmul.f32 %v2341, %v2612
        %v2615 = vmul.f32 %v2346, %v2612
        %v2619 = vrot.slane %v2613, 3
        %v2620 = vrot.slane %v2614, 3
        %v2621 = vsel %vm1185, %v2619, %v2620
        %v2622 = vrot.slane %v2615, 3
        %v2623 = vsel %vm1185, %v2620, %v2622
        %v2626 = vadd.f32 %v2609, %v2621
        %v2627 = vadd.f32 %v2610, %v2623
        %s2628 = sld [smem:[#allocation7 + $0x10]]
        %v2629 = vstv %s2628
        %v2630 = vmul.f32 %v2345, %v2629
        %v2631 = vmul.f32 %v2341, %v2629
        %v2632 = vmul.f32 %v2346, %v2629
        %v2636 = vrot.slane %v2630, 3
        %v2637 = vrot.slane %v2631, 3
        %v2638 = vsel %vm1185, %v2636, %v2637
        %v2639 = vrot.slane %v2632, 3
        %v2640 = vsel %vm1185, %v2637, %v2639
        %2641 = vrot.lane.b32.xlu0 %v2638, 127
        %v2642 = vpop.permute.xlu0 %2641
        %2643 = vrot.lane.b32.xlu0 %v2640, 127
        %v2644 = vpop.permute.xlu0 %2643
        %v2647 = vadd.f32 %v2626, %v2642
        %v2648 = vadd.f32 %v2627, %v2644
        %s2649 = sld [smem:[#allocation7 + $0x11]]
        %v2650 = vstv %s2649
        %v2651 = vmul.f32 %v2345, %v2650
        %v2652 = vmul.f32 %v2341, %v2650
        %v2653 = vmul.f32 %v2346, %v2650
        %v2657 = vrot.slane %v2651, 3
        %v2658 = vrot.slane %v2652, 3
        %v2659 = vsel %vm1185, %v2657, %v2658
        %v2660 = vrot.slane %v2653, 3
        %v2661 = vsel %vm1185, %v2658, %v2660
        %2662 = vrot.lane.b32.xlu0 %v2659, 126
        %v2663 = vpop.permute.xlu0 %2662
        %2664 = vrot.lane.b32.xlu0 %v2661, 126
        %v2665 = vpop.permute.xlu0 %2664
        %v2668 = vadd.f32 %v2647, %v2663
        %v2669 = vadd.f32 %v2648, %v2665
        %s2670 = sld [smem:[#allocation7 + $0x12]]
        %v2671 = vstv %s2670
        %v2672 = vmul.f32 %v2345, %v2671
        %v2673 = vmul.f32 %v2341, %v2671
        %v2674 = vmul.f32 %v2346, %v2671
        %v2678 = vrot.slane %v2672, 3
        %v2679 = vrot.slane %v2673, 3
        %v2680 = vsel %vm1185, %v2678, %v2679
        %v2681 = vrot.slane %v2674, 3
        %v2682 = vsel %vm1185, %v2679, %v2681
        %2683 = vrot.lane.b32.xlu0 %v2680, 125
        %v2684 = vpop.permute.xlu0 %2683
        %2685 = vrot.lane.b32.xlu0 %v2682, 125
        %v2686 = vpop.permute.xlu0 %2685
        %v2689 = vadd.f32 %v2668, %v2684
        %v2690 = vadd.f32 %v2669, %v2686
        %s2691 = sld [smem:[#allocation7 + $0x13]]
        %v2692 = vstv %s2691
        %v2693 = vmul.f32 %v2345, %v2692
        %v2694 = vmul.f32 %v2341, %v2692
        %v2695 = vmul.f32 %v2346, %v2692
        %v2699 = vrot.slane %v2693, 3
        %v2700 = vrot.slane %v2694, 3
        %v2701 = vsel %vm1185, %v2699, %v2700
        %v2702 = vrot.slane %v2695, 3
        %v2703 = vsel %vm1185, %v2700, %v2702
        %2704 = vrot.lane.b32.xlu0 %v2701, 124
        %v2705 = vpop.permute.xlu0 %2704
        %2706 = vrot.lane.b32.xlu0 %v2703, 124
        %v2707 = vpop.permute.xlu0 %2706
        %v2710 = vadd.f32 %v2689, %v2705
        %v2711 = vadd.f32 %v2690, %v2707
        %s2712 = sld [smem:[#allocation7 + $0x14]]
        %v2713 = vstv %s2712
        %v2714 = vmul.f32 %v2345, %v2713
        %v2715 = vmul.f32 %v2341, %v2713
        %v2716 = vmul.f32 %v2346, %v2713
        %v2720 = vrot.slane %v2714, 4
        %v2721 = vrot.slane %v2715, 4
        %v2722 = vsel %vm1472, %v2720, %v2721
        %v2723 = vrot.slane %v2716, 4
        %v2724 = vsel %vm1472, %v2721, %v2723
        %v2727 = vadd.f32 %v2710, %v2722
        %v2728 = vadd.f32 %v2711, %v2724
        %s2729 = sld [smem:[#allocation7 + $0x15]]
        %v2730 = vstv %s2729
        %v2731 = vmul.f32 %v2345, %v2730
        %v2732 = vmul.f32 %v2341, %v2730
        %v2733 = vmul.f32 %v2346, %v2730
        %v2737 = vrot.slane %v2731, 4
        %v2738 = vrot.slane %v2732, 4
        %v2739 = vsel %vm1472, %v2737, %v2738
        %v2740 = vrot.slane %v2733, 4
        %v2741 = vsel %vm1472, %v2738, %v2740
        %2742 = vrot.lane.b32.xlu0 %v2739, 127
        %v2743 = vpop.permute.xlu0 %2742
        %2744 = vrot.lane.b32.xlu0 %v2741, 127
        %v2745 = vpop.permute.xlu0 %2744
        %v2748 = vadd.f32 %v2727, %v2743
        %v2749 = vadd.f32 %v2728, %v2745
        %s2750 = sld [smem:[#allocation7 + $0x16]]
        %v2751 = vstv %s2750
        %v2752 = vmul.f32 %v2345, %v2751
        %v2753 = vmul.f32 %v2341, %v2751
        %v2754 = vmul.f32 %v2346, %v2751
        %v2758 = vrot.slane %v2752, 4
        %v2759 = vrot.slane %v2753, 4
        %v2760 = vsel %vm1472, %v2758, %v2759
        %v2761 = vrot.slane %v2754, 4
        %v2762 = vsel %vm1472, %v2759, %v2761
        %2763 = vrot.lane.b32.xlu0 %v2760, 126
        %v2764 = vpop.permute.xlu0 %2763
        %2765 = vrot.lane.b32.xlu0 %v2762, 126
        %v2766 = vpop.permute.xlu0 %2765
        %v2769 = vadd.f32 %v2748, %v2764
        %v2770 = vadd.f32 %v2749, %v2766
        %s2771 = sld [smem:[#allocation7 + $0x17]]
        %v2772 = vstv %s2771
        %v2773 = vmul.f32 %v2345, %v2772
        %v2774 = vmul.f32 %v2341, %v2772
        %v2775 = vmul.f32 %v2346, %v2772
        %v2779 = vrot.slane %v2773, 4
        %v2780 = vrot.slane %v2774, 4
        %v2781 = vsel %vm1472, %v2779, %v2780
        %v2782 = vrot.slane %v2775, 4
        %v2783 = vsel %vm1472, %v2780, %v2782
        %2784 = vrot.lane.b32.xlu0 %v2781, 125
        %v2785 = vpop.permute.xlu0 %2784
        %2786 = vrot.lane.b32.xlu0 %v2783, 125
        %v2787 = vpop.permute.xlu0 %2786
        %v2790 = vadd.f32 %v2769, %v2785
        %v2791 = vadd.f32 %v2770, %v2787
        %s2792 = sld [smem:[#allocation7 + $0x18]]
        %v2793 = vstv %s2792
        %v2794 = vmul.f32 %v2345, %v2793
        %v2795 = vmul.f32 %v2341, %v2793
        %v2796 = vmul.f32 %v2346, %v2793
        %v2800 = vrot.slane %v2794, 4
        %v2801 = vrot.slane %v2795, 4
        %v2802 = vsel %vm1472, %v2800, %v2801
        %v2803 = vrot.slane %v2796, 4
        %v2804 = vsel %vm1472, %v2801, %v2803
        %2805 = vrot.lane.b32.xlu0 %v2802, 124
        %v2806 = vpop.permute.xlu0 %2805
        %2807 = vrot.lane.b32.xlu0 %v2804, 124
        %v2808 = vpop.permute.xlu0 %2807
        %v2811 = vadd.f32 %v2790, %v2806
        %v2812 = vadd.f32 %v2791, %v2808
        %v2813 = vxor.u32 %v2811, 2147483648
        %v2814 = vxor.u32 %v2812, 2147483648
        %v2815 = vmul.f32 %v2813, 1.442695
        %v2816 = vpow.pop %v2815
        %v2817 = vmul.f32 %v2814, 1.442695
        %v2818 = vpow.pop %v2817
        %v2819 = vadd.f32 %v2816, 1.0
        %v2820 = vadd.f32 %v2818, 1.0
        %v2821 = vrcp.pop %v2819
        %v2822 = vmul.f32 1.0, %v2821
        %v2823 = vrcp.pop %v2820
        %v2824 = vmul.f32 1.0, %v2823
        %v2825 = vmul.f32 %v216, %v2822
        %v2826 = vmul.f32 %v217, %v2824
        %v2827 = vmul.f32 %v218, %v2822
        %v2828 = vmul.f32 %v219, %v2824
        %v2829 = vmul.f32 %v220, %v2822
        %v2830 = vmul.f32 %v221, %v2824
        %v2831 = vmul.f32 %v222, %v2822
        %v2832 = vmul.f32 %v223, %v2824
        %v2833 = vmul.f32 %v224, %v2822
        %v2834 = vmul.f32 %v225, %v2824
        %v2835 = vmul.f32 %v226, %v2822
        %v2836 = vmul.f32 %v227, %v2824
        %v2837 = vmul.f32 %v228, %v2822
        %v2838 = vmul.f32 %v229, %v2824
        %v2839 = vmul.f32 %v230, %v2822
        %v2840 = vmul.f32 %v231, %v2824
        %v2841 = vmul.f32 %v232, %v2822
        %v2842 = vmul.f32 %v233, %v2824
        %v2843 = vmul.f32 %v234, %v2822
        %v2844 = vmul.f32 %v235, %v2824
        %v2845 = vmul.f32 %v236, %v2822
        %v2846 = vmul.f32 %v237, %v2824
        %v2847 = vmul.f32 %v238, %v2822
        %v2848 = vmul.f32 %v239, %v2824
        %v2849 = vmul.f32 %v240, %v2822
        %v2850 = vmul.f32 %v241, %v2824
        %v2851 = vmul.f32 %v242, %v2822
        %v2852 = vmul.f32 %v243, %v2824
        %v2853 = vmul.f32 %v244, %v2822
        %v2854 = vmul.f32 %v245, %v2824
        %v2855 = vmul.f32 %v246, %v2822
        %v2856 = vmul.f32 %v247, %v2824
        %2857 = vst.msk [vmem:[%s215] sm:$0xff] %vm248, %v2825
        %2858 = vst.msk [vmem:[%s215 + $0x8] sm:$0xff] %vm248, %v2826
        %2859 = vst.msk [vmem:[%s215 + $0x10] sm:$0xff] %vm248, %v2827
        %2860 = vst.msk [vmem:[%s215 + $0x18] sm:$0xff] %vm248, %v2828
        %2861 = vst.msk [vmem:[%s215 + $0x20] sm:$0xff] %vm248, %v2829
        %2862 = vst.msk [vmem:[%s215 + $0x28] sm:$0xff] %vm248, %v2830
        %2863 = vst.msk [vmem:[%s215 + $0x30] sm:$0xff] %vm248, %v2831
        %2864 = vst.msk [vmem:[%s215 + $0x38] sm:$0xff] %vm248, %v2832
        %2865 = vst.msk [vmem:[%s215 + $0x40] sm:$0xff] %vm248, %v2833
        %2866 = vst.msk [vmem:[%s215 + $0x48] sm:$0xff] %vm248, %v2834
        %2867 = vst.msk [vmem:[%s215 + $0x50] sm:$0xff] %vm248, %v2835
        %2868 = vst.msk [vmem:[%s215 + $0x58] sm:$0xff] %vm248, %v2836
        %2869 = vst.msk [vmem:[%s215 + $0x60] sm:$0xff] %vm248, %v2837
        %2870 = vst.msk [vmem:[%s215 + $0x68] sm:$0xff] %vm248, %v2838
        %2871 = vst.msk [vmem:[%s215 + $0x70] sm:$0xff] %vm248, %v2839
        %2872 = vst.msk [vmem:[%s215 + $0x78] sm:$0xff] %vm248, %v2840
        %2873 = vst.msk [vmem:[%s215 + $0x80] sm:$0xff] %vm248, %v2841
        %2874 = vst.msk [vmem:[%s215 + $0x88] sm:$0xff] %vm248, %v2842
        %2875 = vst.msk [vmem:[%s215 + $0x90] sm:$0xff] %vm248, %v2843
        %2876 = vst.msk [vmem:[%s215 + $0x98] sm:$0xff] %vm248, %v2844
        %2877 = vst.msk [vmem:[%s215 + $0xa0] sm:$0xff] %vm248, %v2845
        %2878 = vst.msk [vmem:[%s215 + $0xa8] sm:$0xff] %vm248, %v2846
        %2879 = vst.msk [vmem:[%s215 + $0xb0] sm:$0xff] %vm248, %v2847
        %2880 = vst.msk [vmem:[%s215 + $0xb8] sm:$0xff] %vm248, %v2848
        %2881 = vst.msk [vmem:[%s215 + $0xc0] sm:$0xff] %vm248, %v2849
        %2882 = vst.msk [vmem:[%s215 + $0xc8] sm:$0xff] %vm248, %v2850
        %2883 = vst.msk [vmem:[%s215 + $0xd0] sm:$0xff] %vm248, %v2851
        %2884 = vst.msk [vmem:[%s215 + $0xd8] sm:$0xff] %vm248, %v2852
        %2885 = vst.msk [vmem:[%s215 + $0xe0] sm:$0xff] %vm248, %v2853
        %2886 = vst.msk [vmem:[%s215 + $0xe8] sm:$0xff] %vm248, %v2854
        %2887 = vst.msk [vmem:[%s215 + $0xf0] sm:$0xff] %vm248, %v2855
        %2888 = vst.msk [vmem:[%s215 + $0xf8] sm:$0xff] %vm248, %v2856
        %s2889 = sand.u32 %s98, 1
        %s2890 = scalar_lea.sflag [#allocation4], %s2889
        %s2891 = sand.u32 %s98, 1
        %s2892 = smul.addr %s2891, 256
        %s2893 = scalar_lea.vmem [#allocation9], %s2892
        // Predicated region
        $region45: #{tpu_custom_call.1} parent=31 // pred_check
          %p2894 = pneg %p108
        $region46: #{tpu_custom_call.1} parent=31 // pred_check_branch
          %2896 = sbr.rel (%p2894) target = $region48
        $region47: #{tpu_custom_call.1} parent=31 // pred_region
          %s2898 = ssub.s32 4096, 4096
          %2899 = vsyncadd %s2890, %s2898
          %s2900 = smul.addr %s22, 32
          %s2901 = smul.addr %s2900, 128
          %s2902 = scalar_lea.hbm %s3, %s2901
          %s2903 = sshll.u32 %s2893, 4
          %s2904 = int_to_ptr.vmem [resolvable:$true] %s2903
          %2909 = dma.vmem_to_hbm [thread:$0]  %s2904, 4096, %s2902, %s2890, 128, 128, 8
        $region48: #{tpu_custom_call.1} parent=31 // pred_fallthru
          _
      $region32: #{tpu_custom_call.1} parent=5 // pred_fallthru
        _
      %p2910 = scmp.le.s32.totalorder 2, %s17
      // Predicated region
      $region49: #{tpu_custom_call.1} parent=5 // pred_check
        %p2911 = pneg %p2910
      $region50: #{tpu_custom_call.1} parent=5 // pred_check_branch
        %2913 = sbr.rel (%p2911) target = $region52
      $region51: #{tpu_custom_call.1} parent=5 // pred_region
        %s2914 = ssub.s32 %s17, 2
        // Predicated region
        $region53: #{tpu_custom_call.1} parent=51 // pred_check
          %p2915 = pneg %p114
        $region54: #{tpu_custom_call.1} parent=51 // pred_check_branch
          %2917 = sbr.rel (%p2915) target = $region56
        $region55: #{tpu_custom_call.1} parent=51 // pred_region
          %s2918 = sand.u32 %s99, 1
          %s2919 = scalar_lea.sflag [#allocation4], %s2918
          %s2920 = sand.u32 %s99, 1
          %s2921 = smul.addr %s2920, 256
          %s2922 = scalar_lea.vmem [#allocation9], %s2921
          %2923 = dma.done %s2919, 4096
        $region56: #{tpu_custom_call.1} parent=51 // pred_fallthru
          _
      $region52: #{tpu_custom_call.1} parent=5 // pred_fallthru
        _
    $region6: #{tpu_custom_call.1} parent=1 // loop_footer
      %s21 = sadd.s32 1, %s17
    $region7: #{tpu_custom_call.1} parent=1 // loop_footer_branch
      %16 = sbr.rel target = $region3
    $region8: #{tpu_custom_call.1} parent=1 // loop_exit
      _
    %2924 = vsyncpa [#allocation3], 1
    %s2925 = scalar_lea.sflag [#allocation3], 1
    %2926 = vsyncpa %s2925, 1
    %2927 = vsyncpa [#allocation4], 1
    %s2928 = scalar_lea.sflag [#allocation4], 1
    %2929 = vsyncpa %s2928, 1
    %2930 = vsyncpa [#allocation5], 1
    %s2931 = scalar_lea.sflag [#allocation5], 1
    %2932 = vsyncpa %s2931, 1
    %2933 = vsyncpa [#allocation8], 1

</llo_original>
